<compile_context>
chip_gen: v7x
topology: tpu7x:2x2x1
jax: 0.10.0
libtpu: 0.0.40
codegen_flags: <defaults>
</compile_context>

<pallas_src>
import jax
import jax.numpy as jnp
from jax import lax
from jax.experimental import pallas as pl
from jax.experimental.pallas import tpu as pltpu

_LANES = 128          # vreg lane width
_CHUNK_ROWS = 8       # 8 sublanes x 128 lanes = 1024 px = one f32 vreg / channel


def _round_up(x, m):
    return ((x + m - 1) // m) * m


def _cdiv(a, b):
    return (a + b - 1) // b


def _choose_tiling(hw, tile_px):
    """Pick (hw_pad, total_rows, tile_rows, chunk_rows) for the pixel axis.

    Pixels are viewed as (rows, 128). `tile_rows` is the per-grid-step tile
    (multiple of chunk_rows, divides total_rows exactly -> no partial blocks);
    `chunk_rows` is the in-kernel sub-chunk processed entirely in vregs.
    Padding is tight (at most ~one chunk quantum per tile of waste).
    """
    if hw <= _CHUNK_ROWS * _LANES:
        rows = _cdiv(hw, _LANES)
        return rows * _LANES, rows, rows, rows                 # single tile/chunk
    rows = _round_up(hw, _CHUNK_ROWS * _LANES) // _LANES       # multiple of 8
    tile_rows_target = max(_CHUNK_ROWS,
                           (tile_px // _LANES) // _CHUNK_ROWS * _CHUNK_ROWS)
    n_tiles = _cdiv(rows, tile_rows_target)
    tile_rows = _round_up(_cdiv(rows, n_tiles), _CHUNK_ROWS)
    total_rows = n_tiles * tile_rows
    return total_rows * _LANES, total_rows, tile_rows, _CHUNK_ROWS


# ----------------------------------------------------------------------------
# Fused kernel: per 1024-pixel chunk, relu(W1 x + b1) -> relu(W2 . + b2) ->
# relu(W3 . + b3) + g -> tanh, as unrolled VPU broadcast-MACs (weights in SMEM).
# Block layout: x (Cin, tile_rows, 128), g/out (3, tile_rows, 128).
# ----------------------------------------------------------------------------
def _make_fused_kernel(cin, nfeat, tile_rows, chunk_rows):
    n_chunks = tile_rows // chunk_rows
    # offsets into the packed [w1, b1, w2, b2, w3, b3] SMEM vector
    o_w1 = 0
    o_b1 = o_w1 + nfeat * cin
    o_w2 = o_b1 + nfeat
    o_b2 = o_w2 + nfeat * nfeat
    o_w3 = o_b2 + nfeat
    o_b3 = o_w3 + 3 * nfeat

    def kernel(p_ref, x_ref, g_ref, o_ref):
        # Loop-invariant scalar weights: cheap SMEM reads, once per grid step.
        w1 = [[p_ref[o_w1 + o * cin + c] for c in range(cin)] for o in range(nfeat)]
        b1 = [p_ref[o_b1 + o] for o in range(nfeat)]
        w2 = [[p_ref[o_w2 + o * nfeat + c] for c in range(nfeat)] for o in range(nfeat)]
        b2 = [p_ref[o_b2 + o] for o in range(nfeat)]
        w3 = [[p_ref[o_w3 + o * nfeat + c] for c in range(nfeat)] for o in range(3)]
        b3 = [p_ref[o_b3 + o] for o in range(3)]

        def do_chunk(r0):
            # One (chunk_rows, 128) slab per channel — everything stays in vregs.
            xs = [x_ref[c, pl.ds(r0, chunk_rows), :] for c in range(cin)]
            # pointwise1 + ReLU
            h1 = []
            for o in range(nfeat):
                acc = xs[0] * w1[o][0]
                for c in range(1, cin):
                    acc = acc + xs[c] * w1[o][c]
                h1.append(jnp.maximum(acc + b1[o], 0.0))
            # pointwise2 + ReLU
            h2 = []
            for o in range(nfeat):
                acc = h1[0] * w2[o][0]
                for c in range(1, nfeat):
                    acc = acc + h1[c] * w2[o][c]
                h2.append(jnp.maximum(acc + b2[o], 0.0))
            # pointwise3 + ReLU, residual add, tanh, lane-dense store
            for o in range(3):
                acc = h2[0] * w3[o][0]
                for c in range(1, nfeat):
                    acc = acc + h2[c] * w3[o][c]
                d = jnp.maximum(acc + b3[o], 0.0)
                o_ref[o, pl.ds(r0, chunk_rows), :] = jnp.tanh(
                    d + g_ref[o, pl.ds(r0, chunk_rows), :])

        if n_chunks == 1:
            do_chunk(0)
        else:
            def body(k, carry):
                do_chunk(pl.multiple_of(k * chunk_rows, chunk_rows))
                return carry
            lax.fori_loop(0, n_chunks, body, None, unroll=True)

    return kernel


def fused_dnet_add_tanh(x_flat, g_flat, w1, b1, w2, b2, w3, b3, *, tile_px=16384):
    """x_flat: (N, Cin, P), g_flat: (N, 3, P) with P = H*W.  Returns (N, 3, P).

    tile_px: pixels per grid step (multiple of 1024).  Default 16K keeps
    double-buffered I/O ~1.5 MiB (fits every generation's scoped VMEM); on v7x
    it can be raised to 32K-64K, on v5e consider pl.Buffered(3) on x/g if xprof
    shows exposed DMA.
    """
    n, cin, hw = x_flat.shape
    nfeat = w1.shape[0]
    hw_pad, total_rows, tile_rows, chunk_rows = _choose_tiling(hw, tile_px)

    if hw_pad != hw:
        pad = hw_pad - hw
        x_flat = jnp.pad(x_flat, ((0, 0), (0, 0), (0, pad)))
        g_flat = jnp.pad(g_flat, ((0, 0), (0, 0), (0, pad)))
    x4 = x_flat.reshape(n, cin, total_rows, _LANES)
    g4 = g_flat.reshape(n, 3, total_rows, _LANES)

    params = jnp.concatenate([
        w1.reshape(-1), b1.reshape(-1),
        w2.reshape(-1), b2.reshape(-1),
        w3.reshape(-1), b3.reshape(-1)]).astype(jnp.float32)

    kernel = _make_fused_kernel(cin, nfeat, tile_rows, chunk_rows)
    grid = (n, total_rows // tile_rows)

    out = pl.pallas_call(
        kernel,
        out_shape=jax.ShapeDtypeStruct((n, 3, total_rows, _LANES), jnp.float32),
        grid_spec=pltpu.PrefetchScalarGridSpec(
            num_scalar_prefetch=0,
            grid=grid,
            in_specs=[
                pl.BlockSpec(memory_space=pltpu.MemorySpace.SMEM),       # packed W/b
                pl.BlockSpec((None, cin, tile_rows, _LANES),
                             lambda ni, pi: (ni, 0, pi, 0)),             # x
                pl.BlockSpec((None, 3, tile_rows, _LANES),
                             lambda ni, pi: (ni, 0, pi, 0)),             # g residual
            ],
            out_specs=pl.BlockSpec((None, 3, tile_rows, _LANES),
                                   lambda ni, pi: (ni, 0, pi, 0)),
        ),
        compiler_params=pltpu.CompilerParams(
            dimension_semantics=("parallel", "parallel")),
    )(params, x4, g4)

    out = out.reshape(n, 3, hw_pad)
    if hw_pad != hw:
        out = out[:, :, :hw]
    return out


# ----------------------------------------------------------------------------
# Plain-JAX glue for the small, heavily-downsampled gnet branch
# ----------------------------------------------------------------------------
def depthwise_conv_s2(x, w, b):
    """3x3 depthwise conv, stride 2, padding 1.  x: (N,C,H,W), w: (C,1,3,3)."""
    c = x.shape[1]
    y = lax.conv_general_dilated(
        x, w, window_strides=(2, 2), padding=((1, 1), (1, 1)),
        feature_group_count=c,
        dimension_numbers=("NCHW", "OIHW", "NCHW"))
    return y + b[None, :, None, None]


def pointwise_conv_nchw(x, w, b):
    """1x1 conv on a tiny tensor.  x: (N,Cin,H,W), w: (Cout,Cin)."""
    y = jnp.einsum("nchw,oc->nohw", x, w)
    return y + b[None, :, None, None]


def bilinear_up2(x):
    """Matches nn.Upsample(scale_factor=2, mode='bilinear', align_corners=False)."""
    n, c, h, w = x.shape
    return jax.image.resize(x, (n, c, 2 * h, 2 * w), method="bilinear")


# ----------------------------------------------------------------------------
# Full LIGHTFUSE forward (x2 is unused, matching the PyTorch reference)
# ----------------------------------------------------------------------------
def lightfuse_forward(params, x1, x2, x3):
    x = jnp.concatenate([x1, x3], axis=1)                       # (N, nChannel, H, W)
    n, c, h, w = x.shape

    # ---- gnet: depthwise downsampling path + bilinear upsampling (plain JAX) ----
    g = depthwise_conv_s2(x, params["dw1_w"], params["dw1_b"])          # H/2
    g = depthwise_conv_s2(g, params["dw2_w"], params["dw2_b"])          # H/4
    g = depthwise_conv_s2(g, params["sep_dw_w"], params["sep_dw_b"])    # H/8
    g = pointwise_conv_nchw(g, params["sep_pw_w"], params["sep_pw_b"])  # (N,3,H/8,W/8)
    g = bilinear_up2(bilinear_up2(bilinear_up2(g)))                     # (N,3,H,W)

    # ---- dnet (1x1 conv chain) + relu + add + tanh : fused Pallas kernel ----
    x_flat = x.reshape(n, c, h * w)
    g_flat = g.reshape(n, 3, h * w)
    out_flat = fused_dnet_add_tanh(
        x_flat, g_flat,
        params["pw1_w"], params["pw1_b"],
        params["pw2_w"], params["pw2_b"],
        params["pw3_w"], params["pw3_b"])
    return out_flat.reshape(n, 3, h, w)                                 # NCHW


# ----------------------------------------------------------------------------
# Pure-JAX reference of the fused stage (numerical sanity check)
# ----------------------------------------------------------------------------
def _dnet_reference(x_flat, g_flat, w1, b1, w2, b2, w3, b3):
    h1 = jnp.maximum(jnp.einsum("oc,ncp->nop", w1, x_flat) + b1[None], 0.0)
    h2 = jnp.maximum(jnp.einsum("oc,ncp->nop", w2, h1) + b2[None], 0.0)
    d = jnp.maximum(jnp.einsum("oc,ncp->nop", w3, h2) + b3[None], 0.0)
    return jnp.tanh(d + g_flat)


# ----------------------------------------------------------------------------
# Deterministic parameter init (matching the nn.Module's layer shapes)
# ----------------------------------------------------------------------------
def init_params(key, n_channel=6, n_feat=16):
    ks = jax.random.split(key, 14)
    s = 0.1
    rnd = lambda k, shp: s * jax.random.normal(k, shp, jnp.float32)
    return {
        # pointwise1/2/3 stored as (Cout, Cin); biases (Cout, 1)
        "pw1_w": rnd(ks[0], (n_feat, n_channel)), "pw1_b": rnd(ks[1], (n_feat, 1)),
        "pw2_w": rnd(ks[2], (n_feat, n_feat)),    "pw2_b": rnd(ks[3], (n_feat, 1)),
        "pw3_w": rnd(ks[4], (3, n_feat)),         "pw3_b": rnd(ks[5], (3, 1)),
        # depthwise1/2 (OIHW with groups = nChannel -> (C,1,3,3)), bias=True default
        "dw1_w": rnd(ks[6], (n_channel, 1, 3, 3)), "dw1_b": rnd(ks[7], (n_channel,)),
        "dw2_w": rnd(ks[8], (n_channel, 1, 3, 3)), "dw2_b": rnd(ks[9], (n_channel,)),
        # separable_conv = depthwise (C,1,3,3) + pointwise (3, C)
        "sep_dw_w": rnd(ks[10], (n_channel, 1, 3, 3)), "sep_dw_b": rnd(ks[11], (n_channel,)),
        "sep_pw_w": rnd(ks[12], (3, n_channel)),       "sep_pw_b": rnd(ks[13], (3,)),
    }


if __name__ == "__main__":
    key = jax.random.PRNGKey(0)
    k1, k2, k3, kp = jax.random.split(key, 4)

    # Small example: N=2, each exposure is a 3-channel 16x16 image,
    # nChannel = 6 (cat of x1 and x3), nFeat = 16.
    N, H, W = 2, 16, 16
    x1 = jax.random.uniform(k1, (N, 3, H, W), jnp.float32)
    x2 = jax.random.uniform(k2, (N, 3, H, W), jnp.float32)   # unused by forward
    x3 = jax.random.uniform(k3, (N, 3, H, W), jnp.float32)

    params = init_params(kp, n_channel=6, n_feat=16)

    out = jax.block_until_ready(lightfuse_forward(params, x1, x2, x3))
    assert out.shape == (N, 3, H, W), out.shape

    # Numerical sanity check of the fused Pallas stage against pure JAX.
    x_cat = jnp.concatenate([x1, x3], axis=1)
    g = depthwise_conv_s2(x_cat, params["dw1_w"], params["dw1_b"])
    g = depthwise_conv_s2(g, params["dw2_w"], params["dw2_b"])
    g = depthwise_conv_s2(g, params["sep_dw_w"], params["sep_dw_b"])
    g = pointwise_conv_nchw(g, params["sep_pw_w"], params["sep_pw_b"])
    g = bilinear_up2(bilinear_up2(bilinear_up2(g)))
    ref = _dnet_reference(
        x_cat.reshape(N, 6, H * W), g.reshape(N, 3, H * W),
        params["pw1_w"], params["pw1_b"],
        params["pw2_w"], params["pw2_b"],
        params["pw3_w"], params["pw3_b"]).reshape(N, 3, H, W)
    max_err = float(jnp.max(jnp.abs(out - ref)))
    assert max_err < 1e-3, f"mismatch vs reference: {max_err}"

    print("KERNEL_OK")
</pallas_src>

<mosaic_0001>
module attributes {stable_mosaic.version = 11 : i64} {
  func.func @kernel(%arg0: i32, %arg1: i32, %arg2: memref<435xf32, #tpu.memory_space<smem>>, %arg3: memref<1x6x2x128xf32, #tpu.memory_space<vmem>>, %arg4: memref<1x3x2x128xf32, #tpu.memory_space<vmem>>, %arg5: memref<1x3x2x128xf32, #tpu.memory_space<vmem>>) attributes {dimension_semantics = [#tpu.dimension_semantics<parallel>, #tpu.dimension_semantics<parallel>], iteration_bounds = array<i64: 2, 1>, scalar_prefetch = 0 : i64, scratch_operands = 0 : i64, tpu.core_type = #tpu.core_type<tc>, window_params = [{transform_indices = @transform_0, window_bounds = array<i64: 435>}, {transform_indices = @transform_1, window_bounds = array<i64: 1, 6, 2, 128>}, {transform_indices = @transform_2, window_bounds = array<i64: 1, 3, 2, 128>}, {transform_indices = @transform_3, window_bounds = array<i64: 1, 3, 2, 128>}]} {
    %c0 = arith.constant 0 : index
    %0 = memref.load %arg2[%c0] : memref<435xf32, #tpu.memory_space<smem>>
    %c1 = arith.constant 1 : index
    %1 = memref.load %arg2[%c1] : memref<435xf32, #tpu.memory_space<smem>>
    %c2 = arith.constant 2 : index
    %2 = memref.load %arg2[%c2] : memref<435xf32, #tpu.memory_space<smem>>
    %c3 = arith.constant 3 : index
    %3 = memref.load %arg2[%c3] : memref<435xf32, #tpu.memory_space<smem>>
    %c4 = arith.constant 4 : index
    %4 = memref.load %arg2[%c4] : memref<435xf32, #tpu.memory_space<smem>>
    %c5 = arith.constant 5 : index
    %5 = memref.load %arg2[%c5] : memref<435xf32, #tpu.memory_space<smem>>
    %c6 = arith.constant 6 : index
    %6 = memref.load %arg2[%c6] : memref<435xf32, #tpu.memory_space<smem>>
    %c7 = arith.constant 7 : index
    %7 = memref.load %arg2[%c7] : memref<435xf32, #tpu.memory_space<smem>>
    %c8 = arith.constant 8 : index
    %8 = memref.load %arg2[%c8] : memref<435xf32, #tpu.memory_space<smem>>
    %c9 = arith.constant 9 : index
    %9 = memref.load %arg2[%c9] : memref<435xf32, #tpu.memory_space<smem>>
    %c10 = arith.constant 10 : index
    %10 = memref.load %arg2[%c10] : memref<435xf32, #tpu.memory_space<smem>>
    %c11 = arith.constant 11 : index
    %11 = memref.load %arg2[%c11] : memref<435xf32, #tpu.memory_space<smem>>
    %c12 = arith.constant 12 : index
    %12 = memref.load %arg2[%c12] : memref<435xf32, #tpu.memory_space<smem>>
    %c13 = arith.constant 13 : index
    %13 = memref.load %arg2[%c13] : memref<435xf32, #tpu.memory_space<smem>>
    %c14 = arith.constant 14 : index
    %14 = memref.load %arg2[%c14] : memref<435xf32, #tpu.memory_space<smem>>
    %c15 = arith.constant 15 : index
    %15 = memref.load %arg2[%c15] : memref<435xf32, #tpu.memory_space<smem>>
    %c16 = arith.constant 16 : index
    %16 = memref.load %arg2[%c16] : memref<435xf32, #tpu.memory_space<smem>>
    %c17 = arith.constant 17 : index
    %17 = memref.load %arg2[%c17] : memref<435xf32, #tpu.memory_space<smem>>
    %c18 = arith.constant 18 : index
    %18 = memref.load %arg2[%c18] : memref<435xf32, #tpu.memory_space<smem>>
    %c19 = arith.constant 19 : index
    %19 = memref.load %arg2[%c19] : memref<435xf32, #tpu.memory_space<smem>>
    %c20 = arith.constant 20 : index
    %20 = memref.load %arg2[%c20] : memref<435xf32, #tpu.memory_space<smem>>
    %c21 = arith.constant 21 : index
    %21 = memref.load %arg2[%c21] : memref<435xf32, #tpu.memory_space<smem>>
    %c22 = arith.constant 22 : index
    %22 = memref.load %arg2[%c22] : memref<435xf32, #tpu.memory_space<smem>>
    %c23 = arith.constant 23 : index
    %23 = memref.load %arg2[%c23] : memref<435xf32, #tpu.memory_space<smem>>
    %c24 = arith.constant 24 : index
    %24 = memref.load %arg2[%c24] : memref<435xf32, #tpu.memory_space<smem>>
    %c25 = arith.constant 25 : index
    %25 = memref.load %arg2[%c25] : memref<435xf32, #tpu.memory_space<smem>>
    %c26 = arith.constant 26 : index
    %26 = memref.load %arg2[%c26] : memref<435xf32, #tpu.memory_space<smem>>
    %c27 = arith.constant 27 : index
    %27 = memref.load %arg2[%c27] : memref<435xf32, #tpu.memory_space<smem>>
    %c28 = arith.constant 28 : index
    %28 = memref.load %arg2[%c28] : memref<435xf32, #tpu.memory_space<smem>>
    %c29 = arith.constant 29 : index
    %29 = memref.load %arg2[%c29] : memref<435xf32, #tpu.memory_space<smem>>
    %c30 = arith.constant 30 : index
    %30 = memref.load %arg2[%c30] : memref<435xf32, #tpu.memory_space<smem>>
    %c31 = arith.constant 31 : index
    %31 = memref.load %arg2[%c31] : memref<435xf32, #tpu.memory_space<smem>>
    %c32 = arith.constant 32 : index
    %32 = memref.load %arg2[%c32] : memref<435xf32, #tpu.memory_space<smem>>
    %c33 = arith.constant 33 : index
    %33 = memref.load %arg2[%c33] : memref<435xf32, #tpu.memory_space<smem>>
    %c34 = arith.constant 34 : index
    %34 = memref.load %arg2[%c34] : memref<435xf32, #tpu.memory_space<smem>>
    %c35 = arith.constant 35 : index
    %35 = memref.load %arg2[%c35] : memref<435xf32, #tpu.memory_space<smem>>
    %c36 = arith.constant 36 : index
    %36 = memref.load %arg2[%c36] : memref<435xf32, #tpu.memory_space<smem>>
    %c37 = arith.constant 37 : index
    %37 = memref.load %arg2[%c37] : memref<435xf32, #tpu.memory_space<smem>>
    %c38 = arith.constant 38 : index
    %38 = memref.load %arg2[%c38] : memref<435xf32, #tpu.memory_space<smem>>
    %c39 = arith.constant 39 : index
    %39 = memref.load %arg2[%c39] : memref<435xf32, #tpu.memory_space<smem>>
    %c40 = arith.constant 40 : index
    %40 = memref.load %arg2[%c40] : memref<435xf32, #tpu.memory_space<smem>>
    %c41 = arith.constant 41 : index
    %41 = memref.load %arg2[%c41] : memref<435xf32, #tpu.memory_space<smem>>
    %c42 = arith.constant 42 : index
    %42 = memref.load %arg2[%c42] : memref<435xf32, #tpu.memory_space<smem>>
    %c43 = arith.constant 43 : index
    %43 = memref.load %arg2[%c43] : memref<435xf32, #tpu.memory_space<smem>>
    %c44 = arith.constant 44 : index
    %44 = memref.load %arg2[%c44] : memref<435xf32, #tpu.memory_space<smem>>
    %c45 = arith.constant 45 : index
    %45 = memref.load %arg2[%c45] : memref<435xf32, #tpu.memory_space<smem>>
    %c46 = arith.constant 46 : index
    %46 = memref.load %arg2[%c46] : memref<435xf32, #tpu.memory_space<smem>>
    %c47 = arith.constant 47 : index
    %47 = memref.load %arg2[%c47] : memref<435xf32, #tpu.memory_space<smem>>
    %c48 = arith.constant 48 : index
    %48 = memref.load %arg2[%c48] : memref<435xf32, #tpu.memory_space<smem>>
    %c49 = arith.constant 49 : index
    %49 = memref.load %arg2[%c49] : memref<435xf32, #tpu.memory_space<smem>>
    %c50 = arith.constant 50 : index
    %50 = memref.load %arg2[%c50] : memref<435xf32, #tpu.memory_space<smem>>
    %c51 = arith.constant 51 : index
    %51 = memref.load %arg2[%c51] : memref<435xf32, #tpu.memory_space<smem>>
    %c52 = arith.constant 52 : index
    %52 = memref.load %arg2[%c52] : memref<435xf32, #tpu.memory_space<smem>>
    %c53 = arith.constant 53 : index
    %53 = memref.load %arg2[%c53] : memref<435xf32, #tpu.memory_space<smem>>
    %c54 = arith.constant 54 : index
    %54 = memref.load %arg2[%c54] : memref<435xf32, #tpu.memory_space<smem>>
    %c55 = arith.constant 55 : index
    %55 = memref.load %arg2[%c55] : memref<435xf32, #tpu.memory_space<smem>>
    %c56 = arith.constant 56 : index
    %56 = memref.load %arg2[%c56] : memref<435xf32, #tpu.memory_space<smem>>
    %c57 = arith.constant 57 : index
    %57 = memref.load %arg2[%c57] : memref<435xf32, #tpu.memory_space<smem>>
    %c58 = arith.constant 58 : index
    %58 = memref.load %arg2[%c58] : memref<435xf32, #tpu.memory_space<smem>>
    %c59 = arith.constant 59 : index
    %59 = memref.load %arg2[%c59] : memref<435xf32, #tpu.memory_space<smem>>
    %c60 = arith.constant 60 : index
    %60 = memref.load %arg2[%c60] : memref<435xf32, #tpu.memory_space<smem>>
    %c61 = arith.constant 61 : index
    %61 = memref.load %arg2[%c61] : memref<435xf32, #tpu.memory_space<smem>>
    %c62 = arith.constant 62 : index
    %62 = memref.load %arg2[%c62] : memref<435xf32, #tpu.memory_space<smem>>
    %c63 = arith.constant 63 : index
    %63 = memref.load %arg2[%c63] : memref<435xf32, #tpu.memory_space<smem>>
    %c64 = arith.constant 64 : index
    %64 = memref.load %arg2[%c64] : memref<435xf32, #tpu.memory_space<smem>>
    %c65 = arith.constant 65 : index
    %65 = memref.load %arg2[%c65] : memref<435xf32, #tpu.memory_space<smem>>
    %c66 = arith.constant 66 : index
    %66 = memref.load %arg2[%c66] : memref<435xf32, #tpu.memory_space<smem>>
    %c67 = arith.constant 67 : index
    %67 = memref.load %arg2[%c67] : memref<435xf32, #tpu.memory_space<smem>>
    %c68 = arith.constant 68 : index
    %68 = memref.load %arg2[%c68] : memref<435xf32, #tpu.memory_space<smem>>
    %c69 = arith.constant 69 : index
    %69 = memref.load %arg2[%c69] : memref<435xf32, #tpu.memory_space<smem>>
    %c70 = arith.constant 70 : index
    %70 = memref.load %arg2[%c70] : memref<435xf32, #tpu.memory_space<smem>>
    %c71 = arith.constant 71 : index
    %71 = memref.load %arg2[%c71] : memref<435xf32, #tpu.memory_space<smem>>
    %c72 = arith.constant 72 : index
    %72 = memref.load %arg2[%c72] : memref<435xf32, #tpu.memory_space<smem>>
    %c73 = arith.constant 73 : index
    %73 = memref.load %arg2[%c73] : memref<435xf32, #tpu.memory_space<smem>>
    %c74 = arith.constant 74 : index
    %74 = memref.load %arg2[%c74] : memref<435xf32, #tpu.memory_space<smem>>
    %c75 = arith.constant 75 : index
    %75 = memref.load %arg2[%c75] : memref<435xf32, #tpu.memory_space<smem>>
    %c76 = arith.constant 76 : index
    %76 = memref.load %arg2[%c76] : memref<435xf32, #tpu.memory_space<smem>>
    %c77 = arith.constant 77 : index
    %77 = memref.load %arg2[%c77] : memref<435xf32, #tpu.memory_space<smem>>
    %c78 = arith.constant 78 : index
    %78 = memref.load %arg2[%c78] : memref<435xf32, #tpu.memory_space<smem>>
    %c79 = arith.constant 79 : index
    %79 = memref.load %arg2[%c79] : memref<435xf32, #tpu.memory_space<smem>>
    %c80 = arith.constant 80 : index
    %80 = memref.load %arg2[%c80] : memref<435xf32, #tpu.memory_space<smem>>
    %c81 = arith.constant 81 : index
    %81 = memref.load %arg2[%c81] : memref<435xf32, #tpu.memory_space<smem>>
    %c82 = arith.constant 82 : index
    %82 = memref.load %arg2[%c82] : memref<435xf32, #tpu.memory_space<smem>>
    %c83 = arith.constant 83 : index
    %83 = memref.load %arg2[%c83] : memref<435xf32, #tpu.memory_space<smem>>
    %c84 = arith.constant 84 : index
    %84 = memref.load %arg2[%c84] : memref<435xf32, #tpu.memory_space<smem>>
    %c85 = arith.constant 85 : index
    %85 = memref.load %arg2[%c85] : memref<435xf32, #tpu.memory_space<smem>>
    %c86 = arith.constant 86 : index
    %86 = memref.load %arg2[%c86] : memref<435xf32, #tpu.memory_space<smem>>
    %c87 = arith.constant 87 : index
    %87 = memref.load %arg2[%c87] : memref<435xf32, #tpu.memory_space<smem>>
    %c88 = arith.constant 88 : index
    %88 = memref.load %arg2[%c88] : memref<435xf32, #tpu.memory_space<smem>>
    %c89 = arith.constant 89 : index
    %89 = memref.load %arg2[%c89] : memref<435xf32, #tpu.memory_space<smem>>
    %c90 = arith.constant 90 : index
    %90 = memref.load %arg2[%c90] : memref<435xf32, #tpu.memory_space<smem>>
    %c91 = arith.constant 91 : index
    %91 = memref.load %arg2[%c91] : memref<435xf32, #tpu.memory_space<smem>>
    %c92 = arith.constant 92 : index
    %92 = memref.load %arg2[%c92] : memref<435xf32, #tpu.memory_space<smem>>
    %c93 = arith.constant 93 : index
    %93 = memref.load %arg2[%c93] : memref<435xf32, #tpu.memory_space<smem>>
    %c94 = arith.constant 94 : index
    %94 = memref.load %arg2[%c94] : memref<435xf32, #tpu.memory_space<smem>>
    %c95 = arith.constant 95 : index
    %95 = memref.load %arg2[%c95] : memref<435xf32, #tpu.memory_space<smem>>
    %c96 = arith.constant 96 : index
    %96 = memref.load %arg2[%c96] : memref<435xf32, #tpu.memory_space<smem>>
    %c97 = arith.constant 97 : index
    %97 = memref.load %arg2[%c97] : memref<435xf32, #tpu.memory_space<smem>>
    %c98 = arith.constant 98 : index
    %98 = memref.load %arg2[%c98] : memref<435xf32, #tpu.memory_space<smem>>
    %c99 = arith.constant 99 : index
    %99 = memref.load %arg2[%c99] : memref<435xf32, #tpu.memory_space<smem>>
    %c100 = arith.constant 100 : index
    %100 = memref.load %arg2[%c100] : memref<435xf32, #tpu.memory_space<smem>>
    %c101 = arith.constant 101 : index
    %101 = memref.load %arg2[%c101] : memref<435xf32, #tpu.memory_space<smem>>
    %c102 = arith.constant 102 : index
    %102 = memref.load %arg2[%c102] : memref<435xf32, #tpu.memory_space<smem>>
    %c103 = arith.constant 103 : index
    %103 = memref.load %arg2[%c103] : memref<435xf32, #tpu.memory_space<smem>>
    %c104 = arith.constant 104 : index
    %104 = memref.load %arg2[%c104] : memref<435xf32, #tpu.memory_space<smem>>
    %c105 = arith.constant 105 : index
    %105 = memref.load %arg2[%c105] : memref<435xf32, #tpu.memory_space<smem>>
    %c106 = arith.constant 106 : index
    %106 = memref.load %arg2[%c106] : memref<435xf32, #tpu.memory_space<smem>>
    %c107 = arith.constant 107 : index
    %107 = memref.load %arg2[%c107] : memref<435xf32, #tpu.memory_space<smem>>
    %c108 = arith.constant 108 : index
    %108 = memref.load %arg2[%c108] : memref<435xf32, #tpu.memory_space<smem>>
    %c109 = arith.constant 109 : index
    %109 = memref.load %arg2[%c109] : memref<435xf32, #tpu.memory_space<smem>>
    %c110 = arith.constant 110 : index
    %110 = memref.load %arg2[%c110] : memref<435xf32, #tpu.memory_space<smem>>
    %c111 = arith.constant 111 : index
    %111 = memref.load %arg2[%c111] : memref<435xf32, #tpu.memory_space<smem>>
    %c112 = arith.constant 112 : index
    %112 = memref.load %arg2[%c112] : memref<435xf32, #tpu.memory_space<smem>>
    %c113 = arith.constant 113 : index
    %113 = memref.load %arg2[%c113] : memref<435xf32, #tpu.memory_space<smem>>
    %c114 = arith.constant 114 : index
    %114 = memref.load %arg2[%c114] : memref<435xf32, #tpu.memory_space<smem>>
    %c115 = arith.constant 115 : index
    %115 = memref.load %arg2[%c115] : memref<435xf32, #tpu.memory_space<smem>>
    %c116 = arith.constant 116 : index
    %116 = memref.load %arg2[%c116] : memref<435xf32, #tpu.memory_space<smem>>
    %c117 = arith.constant 117 : index
    %117 = memref.load %arg2[%c117] : memref<435xf32, #tpu.memory_space<smem>>
    %c118 = arith.constant 118 : index
    %118 = memref.load %arg2[%c118] : memref<435xf32, #tpu.memory_space<smem>>
    %c119 = arith.constant 119 : index
    %119 = memref.load %arg2[%c119] : memref<435xf32, #tpu.memory_space<smem>>
    %c120 = arith.constant 120 : index
    %120 = memref.load %arg2[%c120] : memref<435xf32, #tpu.memory_space<smem>>
    %c121 = arith.constant 121 : index
    %121 = memref.load %arg2[%c121] : memref<435xf32, #tpu.memory_space<smem>>
    %c122 = arith.constant 122 : index
    %122 = memref.load %arg2[%c122] : memref<435xf32, #tpu.memory_space<smem>>
    %c123 = arith.constant 123 : index
    %123 = memref.load %arg2[%c123] : memref<435xf32, #tpu.memory_space<smem>>
    %c124 = arith.constant 124 : index
    %124 = memref.load %arg2[%c124] : memref<435xf32, #tpu.memory_space<smem>>
    %c125 = arith.constant 125 : index
    %125 = memref.load %arg2[%c125] : memref<435xf32, #tpu.memory_space<smem>>
    %c126 = arith.constant 126 : index
    %126 = memref.load %arg2[%c126] : memref<435xf32, #tpu.memory_space<smem>>
    %c127 = arith.constant 127 : index
    %127 = memref.load %arg2[%c127] : memref<435xf32, #tpu.memory_space<smem>>
    %c128 = arith.constant 128 : index
    %128 = memref.load %arg2[%c128] : memref<435xf32, #tpu.memory_space<smem>>
    %c129 = arith.constant 129 : index
    %129 = memref.load %arg2[%c129] : memref<435xf32, #tpu.memory_space<smem>>
    %c130 = arith.constant 130 : index
    %130 = memref.load %arg2[%c130] : memref<435xf32, #tpu.memory_space<smem>>
    %c131 = arith.constant 131 : index
    %131 = memref.load %arg2[%c131] : memref<435xf32, #tpu.memory_space<smem>>
    %c132 = arith.constant 132 : index
    %132 = memref.load %arg2[%c132] : memref<435xf32, #tpu.memory_space<smem>>
    %c133 = arith.constant 133 : index
    %133 = memref.load %arg2[%c133] : memref<435xf32, #tpu.memory_space<smem>>
    %c134 = arith.constant 134 : index
    %134 = memref.load %arg2[%c134] : memref<435xf32, #tpu.memory_space<smem>>
    %c135 = arith.constant 135 : index
    %135 = memref.load %arg2[%c135] : memref<435xf32, #tpu.memory_space<smem>>
    %c136 = arith.constant 136 : index
    %136 = memref.load %arg2[%c136] : memref<435xf32, #tpu.memory_space<smem>>
    %c137 = arith.constant 137 : index
    %137 = memref.load %arg2[%c137] : memref<435xf32, #tpu.memory_space<smem>>
    %c138 = arith.constant 138 : index
    %138 = memref.load %arg2[%c138] : memref<435xf32, #tpu.memory_space<smem>>
    %c139 = arith.constant 139 : index
    %139 = memref.load %arg2[%c139] : memref<435xf32, #tpu.memory_space<smem>>
    %c140 = arith.constant 140 : index
    %140 = memref.load %arg2[%c140] : memref<435xf32, #tpu.memory_space<smem>>
    %c141 = arith.constant 141 : index
    %141 = memref.load %arg2[%c141] : memref<435xf32, #tpu.memory_space<smem>>
    %c142 = arith.constant 142 : index
    %142 = memref.load %arg2[%c142] : memref<435xf32, #tpu.memory_space<smem>>
    %c143 = arith.constant 143 : index
    %143 = memref.load %arg2[%c143] : memref<435xf32, #tpu.memory_space<smem>>
    %c144 = arith.constant 144 : index
    %144 = memref.load %arg2[%c144] : memref<435xf32, #tpu.memory_space<smem>>
    %c145 = arith.constant 145 : index
    %145 = memref.load %arg2[%c145] : memref<435xf32, #tpu.memory_space<smem>>
    %c146 = arith.constant 146 : index
    %146 = memref.load %arg2[%c146] : memref<435xf32, #tpu.memory_space<smem>>
    %c147 = arith.constant 147 : index
    %147 = memref.load %arg2[%c147] : memref<435xf32, #tpu.memory_space<smem>>
    %c148 = arith.constant 148 : index
    %148 = memref.load %arg2[%c148] : memref<435xf32, #tpu.memory_space<smem>>
    %c149 = arith.constant 149 : index
    %149 = memref.load %arg2[%c149] : memref<435xf32, #tpu.memory_space<smem>>
    %c150 = arith.constant 150 : index
    %150 = memref.load %arg2[%c150] : memref<435xf32, #tpu.memory_space<smem>>
    %c151 = arith.constant 151 : index
    %151 = memref.load %arg2[%c151] : memref<435xf32, #tpu.memory_space<smem>>
    %c152 = arith.constant 152 : index
    %152 = memref.load %arg2[%c152] : memref<435xf32, #tpu.memory_space<smem>>
    %c153 = arith.constant 153 : index
    %153 = memref.load %arg2[%c153] : memref<435xf32, #tpu.memory_space<smem>>
    %c154 = arith.constant 154 : index
    %154 = memref.load %arg2[%c154] : memref<435xf32, #tpu.memory_space<smem>>
    %c155 = arith.constant 155 : index
    %155 = memref.load %arg2[%c155] : memref<435xf32, #tpu.memory_space<smem>>
    %c156 = arith.constant 156 : index
    %156 = memref.load %arg2[%c156] : memref<435xf32, #tpu.memory_space<smem>>
    %c157 = arith.constant 157 : index
    %157 = memref.load %arg2[%c157] : memref<435xf32, #tpu.memory_space<smem>>
    %c158 = arith.constant 158 : index
    %158 = memref.load %arg2[%c158] : memref<435xf32, #tpu.memory_space<smem>>
    %c159 = arith.constant 159 : index
    %159 = memref.load %arg2[%c159] : memref<435xf32, #tpu.memory_space<smem>>
    %c160 = arith.constant 160 : index
    %160 = memref.load %arg2[%c160] : memref<435xf32, #tpu.memory_space<smem>>
    %c161 = arith.constant 161 : index
    %161 = memref.load %arg2[%c161] : memref<435xf32, #tpu.memory_space<smem>>
    %c162 = arith.constant 162 : index
    %162 = memref.load %arg2[%c162] : memref<435xf32, #tpu.memory_space<smem>>
    %c163 = arith.constant 163 : index
    %163 = memref.load %arg2[%c163] : memref<435xf32, #tpu.memory_space<smem>>
    %c164 = arith.constant 164 : index
    %164 = memref.load %arg2[%c164] : memref<435xf32, #tpu.memory_space<smem>>
    %c165 = arith.constant 165 : index
    %165 = memref.load %arg2[%c165] : memref<435xf32, #tpu.memory_space<smem>>
    %c166 = arith.constant 166 : index
    %166 = memref.load %arg2[%c166] : memref<435xf32, #tpu.memory_space<smem>>
    %c167 = arith.constant 167 : index
    %167 = memref.load %arg2[%c167] : memref<435xf32, #tpu.memory_space<smem>>
    %c168 = arith.constant 168 : index
    %168 = memref.load %arg2[%c168] : memref<435xf32, #tpu.memory_space<smem>>
    %c169 = arith.constant 169 : index
    %169 = memref.load %arg2[%c169] : memref<435xf32, #tpu.memory_space<smem>>
    %c170 = arith.constant 170 : index
    %170 = memref.load %arg2[%c170] : memref<435xf32, #tpu.memory_space<smem>>
    %c171 = arith.constant 171 : index
    %171 = memref.load %arg2[%c171] : memref<435xf32, #tpu.memory_space<smem>>
    %c172 = arith.constant 172 : index
    %172 = memref.load %arg2[%c172] : memref<435xf32, #tpu.memory_space<smem>>
    %c173 = arith.constant 173 : index
    %173 = memref.load %arg2[%c173] : memref<435xf32, #tpu.memory_space<smem>>
    %c174 = arith.constant 174 : index
    %174 = memref.load %arg2[%c174] : memref<435xf32, #tpu.memory_space<smem>>
    %c175 = arith.constant 175 : index
    %175 = memref.load %arg2[%c175] : memref<435xf32, #tpu.memory_space<smem>>
    %c176 = arith.constant 176 : index
    %176 = memref.load %arg2[%c176] : memref<435xf32, #tpu.memory_space<smem>>
    %c177 = arith.constant 177 : index
    %177 = memref.load %arg2[%c177] : memref<435xf32, #tpu.memory_space<smem>>
    %c178 = arith.constant 178 : index
    %178 = memref.load %arg2[%c178] : memref<435xf32, #tpu.memory_space<smem>>
    %c179 = arith.constant 179 : index
    %179 = memref.load %arg2[%c179] : memref<435xf32, #tpu.memory_space<smem>>
    %c180 = arith.constant 180 : index
    %180 = memref.load %arg2[%c180] : memref<435xf32, #tpu.memory_space<smem>>
    %c181 = arith.constant 181 : index
    %181 = memref.load %arg2[%c181] : memref<435xf32, #tpu.memory_space<smem>>
    %c182 = arith.constant 182 : index
    %182 = memref.load %arg2[%c182] : memref<435xf32, #tpu.memory_space<smem>>
    %c183 = arith.constant 183 : index
    %183 = memref.load %arg2[%c183] : memref<435xf32, #tpu.memory_space<smem>>
    %c184 = arith.constant 184 : index
    %184 = memref.load %arg2[%c184] : memref<435xf32, #tpu.memory_space<smem>>
    %c185 = arith.constant 185 : index
    %185 = memref.load %arg2[%c185] : memref<435xf32, #tpu.memory_space<smem>>
    %c186 = arith.constant 186 : index
    %186 = memref.load %arg2[%c186] : memref<435xf32, #tpu.memory_space<smem>>
    %c187 = arith.constant 187 : index
    %187 = memref.load %arg2[%c187] : memref<435xf32, #tpu.memory_space<smem>>
    %c188 = arith.constant 188 : index
    %188 = memref.load %arg2[%c188] : memref<435xf32, #tpu.memory_space<smem>>
    %c189 = arith.constant 189 : index
    %189 = memref.load %arg2[%c189] : memref<435xf32, #tpu.memory_space<smem>>
    %c190 = arith.constant 190 : index
    %190 = memref.load %arg2[%c190] : memref<435xf32, #tpu.memory_space<smem>>
    %c191 = arith.constant 191 : index
    %191 = memref.load %arg2[%c191] : memref<435xf32, #tpu.memory_space<smem>>
    %c192 = arith.constant 192 : index
    %192 = memref.load %arg2[%c192] : memref<435xf32, #tpu.memory_space<smem>>
    %c193 = arith.constant 193 : index
    %193 = memref.load %arg2[%c193] : memref<435xf32, #tpu.memory_space<smem>>
    %c194 = arith.constant 194 : index
    %194 = memref.load %arg2[%c194] : memref<435xf32, #tpu.memory_space<smem>>
    %c195 = arith.constant 195 : index
    %195 = memref.load %arg2[%c195] : memref<435xf32, #tpu.memory_space<smem>>
    %c196 = arith.constant 196 : index
    %196 = memref.load %arg2[%c196] : memref<435xf32, #tpu.memory_space<smem>>
    %c197 = arith.constant 197 : index
    %197 = memref.load %arg2[%c197] : memref<435xf32, #tpu.memory_space<smem>>
    %c198 = arith.constant 198 : index
    %198 = memref.load %arg2[%c198] : memref<435xf32, #tpu.memory_space<smem>>
    %c199 = arith.constant 199 : index
    %199 = memref.load %arg2[%c199] : memref<435xf32, #tpu.memory_space<smem>>
    %c200 = arith.constant 200 : index
    %200 = memref.load %arg2[%c200] : memref<435xf32, #tpu.memory_space<smem>>
    %c201 = arith.constant 201 : index
    %201 = memref.load %arg2[%c201] : memref<435xf32, #tpu.memory_space<smem>>
    %c202 = arith.constant 202 : index
    %202 = memref.load %arg2[%c202] : memref<435xf32, #tpu.memory_space<smem>>
    %c203 = arith.constant 203 : index
    %203 = memref.load %arg2[%c203] : memref<435xf32, #tpu.memory_space<smem>>
    %c204 = arith.constant 204 : index
    %204 = memref.load %arg2[%c204] : memref<435xf32, #tpu.memory_space<smem>>
    %c205 = arith.constant 205 : index
    %205 = memref.load %arg2[%c205] : memref<435xf32, #tpu.memory_space<smem>>
    %c206 = arith.constant 206 : index
    %206 = memref.load %arg2[%c206] : memref<435xf32, #tpu.memory_space<smem>>
    %c207 = arith.constant 207 : index
    %207 = memref.load %arg2[%c207] : memref<435xf32, #tpu.memory_space<smem>>
    %c208 = arith.constant 208 : index
    %208 = memref.load %arg2[%c208] : memref<435xf32, #tpu.memory_space<smem>>
    %c209 = arith.constant 209 : index
    %209 = memref.load %arg2[%c209] : memref<435xf32, #tpu.memory_space<smem>>
    %c210 = arith.constant 210 : index
    %210 = memref.load %arg2[%c210] : memref<435xf32, #tpu.memory_space<smem>>
    %c211 = arith.constant 211 : index
    %211 = memref.load %arg2[%c211] : memref<435xf32, #tpu.memory_space<smem>>
    %c212 = arith.constant 212 : index
    %212 = memref.load %arg2[%c212] : memref<435xf32, #tpu.memory_space<smem>>
    %c213 = arith.constant 213 : index
    %213 = memref.load %arg2[%c213] : memref<435xf32, #tpu.memory_space<smem>>
    %c214 = arith.constant 214 : index
    %214 = memref.load %arg2[%c214] : memref<435xf32, #tpu.memory_space<smem>>
    %c215 = arith.constant 215 : index
    %215 = memref.load %arg2[%c215] : memref<435xf32, #tpu.memory_space<smem>>
    %c216 = arith.constant 216 : index
    %216 = memref.load %arg2[%c216] : memref<435xf32, #tpu.memory_space<smem>>
    %c217 = arith.constant 217 : index
    %217 = memref.load %arg2[%c217] : memref<435xf32, #tpu.memory_space<smem>>
    %c218 = arith.constant 218 : index
    %218 = memref.load %arg2[%c218] : memref<435xf32, #tpu.memory_space<smem>>
    %c219 = arith.constant 219 : index
    %219 = memref.load %arg2[%c219] : memref<435xf32, #tpu.memory_space<smem>>
    %c220 = arith.constant 220 : index
    %220 = memref.load %arg2[%c220] : memref<435xf32, #tpu.memory_space<smem>>
    %c221 = arith.constant 221 : index
    %221 = memref.load %arg2[%c221] : memref<435xf32, #tpu.memory_space<smem>>
    %c222 = arith.constant 222 : index
    %222 = memref.load %arg2[%c222] : memref<435xf32, #tpu.memory_space<smem>>
    %c223 = arith.constant 223 : index
    %223 = memref.load %arg2[%c223] : memref<435xf32, #tpu.memory_space<smem>>
    %c224 = arith.constant 224 : index
    %224 = memref.load %arg2[%c224] : memref<435xf32, #tpu.memory_space<smem>>
    %c225 = arith.constant 225 : index
    %225 = memref.load %arg2[%c225] : memref<435xf32, #tpu.memory_space<smem>>
    %c226 = arith.constant 226 : index
    %226 = memref.load %arg2[%c226] : memref<435xf32, #tpu.memory_space<smem>>
    %c227 = arith.constant 227 : index
    %227 = memref.load %arg2[%c227] : memref<435xf32, #tpu.memory_space<smem>>
    %c228 = arith.constant 228 : index
    %228 = memref.load %arg2[%c228] : memref<435xf32, #tpu.memory_space<smem>>
    %c229 = arith.constant 229 : index
    %229 = memref.load %arg2[%c229] : memref<435xf32, #tpu.memory_space<smem>>
    %c230 = arith.constant 230 : index
    %230 = memref.load %arg2[%c230] : memref<435xf32, #tpu.memory_space<smem>>
    %c231 = arith.constant 231 : index
    %231 = memref.load %arg2[%c231] : memref<435xf32, #tpu.memory_space<smem>>
    %c232 = arith.constant 232 : index
    %232 = memref.load %arg2[%c232] : memref<435xf32, #tpu.memory_space<smem>>
    %c233 = arith.constant 233 : index
    %233 = memref.load %arg2[%c233] : memref<435xf32, #tpu.memory_space<smem>>
    %c234 = arith.constant 234 : index
    %234 = memref.load %arg2[%c234] : memref<435xf32, #tpu.memory_space<smem>>
    %c235 = arith.constant 235 : index
    %235 = memref.load %arg2[%c235] : memref<435xf32, #tpu.memory_space<smem>>
    %c236 = arith.constant 236 : index
    %236 = memref.load %arg2[%c236] : memref<435xf32, #tpu.memory_space<smem>>
    %c237 = arith.constant 237 : index
    %237 = memref.load %arg2[%c237] : memref<435xf32, #tpu.memory_space<smem>>
    %c238 = arith.constant 238 : index
    %238 = memref.load %arg2[%c238] : memref<435xf32, #tpu.memory_space<smem>>
    %c239 = arith.constant 239 : index
    %239 = memref.load %arg2[%c239] : memref<435xf32, #tpu.memory_space<smem>>
    %c240 = arith.constant 240 : index
    %240 = memref.load %arg2[%c240] : memref<435xf32, #tpu.memory_space<smem>>
    %c241 = arith.constant 241 : index
    %241 = memref.load %arg2[%c241] : memref<435xf32, #tpu.memory_space<smem>>
    %c242 = arith.constant 242 : index
    %242 = memref.load %arg2[%c242] : memref<435xf32, #tpu.memory_space<smem>>
    %c243 = arith.constant 243 : index
    %243 = memref.load %arg2[%c243] : memref<435xf32, #tpu.memory_space<smem>>
    %c244 = arith.constant 244 : index
    %244 = memref.load %arg2[%c244] : memref<435xf32, #tpu.memory_space<smem>>
    %c245 = arith.constant 245 : index
    %245 = memref.load %arg2[%c245] : memref<435xf32, #tpu.memory_space<smem>>
    %c246 = arith.constant 246 : index
    %246 = memref.load %arg2[%c246] : memref<435xf32, #tpu.memory_space<smem>>
    %c247 = arith.constant 247 : index
    %247 = memref.load %arg2[%c247] : memref<435xf32, #tpu.memory_space<smem>>
    %c248 = arith.constant 248 : index
    %248 = memref.load %arg2[%c248] : memref<435xf32, #tpu.memory_space<smem>>
    %c249 = arith.constant 249 : index
    %249 = memref.load %arg2[%c249] : memref<435xf32, #tpu.memory_space<smem>>
    %c250 = arith.constant 250 : index
    %250 = memref.load %arg2[%c250] : memref<435xf32, #tpu.memory_space<smem>>
    %c251 = arith.constant 251 : index
    %251 = memref.load %arg2[%c251] : memref<435xf32, #tpu.memory_space<smem>>
    %c252 = arith.constant 252 : index
    %252 = memref.load %arg2[%c252] : memref<435xf32, #tpu.memory_space<smem>>
    %c253 = arith.constant 253 : index
    %253 = memref.load %arg2[%c253] : memref<435xf32, #tpu.memory_space<smem>>
    %c254 = arith.constant 254 : index
    %254 = memref.load %arg2[%c254] : memref<435xf32, #tpu.memory_space<smem>>
    %c255 = arith.constant 255 : index
    %255 = memref.load %arg2[%c255] : memref<435xf32, #tpu.memory_space<smem>>
    %c256 = arith.constant 256 : index
    %256 = memref.load %arg2[%c256] : memref<435xf32, #tpu.memory_space<smem>>
    %c257 = arith.constant 257 : index
    %257 = memref.load %arg2[%c257] : memref<435xf32, #tpu.memory_space<smem>>
    %c258 = arith.constant 258 : index
    %258 = memref.load %arg2[%c258] : memref<435xf32, #tpu.memory_space<smem>>
    %c259 = arith.constant 259 : index
    %259 = memref.load %arg2[%c259] : memref<435xf32, #tpu.memory_space<smem>>
    %c260 = arith.constant 260 : index
    %260 = memref.load %arg2[%c260] : memref<435xf32, #tpu.memory_space<smem>>
    %c261 = arith.constant 261 : index
    %261 = memref.load %arg2[%c261] : memref<435xf32, #tpu.memory_space<smem>>
    %c262 = arith.constant 262 : index
    %262 = memref.load %arg2[%c262] : memref<435xf32, #tpu.memory_space<smem>>
    %c263 = arith.constant 263 : index
    %263 = memref.load %arg2[%c263] : memref<435xf32, #tpu.memory_space<smem>>
    %c264 = arith.constant 264 : index
    %264 = memref.load %arg2[%c264] : memref<435xf32, #tpu.memory_space<smem>>
    %c265 = arith.constant 265 : index
    %265 = memref.load %arg2[%c265] : memref<435xf32, #tpu.memory_space<smem>>
    %c266 = arith.constant 266 : index
    %266 = memref.load %arg2[%c266] : memref<435xf32, #tpu.memory_space<smem>>
    %c267 = arith.constant 267 : index
    %267 = memref.load %arg2[%c267] : memref<435xf32, #tpu.memory_space<smem>>
    %c268 = arith.constant 268 : index
    %268 = memref.load %arg2[%c268] : memref<435xf32, #tpu.memory_space<smem>>
    %c269 = arith.constant 269 : index
    %269 = memref.load %arg2[%c269] : memref<435xf32, #tpu.memory_space<smem>>
    %c270 = arith.constant 270 : index
    %270 = memref.load %arg2[%c270] : memref<435xf32, #tpu.memory_space<smem>>
    %c271 = arith.constant 271 : index
    %271 = memref.load %arg2[%c271] : memref<435xf32, #tpu.memory_space<smem>>
    %c272 = arith.constant 272 : index
    %272 = memref.load %arg2[%c272] : memref<435xf32, #tpu.memory_space<smem>>
    %c273 = arith.constant 273 : index
    %273 = memref.load %arg2[%c273] : memref<435xf32, #tpu.memory_space<smem>>
    %c274 = arith.constant 274 : index
    %274 = memref.load %arg2[%c274] : memref<435xf32, #tpu.memory_space<smem>>
    %c275 = arith.constant 275 : index
    %275 = memref.load %arg2[%c275] : memref<435xf32, #tpu.memory_space<smem>>
    %c276 = arith.constant 276 : index
    %276 = memref.load %arg2[%c276] : memref<435xf32, #tpu.memory_space<smem>>
    %c277 = arith.constant 277 : index
    %277 = memref.load %arg2[%c277] : memref<435xf32, #tpu.memory_space<smem>>
    %c278 = arith.constant 278 : index
    %278 = memref.load %arg2[%c278] : memref<435xf32, #tpu.memory_space<smem>>
    %c279 = arith.constant 279 : index
    %279 = memref.load %arg2[%c279] : memref<435xf32, #tpu.memory_space<smem>>
    %c280 = arith.constant 280 : index
    %280 = memref.load %arg2[%c280] : memref<435xf32, #tpu.memory_space<smem>>
    %c281 = arith.constant 281 : index
    %281 = memref.load %arg2[%c281] : memref<435xf32, #tpu.memory_space<smem>>
    %c282 = arith.constant 282 : index
    %282 = memref.load %arg2[%c282] : memref<435xf32, #tpu.memory_space<smem>>
    %c283 = arith.constant 283 : index
    %283 = memref.load %arg2[%c283] : memref<435xf32, #tpu.memory_space<smem>>
    %c284 = arith.constant 284 : index
    %284 = memref.load %arg2[%c284] : memref<435xf32, #tpu.memory_space<smem>>
    %c285 = arith.constant 285 : index
    %285 = memref.load %arg2[%c285] : memref<435xf32, #tpu.memory_space<smem>>
    %c286 = arith.constant 286 : index
    %286 = memref.load %arg2[%c286] : memref<435xf32, #tpu.memory_space<smem>>
    %c287 = arith.constant 287 : index
    %287 = memref.load %arg2[%c287] : memref<435xf32, #tpu.memory_space<smem>>
    %c288 = arith.constant 288 : index
    %288 = memref.load %arg2[%c288] : memref<435xf32, #tpu.memory_space<smem>>
    %c289 = arith.constant 289 : index
    %289 = memref.load %arg2[%c289] : memref<435xf32, #tpu.memory_space<smem>>
    %c290 = arith.constant 290 : index
    %290 = memref.load %arg2[%c290] : memref<435xf32, #tpu.memory_space<smem>>
    %c291 = arith.constant 291 : index
    %291 = memref.load %arg2[%c291] : memref<435xf32, #tpu.memory_space<smem>>
    %c292 = arith.constant 292 : index
    %292 = memref.load %arg2[%c292] : memref<435xf32, #tpu.memory_space<smem>>
    %c293 = arith.constant 293 : index
    %293 = memref.load %arg2[%c293] : memref<435xf32, #tpu.memory_space<smem>>
    %c294 = arith.constant 294 : index
    %294 = memref.load %arg2[%c294] : memref<435xf32, #tpu.memory_space<smem>>
    %c295 = arith.constant 295 : index
    %295 = memref.load %arg2[%c295] : memref<435xf32, #tpu.memory_space<smem>>
    %c296 = arith.constant 296 : index
    %296 = memref.load %arg2[%c296] : memref<435xf32, #tpu.memory_space<smem>>
    %c297 = arith.constant 297 : index
    %297 = memref.load %arg2[%c297] : memref<435xf32, #tpu.memory_space<smem>>
    %c298 = arith.constant 298 : index
    %298 = memref.load %arg2[%c298] : memref<435xf32, #tpu.memory_space<smem>>
    %c299 = arith.constant 299 : index
    %299 = memref.load %arg2[%c299] : memref<435xf32, #tpu.memory_space<smem>>
    %c300 = arith.constant 300 : index
    %300 = memref.load %arg2[%c300] : memref<435xf32, #tpu.memory_space<smem>>
    %c301 = arith.constant 301 : index
    %301 = memref.load %arg2[%c301] : memref<435xf32, #tpu.memory_space<smem>>
    %c302 = arith.constant 302 : index
    %302 = memref.load %arg2[%c302] : memref<435xf32, #tpu.memory_space<smem>>
    %c303 = arith.constant 303 : index
    %303 = memref.load %arg2[%c303] : memref<435xf32, #tpu.memory_space<smem>>
    %c304 = arith.constant 304 : index
    %304 = memref.load %arg2[%c304] : memref<435xf32, #tpu.memory_space<smem>>
    %c305 = arith.constant 305 : index
    %305 = memref.load %arg2[%c305] : memref<435xf32, #tpu.memory_space<smem>>
    %c306 = arith.constant 306 : index
    %306 = memref.load %arg2[%c306] : memref<435xf32, #tpu.memory_space<smem>>
    %c307 = arith.constant 307 : index
    %307 = memref.load %arg2[%c307] : memref<435xf32, #tpu.memory_space<smem>>
    %c308 = arith.constant 308 : index
    %308 = memref.load %arg2[%c308] : memref<435xf32, #tpu.memory_space<smem>>
    %c309 = arith.constant 309 : index
    %309 = memref.load %arg2[%c309] : memref<435xf32, #tpu.memory_space<smem>>
    %c310 = arith.constant 310 : index
    %310 = memref.load %arg2[%c310] : memref<435xf32, #tpu.memory_space<smem>>
    %c311 = arith.constant 311 : index
    %311 = memref.load %arg2[%c311] : memref<435xf32, #tpu.memory_space<smem>>
    %c312 = arith.constant 312 : index
    %312 = memref.load %arg2[%c312] : memref<435xf32, #tpu.memory_space<smem>>
    %c313 = arith.constant 313 : index
    %313 = memref.load %arg2[%c313] : memref<435xf32, #tpu.memory_space<smem>>
    %c314 = arith.constant 314 : index
    %314 = memref.load %arg2[%c314] : memref<435xf32, #tpu.memory_space<smem>>
    %c315 = arith.constant 315 : index
    %315 = memref.load %arg2[%c315] : memref<435xf32, #tpu.memory_space<smem>>
    %c316 = arith.constant 316 : index
    %316 = memref.load %arg2[%c316] : memref<435xf32, #tpu.memory_space<smem>>
    %c317 = arith.constant 317 : index
    %317 = memref.load %arg2[%c317] : memref<435xf32, #tpu.memory_space<smem>>
    %c318 = arith.constant 318 : index
    %318 = memref.load %arg2[%c318] : memref<435xf32, #tpu.memory_space<smem>>
    %c319 = arith.constant 319 : index
    %319 = memref.load %arg2[%c319] : memref<435xf32, #tpu.memory_space<smem>>
    %c320 = arith.constant 320 : index
    %320 = memref.load %arg2[%c320] : memref<435xf32, #tpu.memory_space<smem>>
    %c321 = arith.constant 321 : index
    %321 = memref.load %arg2[%c321] : memref<435xf32, #tpu.memory_space<smem>>
    %c322 = arith.constant 322 : index
    %322 = memref.load %arg2[%c322] : memref<435xf32, #tpu.memory_space<smem>>
    %c323 = arith.constant 323 : index
    %323 = memref.load %arg2[%c323] : memref<435xf32, #tpu.memory_space<smem>>
    %c324 = arith.constant 324 : index
    %324 = memref.load %arg2[%c324] : memref<435xf32, #tpu.memory_space<smem>>
    %c325 = arith.constant 325 : index
    %325 = memref.load %arg2[%c325] : memref<435xf32, #tpu.memory_space<smem>>
    %c326 = arith.constant 326 : index
    %326 = memref.load %arg2[%c326] : memref<435xf32, #tpu.memory_space<smem>>
    %c327 = arith.constant 327 : index
    %327 = memref.load %arg2[%c327] : memref<435xf32, #tpu.memory_space<smem>>
    %c328 = arith.constant 328 : index
    %328 = memref.load %arg2[%c328] : memref<435xf32, #tpu.memory_space<smem>>
    %c329 = arith.constant 329 : index
    %329 = memref.load %arg2[%c329] : memref<435xf32, #tpu.memory_space<smem>>
    %c330 = arith.constant 330 : index
    %330 = memref.load %arg2[%c330] : memref<435xf32, #tpu.memory_space<smem>>
    %c331 = arith.constant 331 : index
    %331 = memref.load %arg2[%c331] : memref<435xf32, #tpu.memory_space<smem>>
    %c332 = arith.constant 332 : index
    %332 = memref.load %arg2[%c332] : memref<435xf32, #tpu.memory_space<smem>>
    %c333 = arith.constant 333 : index
    %333 = memref.load %arg2[%c333] : memref<435xf32, #tpu.memory_space<smem>>
    %c334 = arith.constant 334 : index
    %334 = memref.load %arg2[%c334] : memref<435xf32, #tpu.memory_space<smem>>
    %c335 = arith.constant 335 : index
    %335 = memref.load %arg2[%c335] : memref<435xf32, #tpu.memory_space<smem>>
    %c336 = arith.constant 336 : index
    %336 = memref.load %arg2[%c336] : memref<435xf32, #tpu.memory_space<smem>>
    %c337 = arith.constant 337 : index
    %337 = memref.load %arg2[%c337] : memref<435xf32, #tpu.memory_space<smem>>
    %c338 = arith.constant 338 : index
    %338 = memref.load %arg2[%c338] : memref<435xf32, #tpu.memory_space<smem>>
    %c339 = arith.constant 339 : index
    %339 = memref.load %arg2[%c339] : memref<435xf32, #tpu.memory_space<smem>>
    %c340 = arith.constant 340 : index
    %340 = memref.load %arg2[%c340] : memref<435xf32, #tpu.memory_space<smem>>
    %c341 = arith.constant 341 : index
    %341 = memref.load %arg2[%c341] : memref<435xf32, #tpu.memory_space<smem>>
    %c342 = arith.constant 342 : index
    %342 = memref.load %arg2[%c342] : memref<435xf32, #tpu.memory_space<smem>>
    %c343 = arith.constant 343 : index
    %343 = memref.load %arg2[%c343] : memref<435xf32, #tpu.memory_space<smem>>
    %c344 = arith.constant 344 : index
    %344 = memref.load %arg2[%c344] : memref<435xf32, #tpu.memory_space<smem>>
    %c345 = arith.constant 345 : index
    %345 = memref.load %arg2[%c345] : memref<435xf32, #tpu.memory_space<smem>>
    %c346 = arith.constant 346 : index
    %346 = memref.load %arg2[%c346] : memref<435xf32, #tpu.memory_space<smem>>
    %c347 = arith.constant 347 : index
    %347 = memref.load %arg2[%c347] : memref<435xf32, #tpu.memory_space<smem>>
    %c348 = arith.constant 348 : index
    %348 = memref.load %arg2[%c348] : memref<435xf32, #tpu.memory_space<smem>>
    %c349 = arith.constant 349 : index
    %349 = memref.load %arg2[%c349] : memref<435xf32, #tpu.memory_space<smem>>
    %c350 = arith.constant 350 : index
    %350 = memref.load %arg2[%c350] : memref<435xf32, #tpu.memory_space<smem>>
    %c351 = arith.constant 351 : index
    %351 = memref.load %arg2[%c351] : memref<435xf32, #tpu.memory_space<smem>>
    %c352 = arith.constant 352 : index
    %352 = memref.load %arg2[%c352] : memref<435xf32, #tpu.memory_space<smem>>
    %c353 = arith.constant 353 : index
    %353 = memref.load %arg2[%c353] : memref<435xf32, #tpu.memory_space<smem>>
    %c354 = arith.constant 354 : index
    %354 = memref.load %arg2[%c354] : memref<435xf32, #tpu.memory_space<smem>>
    %c355 = arith.constant 355 : index
    %355 = memref.load %arg2[%c355] : memref<435xf32, #tpu.memory_space<smem>>
    %c356 = arith.constant 356 : index
    %356 = memref.load %arg2[%c356] : memref<435xf32, #tpu.memory_space<smem>>
    %c357 = arith.constant 357 : index
    %357 = memref.load %arg2[%c357] : memref<435xf32, #tpu.memory_space<smem>>
    %c358 = arith.constant 358 : index
    %358 = memref.load %arg2[%c358] : memref<435xf32, #tpu.memory_space<smem>>
    %c359 = arith.constant 359 : index
    %359 = memref.load %arg2[%c359] : memref<435xf32, #tpu.memory_space<smem>>
    %c360 = arith.constant 360 : index
    %360 = memref.load %arg2[%c360] : memref<435xf32, #tpu.memory_space<smem>>
    %c361 = arith.constant 361 : index
    %361 = memref.load %arg2[%c361] : memref<435xf32, #tpu.memory_space<smem>>
    %c362 = arith.constant 362 : index
    %362 = memref.load %arg2[%c362] : memref<435xf32, #tpu.memory_space<smem>>
    %c363 = arith.constant 363 : index
    %363 = memref.load %arg2[%c363] : memref<435xf32, #tpu.memory_space<smem>>
    %c364 = arith.constant 364 : index
    %364 = memref.load %arg2[%c364] : memref<435xf32, #tpu.memory_space<smem>>
    %c365 = arith.constant 365 : index
    %365 = memref.load %arg2[%c365] : memref<435xf32, #tpu.memory_space<smem>>
    %c366 = arith.constant 366 : index
    %366 = memref.load %arg2[%c366] : memref<435xf32, #tpu.memory_space<smem>>
    %c367 = arith.constant 367 : index
    %367 = memref.load %arg2[%c367] : memref<435xf32, #tpu.memory_space<smem>>
    %c368 = arith.constant 368 : index
    %368 = memref.load %arg2[%c368] : memref<435xf32, #tpu.memory_space<smem>>
    %c369 = arith.constant 369 : index
    %369 = memref.load %arg2[%c369] : memref<435xf32, #tpu.memory_space<smem>>
    %c370 = arith.constant 370 : index
    %370 = memref.load %arg2[%c370] : memref<435xf32, #tpu.memory_space<smem>>
    %c371 = arith.constant 371 : index
    %371 = memref.load %arg2[%c371] : memref<435xf32, #tpu.memory_space<smem>>
    %c372 = arith.constant 372 : index
    %372 = memref.load %arg2[%c372] : memref<435xf32, #tpu.memory_space<smem>>
    %c373 = arith.constant 373 : index
    %373 = memref.load %arg2[%c373] : memref<435xf32, #tpu.memory_space<smem>>
    %c374 = arith.constant 374 : index
    %374 = memref.load %arg2[%c374] : memref<435xf32, #tpu.memory_space<smem>>
    %c375 = arith.constant 375 : index
    %375 = memref.load %arg2[%c375] : memref<435xf32, #tpu.memory_space<smem>>
    %c376 = arith.constant 376 : index
    %376 = memref.load %arg2[%c376] : memref<435xf32, #tpu.memory_space<smem>>
    %c377 = arith.constant 377 : index
    %377 = memref.load %arg2[%c377] : memref<435xf32, #tpu.memory_space<smem>>
    %c378 = arith.constant 378 : index
    %378 = memref.load %arg2[%c378] : memref<435xf32, #tpu.memory_space<smem>>
    %c379 = arith.constant 379 : index
    %379 = memref.load %arg2[%c379] : memref<435xf32, #tpu.memory_space<smem>>
    %c380 = arith.constant 380 : index
    %380 = memref.load %arg2[%c380] : memref<435xf32, #tpu.memory_space<smem>>
    %c381 = arith.constant 381 : index
    %381 = memref.load %arg2[%c381] : memref<435xf32, #tpu.memory_space<smem>>
    %c382 = arith.constant 382 : index
    %382 = memref.load %arg2[%c382] : memref<435xf32, #tpu.memory_space<smem>>
    %c383 = arith.constant 383 : index
    %383 = memref.load %arg2[%c383] : memref<435xf32, #tpu.memory_space<smem>>
    %c384 = arith.constant 384 : index
    %384 = memref.load %arg2[%c384] : memref<435xf32, #tpu.memory_space<smem>>
    %c385 = arith.constant 385 : index
    %385 = memref.load %arg2[%c385] : memref<435xf32, #tpu.memory_space<smem>>
    %c386 = arith.constant 386 : index
    %386 = memref.load %arg2[%c386] : memref<435xf32, #tpu.memory_space<smem>>
    %c387 = arith.constant 387 : index
    %387 = memref.load %arg2[%c387] : memref<435xf32, #tpu.memory_space<smem>>
    %c388 = arith.constant 388 : index
    %388 = memref.load %arg2[%c388] : memref<435xf32, #tpu.memory_space<smem>>
    %c389 = arith.constant 389 : index
    %389 = memref.load %arg2[%c389] : memref<435xf32, #tpu.memory_space<smem>>
    %c390 = arith.constant 390 : index
    %390 = memref.load %arg2[%c390] : memref<435xf32, #tpu.memory_space<smem>>
    %c391 = arith.constant 391 : index
    %391 = memref.load %arg2[%c391] : memref<435xf32, #tpu.memory_space<smem>>
    %c392 = arith.constant 392 : index
    %392 = memref.load %arg2[%c392] : memref<435xf32, #tpu.memory_space<smem>>
    %c393 = arith.constant 393 : index
    %393 = memref.load %arg2[%c393] : memref<435xf32, #tpu.memory_space<smem>>
    %c394 = arith.constant 394 : index
    %394 = memref.load %arg2[%c394] : memref<435xf32, #tpu.memory_space<smem>>
    %c395 = arith.constant 395 : index
    %395 = memref.load %arg2[%c395] : memref<435xf32, #tpu.memory_space<smem>>
    %c396 = arith.constant 396 : index
    %396 = memref.load %arg2[%c396] : memref<435xf32, #tpu.memory_space<smem>>
    %c397 = arith.constant 397 : index
    %397 = memref.load %arg2[%c397] : memref<435xf32, #tpu.memory_space<smem>>
    %c398 = arith.constant 398 : index
    %398 = memref.load %arg2[%c398] : memref<435xf32, #tpu.memory_space<smem>>
    %c399 = arith.constant 399 : index
    %399 = memref.load %arg2[%c399] : memref<435xf32, #tpu.memory_space<smem>>
    %c400 = arith.constant 400 : index
    %400 = memref.load %arg2[%c400] : memref<435xf32, #tpu.memory_space<smem>>
    %c401 = arith.constant 401 : index
    %401 = memref.load %arg2[%c401] : memref<435xf32, #tpu.memory_space<smem>>
    %c402 = arith.constant 402 : index
    %402 = memref.load %arg2[%c402] : memref<435xf32, #tpu.memory_space<smem>>
    %c403 = arith.constant 403 : index
    %403 = memref.load %arg2[%c403] : memref<435xf32, #tpu.memory_space<smem>>
    %c404 = arith.constant 404 : index
    %404 = memref.load %arg2[%c404] : memref<435xf32, #tpu.memory_space<smem>>
    %c405 = arith.constant 405 : index
    %405 = memref.load %arg2[%c405] : memref<435xf32, #tpu.memory_space<smem>>
    %c406 = arith.constant 406 : index
    %406 = memref.load %arg2[%c406] : memref<435xf32, #tpu.memory_space<smem>>
    %c407 = arith.constant 407 : index
    %407 = memref.load %arg2[%c407] : memref<435xf32, #tpu.memory_space<smem>>
    %c408 = arith.constant 408 : index
    %408 = memref.load %arg2[%c408] : memref<435xf32, #tpu.memory_space<smem>>
    %c409 = arith.constant 409 : index
    %409 = memref.load %arg2[%c409] : memref<435xf32, #tpu.memory_space<smem>>
    %c410 = arith.constant 410 : index
    %410 = memref.load %arg2[%c410] : memref<435xf32, #tpu.memory_space<smem>>
    %c411 = arith.constant 411 : index
    %411 = memref.load %arg2[%c411] : memref<435xf32, #tpu.memory_space<smem>>
    %c412 = arith.constant 412 : index
    %412 = memref.load %arg2[%c412] : memref<435xf32, #tpu.memory_space<smem>>
    %c413 = arith.constant 413 : index
    %413 = memref.load %arg2[%c413] : memref<435xf32, #tpu.memory_space<smem>>
    %c414 = arith.constant 414 : index
    %414 = memref.load %arg2[%c414] : memref<435xf32, #tpu.memory_space<smem>>
    %c415 = arith.constant 415 : index
    %415 = memref.load %arg2[%c415] : memref<435xf32, #tpu.memory_space<smem>>
    %c416 = arith.constant 416 : index
    %416 = memref.load %arg2[%c416] : memref<435xf32, #tpu.memory_space<smem>>
    %c417 = arith.constant 417 : index
    %417 = memref.load %arg2[%c417] : memref<435xf32, #tpu.memory_space<smem>>
    %c418 = arith.constant 418 : index
    %418 = memref.load %arg2[%c418] : memref<435xf32, #tpu.memory_space<smem>>
    %c419 = arith.constant 419 : index
    %419 = memref.load %arg2[%c419] : memref<435xf32, #tpu.memory_space<smem>>
    %c420 = arith.constant 420 : index
    %420 = memref.load %arg2[%c420] : memref<435xf32, #tpu.memory_space<smem>>
    %c421 = arith.constant 421 : index
    %421 = memref.load %arg2[%c421] : memref<435xf32, #tpu.memory_space<smem>>
    %c422 = arith.constant 422 : index
    %422 = memref.load %arg2[%c422] : memref<435xf32, #tpu.memory_space<smem>>
    %c423 = arith.constant 423 : index
    %423 = memref.load %arg2[%c423] : memref<435xf32, #tpu.memory_space<smem>>
    %c424 = arith.constant 424 : index
    %424 = memref.load %arg2[%c424] : memref<435xf32, #tpu.memory_space<smem>>
    %c425 = arith.constant 425 : index
    %425 = memref.load %arg2[%c425] : memref<435xf32, #tpu.memory_space<smem>>
    %c426 = arith.constant 426 : index
    %426 = memref.load %arg2[%c426] : memref<435xf32, #tpu.memory_space<smem>>
    %c427 = arith.constant 427 : index
    %427 = memref.load %arg2[%c427] : memref<435xf32, #tpu.memory_space<smem>>
    %c428 = arith.constant 428 : index
    %428 = memref.load %arg2[%c428] : memref<435xf32, #tpu.memory_space<smem>>
    %c429 = arith.constant 429 : index
    %429 = memref.load %arg2[%c429] : memref<435xf32, #tpu.memory_space<smem>>
    %c430 = arith.constant 430 : index
    %430 = memref.load %arg2[%c430] : memref<435xf32, #tpu.memory_space<smem>>
    %c431 = arith.constant 431 : index
    %431 = memref.load %arg2[%c431] : memref<435xf32, #tpu.memory_space<smem>>
    %c432 = arith.constant 432 : index
    %432 = memref.load %arg2[%c432] : memref<435xf32, #tpu.memory_space<smem>>
    %c433 = arith.constant 433 : index
    %433 = memref.load %arg2[%c433] : memref<435xf32, #tpu.memory_space<smem>>
    %c434 = arith.constant 434 : index
    %434 = memref.load %arg2[%c434] : memref<435xf32, #tpu.memory_space<smem>>
    %c0_0 = arith.constant 0 : index
    %c0_1 = arith.constant 0 : index
    %c0_2 = arith.constant 0 : index
    %c0_3 = arith.constant 0 : index
    %435 = vector.load %arg3[%c0_0, %c0_1, %c0_2, %c0_3] : memref<1x6x2x128xf32, #tpu.memory_space<vmem>>, vector<1x1x2x128xf32>
    %436 = vector.shape_cast %435 : vector<1x1x2x128xf32> to vector<2x128xf32>
    %c0_4 = arith.constant 0 : index
    %c1_5 = arith.constant 1 : index
    %c0_6 = arith.constant 0 : index
    %c0_7 = arith.constant 0 : index
    %437 = vector.load %arg3[%c0_4, %c1_5, %c0_6, %c0_7] : memref<1x6x2x128xf32, #tpu.memory_space<vmem>>, vector<1x1x2x128xf32>
    %438 = vector.shape_cast %437 : vector<1x1x2x128xf32> to vector<2x128xf32>
    %c0_8 = arith.constant 0 : index
    %c2_9 = arith.constant 2 : index
    %c0_10 = arith.constant 0 : index
    %c0_11 = arith.constant 0 : index
    %439 = vector.load %arg3[%c0_8, %c2_9, %c0_10, %c0_11] : memref<1x6x2x128xf32, #tpu.memory_space<vmem>>, vector<1x1x2x128xf32>
    %440 = vector.shape_cast %439 : vector<1x1x2x128xf32> to vector<2x128xf32>
    %c0_12 = arith.constant 0 : index
    %c3_13 = arith.constant 3 : index
    %c0_14 = arith.constant 0 : index
    %c0_15 = arith.constant 0 : index
    %441 = vector.load %arg3[%c0_12, %c3_13, %c0_14, %c0_15] : memref<1x6x2x128xf32, #tpu.memory_space<vmem>>, vector<1x1x2x128xf32>
    %442 = vector.shape_cast %441 : vector<1x1x2x128xf32> to vector<2x128xf32>
    %c0_16 = arith.constant 0 : index
    %c4_17 = arith.constant 4 : index
    %c0_18 = arith.constant 0 : index
    %c0_19 = arith.constant 0 : index
    %443 = vector.load %arg3[%c0_16, %c4_17, %c0_18, %c0_19] : memref<1x6x2x128xf32, #tpu.memory_space<vmem>>, vector<1x1x2x128xf32>
    %444 = vector.shape_cast %443 : vector<1x1x2x128xf32> to vector<2x128xf32>
    %c0_20 = arith.constant 0 : index
    %c5_21 = arith.constant 5 : index
    %c0_22 = arith.constant 0 : index
    %c0_23 = arith.constant 0 : index
    %445 = vector.load %arg3[%c0_20, %c5_21, %c0_22, %c0_23] : memref<1x6x2x128xf32, #tpu.memory_space<vmem>>, vector<1x1x2x128xf32>
    %446 = vector.shape_cast %445 : vector<1x1x2x128xf32> to vector<2x128xf32>
    %447 = vector.broadcast %0 : f32 to vector<2x128xf32>
    %448 = arith.mulf %436, %447 : vector<2x128xf32>
    %449 = vector.broadcast %1 : f32 to vector<2x128xf32>
    %450 = arith.mulf %438, %449 : vector<2x128xf32>
    %451 = arith.addf %448, %450 : vector<2x128xf32>
    %452 = vector.broadcast %2 : f32 to vector<2x128xf32>
    %453 = arith.mulf %440, %452 : vector<2x128xf32>
    %454 = arith.addf %451, %453 : vector<2x128xf32>
    %455 = vector.broadcast %3 : f32 to vector<2x128xf32>
    %456 = arith.mulf %442, %455 : vector<2x128xf32>
    %457 = arith.addf %454, %456 : vector<2x128xf32>
    %458 = vector.broadcast %4 : f32 to vector<2x128xf32>
    %459 = arith.mulf %444, %458 : vector<2x128xf32>
    %460 = arith.addf %457, %459 : vector<2x128xf32>
    %461 = vector.broadcast %5 : f32 to vector<2x128xf32>
    %462 = arith.mulf %446, %461 : vector<2x128xf32>
    %463 = arith.addf %460, %462 : vector<2x128xf32>
    %464 = vector.broadcast %96 : f32 to vector<2x128xf32>
    %465 = arith.addf %463, %464 : vector<2x128xf32>
    %cst = arith.constant 0.000000e+00 : f32
    %466 = vector.broadcast %cst : f32 to vector<2x128xf32>
    %467 = arith.maximumf %465, %466 : vector<2x128xf32>
    %468 = vector.broadcast %6 : f32 to vector<2x128xf32>
    %469 = arith.mulf %436, %468 : vector<2x128xf32>
    %470 = vector.broadcast %7 : f32 to vector<2x128xf32>
    %471 = arith.mulf %438, %470 : vector<2x128xf32>
    %472 = arith.addf %469, %471 : vector<2x128xf32>
    %473 = vector.broadcast %8 : f32 to vector<2x128xf32>
    %474 = arith.mulf %440, %473 : vector<2x128xf32>
    %475 = arith.addf %472, %474 : vector<2x128xf32>
    %476 = vector.broadcast %9 : f32 to vector<2x128xf32>
    %477 = arith.mulf %442, %476 : vector<2x128xf32>
    %478 = arith.addf %475, %477 : vector<2x128xf32>
    %479 = vector.broadcast %10 : f32 to vector<2x128xf32>
    %480 = arith.mulf %444, %479 : vector<2x128xf32>
    %481 = arith.addf %478, %480 : vector<2x128xf32>
    %482 = vector.broadcast %11 : f32 to vector<2x128xf32>
    %483 = arith.mulf %446, %482 : vector<2x128xf32>
    %484 = arith.addf %481, %483 : vector<2x128xf32>
    %485 = vector.broadcast %97 : f32 to vector<2x128xf32>
    %486 = arith.addf %484, %485 : vector<2x128xf32>
    %cst_24 = arith.constant 0.000000e+00 : f32
    %487 = vector.broadcast %cst_24 : f32 to vector<2x128xf32>
    %488 = arith.maximumf %486, %487 : vector<2x128xf32>
    %489 = vector.broadcast %12 : f32 to vector<2x128xf32>
    %490 = arith.mulf %436, %489 : vector<2x128xf32>
    %491 = vector.broadcast %13 : f32 to vector<2x128xf32>
    %492 = arith.mulf %438, %491 : vector<2x128xf32>
    %493 = arith.addf %490, %492 : vector<2x128xf32>
    %494 = vector.broadcast %14 : f32 to vector<2x128xf32>
    %495 = arith.mulf %440, %494 : vector<2x128xf32>
    %496 = arith.addf %493, %495 : vector<2x128xf32>
    %497 = vector.broadcast %15 : f32 to vector<2x128xf32>
    %498 = arith.mulf %442, %497 : vector<2x128xf32>
    %499 = arith.addf %496, %498 : vector<2x128xf32>
    %500 = vector.broadcast %16 : f32 to vector<2x128xf32>
    %501 = arith.mulf %444, %500 : vector<2x128xf32>
    %502 = arith.addf %499, %501 : vector<2x128xf32>
    %503 = vector.broadcast %17 : f32 to vector<2x128xf32>
    %504 = arith.mulf %446, %503 : vector<2x128xf32>
    %505 = arith.addf %502, %504 : vector<2x128xf32>
    %506 = vector.broadcast %98 : f32 to vector<2x128xf32>
    %507 = arith.addf %505, %506 : vector<2x128xf32>
    %cst_25 = arith.constant 0.000000e+00 : f32
    %508 = vector.broadcast %cst_25 : f32 to vector<2x128xf32>
    %509 = arith.maximumf %507, %508 : vector<2x128xf32>
    %510 = vector.broadcast %18 : f32 to vector<2x128xf32>
    %511 = arith.mulf %436, %510 : vector<2x128xf32>
    %512 = vector.broadcast %19 : f32 to vector<2x128xf32>
    %513 = arith.mulf %438, %512 : vector<2x128xf32>
    %514 = arith.addf %511, %513 : vector<2x128xf32>
    %515 = vector.broadcast %20 : f32 to vector<2x128xf32>
    %516 = arith.mulf %440, %515 : vector<2x128xf32>
    %517 = arith.addf %514, %516 : vector<2x128xf32>
    %518 = vector.broadcast %21 : f32 to vector<2x128xf32>
    %519 = arith.mulf %442, %518 : vector<2x128xf32>
    %520 = arith.addf %517, %519 : vector<2x128xf32>
    %521 = vector.broadcast %22 : f32 to vector<2x128xf32>
    %522 = arith.mulf %444, %521 : vector<2x128xf32>
    %523 = arith.addf %520, %522 : vector<2x128xf32>
    %524 = vector.broadcast %23 : f32 to vector<2x128xf32>
    %525 = arith.mulf %446, %524 : vector<2x128xf32>
    %526 = arith.addf %523, %525 : vector<2x128xf32>
    %527 = vector.broadcast %99 : f32 to vector<2x128xf32>
    %528 = arith.addf %526, %527 : vector<2x128xf32>
    %cst_26 = arith.constant 0.000000e+00 : f32
    %529 = vector.broadcast %cst_26 : f32 to vector<2x128xf32>
    %530 = arith.maximumf %528, %529 : vector<2x128xf32>
    %531 = vector.broadcast %24 : f32 to vector<2x128xf32>
    %532 = arith.mulf %436, %531 : vector<2x128xf32>
    %533 = vector.broadcast %25 : f32 to vector<2x128xf32>
    %534 = arith.mulf %438, %533 : vector<2x128xf32>
    %535 = arith.addf %532, %534 : vector<2x128xf32>
    %536 = vector.broadcast %26 : f32 to vector<2x128xf32>
    %537 = arith.mulf %440, %536 : vector<2x128xf32>
    %538 = arith.addf %535, %537 : vector<2x128xf32>
    %539 = vector.broadcast %27 : f32 to vector<2x128xf32>
    %540 = arith.mulf %442, %539 : vector<2x128xf32>
    %541 = arith.addf %538, %540 : vector<2x128xf32>
    %542 = vector.broadcast %28 : f32 to vector<2x128xf32>
    %543 = arith.mulf %444, %542 : vector<2x128xf32>
    %544 = arith.addf %541, %543 : vector<2x128xf32>
    %545 = vector.broadcast %29 : f32 to vector<2x128xf32>
    %546 = arith.mulf %446, %545 : vector<2x128xf32>
    %547 = arith.addf %544, %546 : vector<2x128xf32>
    %548 = vector.broadcast %100 : f32 to vector<2x128xf32>
    %549 = arith.addf %547, %548 : vector<2x128xf32>
    %cst_27 = arith.constant 0.000000e+00 : f32
    %550 = vector.broadcast %cst_27 : f32 to vector<2x128xf32>
    %551 = arith.maximumf %549, %550 : vector<2x128xf32>
    %552 = vector.broadcast %30 : f32 to vector<2x128xf32>
    %553 = arith.mulf %436, %552 : vector<2x128xf32>
    %554 = vector.broadcast %31 : f32 to vector<2x128xf32>
    %555 = arith.mulf %438, %554 : vector<2x128xf32>
    %556 = arith.addf %553, %555 : vector<2x128xf32>
    %557 = vector.broadcast %32 : f32 to vector<2x128xf32>
    %558 = arith.mulf %440, %557 : vector<2x128xf32>
    %559 = arith.addf %556, %558 : vector<2x128xf32>
    %560 = vector.broadcast %33 : f32 to vector<2x128xf32>
    %561 = arith.mulf %442, %560 : vector<2x128xf32>
    %562 = arith.addf %559, %561 : vector<2x128xf32>
    %563 = vector.broadcast %34 : f32 to vector<2x128xf32>
    %564 = arith.mulf %444, %563 : vector<2x128xf32>
    %565 = arith.addf %562, %564 : vector<2x128xf32>
    %566 = vector.broadcast %35 : f32 to vector<2x128xf32>
    %567 = arith.mulf %446, %566 : vector<2x128xf32>
    %568 = arith.addf %565, %567 : vector<2x128xf32>
    %569 = vector.broadcast %101 : f32 to vector<2x128xf32>
    %570 = arith.addf %568, %569 : vector<2x128xf32>
    %cst_28 = arith.constant 0.000000e+00 : f32
    %571 = vector.broadcast %cst_28 : f32 to vector<2x128xf32>
    %572 = arith.maximumf %570, %571 : vector<2x128xf32>
    %573 = vector.broadcast %36 : f32 to vector<2x128xf32>
    %574 = arith.mulf %436, %573 : vector<2x128xf32>
    %575 = vector.broadcast %37 : f32 to vector<2x128xf32>
    %576 = arith.mulf %438, %575 : vector<2x128xf32>
    %577 = arith.addf %574, %576 : vector<2x128xf32>
    %578 = vector.broadcast %38 : f32 to vector<2x128xf32>
    %579 = arith.mulf %440, %578 : vector<2x128xf32>
    %580 = arith.addf %577, %579 : vector<2x128xf32>
    %581 = vector.broadcast %39 : f32 to vector<2x128xf32>
    %582 = arith.mulf %442, %581 : vector<2x128xf32>
    %583 = arith.addf %580, %582 : vector<2x128xf32>
    %584 = vector.broadcast %40 : f32 to vector<2x128xf32>
    %585 = arith.mulf %444, %584 : vector<2x128xf32>
    %586 = arith.addf %583, %585 : vector<2x128xf32>
    %587 = vector.broadcast %41 : f32 to vector<2x128xf32>
    %588 = arith.mulf %446, %587 : vector<2x128xf32>
    %589 = arith.addf %586, %588 : vector<2x128xf32>
    %590 = vector.broadcast %102 : f32 to vector<2x128xf32>
    %591 = arith.addf %589, %590 : vector<2x128xf32>
    %cst_29 = arith.constant 0.000000e+00 : f32
    %592 = vector.broadcast %cst_29 : f32 to vector<2x128xf32>
    %593 = arith.maximumf %591, %592 : vector<2x128xf32>
    %594 = vector.broadcast %42 : f32 to vector<2x128xf32>
    %595 = arith.mulf %436, %594 : vector<2x128xf32>
    %596 = vector.broadcast %43 : f32 to vector<2x128xf32>
    %597 = arith.mulf %438, %596 : vector<2x128xf32>
    %598 = arith.addf %595, %597 : vector<2x128xf32>
    %599 = vector.broadcast %44 : f32 to vector<2x128xf32>
    %600 = arith.mulf %440, %599 : vector<2x128xf32>
    %601 = arith.addf %598, %600 : vector<2x128xf32>
    %602 = vector.broadcast %45 : f32 to vector<2x128xf32>
    %603 = arith.mulf %442, %602 : vector<2x128xf32>
    %604 = arith.addf %601, %603 : vector<2x128xf32>
    %605 = vector.broadcast %46 : f32 to vector<2x128xf32>
    %606 = arith.mulf %444, %605 : vector<2x128xf32>
    %607 = arith.addf %604, %606 : vector<2x128xf32>
    %608 = vector.broadcast %47 : f32 to vector<2x128xf32>
    %609 = arith.mulf %446, %608 : vector<2x128xf32>
    %610 = arith.addf %607, %609 : vector<2x128xf32>
    %611 = vector.broadcast %103 : f32 to vector<2x128xf32>
    %612 = arith.addf %610, %611 : vector<2x128xf32>
    %cst_30 = arith.constant 0.000000e+00 : f32
    %613 = vector.broadcast %cst_30 : f32 to vector<2x128xf32>
    %614 = arith.maximumf %612, %613 : vector<2x128xf32>
    %615 = vector.broadcast %48 : f32 to vector<2x128xf32>
    %616 = arith.mulf %436, %615 : vector<2x128xf32>
    %617 = vector.broadcast %49 : f32 to vector<2x128xf32>
    %618 = arith.mulf %438, %617 : vector<2x128xf32>
    %619 = arith.addf %616, %618 : vector<2x128xf32>
    %620 = vector.broadcast %50 : f32 to vector<2x128xf32>
    %621 = arith.mulf %440, %620 : vector<2x128xf32>
    %622 = arith.addf %619, %621 : vector<2x128xf32>
    %623 = vector.broadcast %51 : f32 to vector<2x128xf32>
    %624 = arith.mulf %442, %623 : vector<2x128xf32>
    %625 = arith.addf %622, %624 : vector<2x128xf32>
    %626 = vector.broadcast %52 : f32 to vector<2x128xf32>
    %627 = arith.mulf %444, %626 : vector<2x128xf32>
    %628 = arith.addf %625, %627 : vector<2x128xf32>
    %629 = vector.broadcast %53 : f32 to vector<2x128xf32>
    %630 = arith.mulf %446, %629 : vector<2x128xf32>
    %631 = arith.addf %628, %630 : vector<2x128xf32>
    %632 = vector.broadcast %104 : f32 to vector<2x128xf32>
    %633 = arith.addf %631, %632 : vector<2x128xf32>
    %cst_31 = arith.constant 0.000000e+00 : f32
    %634 = vector.broadcast %cst_31 : f32 to vector<2x128xf32>
    %635 = arith.maximumf %633, %634 : vector<2x128xf32>
    %636 = vector.broadcast %54 : f32 to vector<2x128xf32>
    %637 = arith.mulf %436, %636 : vector<2x128xf32>
    %638 = vector.broadcast %55 : f32 to vector<2x128xf32>
    %639 = arith.mulf %438, %638 : vector<2x128xf32>
    %640 = arith.addf %637, %639 : vector<2x128xf32>
    %641 = vector.broadcast %56 : f32 to vector<2x128xf32>
    %642 = arith.mulf %440, %641 : vector<2x128xf32>
    %643 = arith.addf %640, %642 : vector<2x128xf32>
    %644 = vector.broadcast %57 : f32 to vector<2x128xf32>
    %645 = arith.mulf %442, %644 : vector<2x128xf32>
    %646 = arith.addf %643, %645 : vector<2x128xf32>
    %647 = vector.broadcast %58 : f32 to vector<2x128xf32>
    %648 = arith.mulf %444, %647 : vector<2x128xf32>
    %649 = arith.addf %646, %648 : vector<2x128xf32>
    %650 = vector.broadcast %59 : f32 to vector<2x128xf32>
    %651 = arith.mulf %446, %650 : vector<2x128xf32>
    %652 = arith.addf %649, %651 : vector<2x128xf32>
    %653 = vector.broadcast %105 : f32 to vector<2x128xf32>
    %654 = arith.addf %652, %653 : vector<2x128xf32>
    %cst_32 = arith.constant 0.000000e+00 : f32
    %655 = vector.broadcast %cst_32 : f32 to vector<2x128xf32>
    %656 = arith.maximumf %654, %655 : vector<2x128xf32>
    %657 = vector.broadcast %60 : f32 to vector<2x128xf32>
    %658 = arith.mulf %436, %657 : vector<2x128xf32>
    %659 = vector.broadcast %61 : f32 to vector<2x128xf32>
    %660 = arith.mulf %438, %659 : vector<2x128xf32>
    %661 = arith.addf %658, %660 : vector<2x128xf32>
    %662 = vector.broadcast %62 : f32 to vector<2x128xf32>
    %663 = arith.mulf %440, %662 : vector<2x128xf32>
    %664 = arith.addf %661, %663 : vector<2x128xf32>
    %665 = vector.broadcast %63 : f32 to vector<2x128xf32>
    %666 = arith.mulf %442, %665 : vector<2x128xf32>
    %667 = arith.addf %664, %666 : vector<2x128xf32>
    %668 = vector.broadcast %64 : f32 to vector<2x128xf32>
    %669 = arith.mulf %444, %668 : vector<2x128xf32>
    %670 = arith.addf %667, %669 : vector<2x128xf32>
    %671 = vector.broadcast %65 : f32 to vector<2x128xf32>
    %672 = arith.mulf %446, %671 : vector<2x128xf32>
    %673 = arith.addf %670, %672 : vector<2x128xf32>
    %674 = vector.broadcast %106 : f32 to vector<2x128xf32>
    %675 = arith.addf %673, %674 : vector<2x128xf32>
    %cst_33 = arith.constant 0.000000e+00 : f32
    %676 = vector.broadcast %cst_33 : f32 to vector<2x128xf32>
    %677 = arith.maximumf %675, %676 : vector<2x128xf32>
    %678 = vector.broadcast %66 : f32 to vector<2x128xf32>
    %679 = arith.mulf %436, %678 : vector<2x128xf32>
    %680 = vector.broadcast %67 : f32 to vector<2x128xf32>
    %681 = arith.mulf %438, %680 : vector<2x128xf32>
    %682 = arith.addf %679, %681 : vector<2x128xf32>
    %683 = vector.broadcast %68 : f32 to vector<2x128xf32>
    %684 = arith.mulf %440, %683 : vector<2x128xf32>
    %685 = arith.addf %682, %684 : vector<2x128xf32>
    %686 = vector.broadcast %69 : f32 to vector<2x128xf32>
    %687 = arith.mulf %442, %686 : vector<2x128xf32>
    %688 = arith.addf %685, %687 : vector<2x128xf32>
    %689 = vector.broadcast %70 : f32 to vector<2x128xf32>
    %690 = arith.mulf %444, %689 : vector<2x128xf32>
    %691 = arith.addf %688, %690 : vector<2x128xf32>
    %692 = vector.broadcast %71 : f32 to vector<2x128xf32>
    %693 = arith.mulf %446, %692 : vector<2x128xf32>
    %694 = arith.addf %691, %693 : vector<2x128xf32>
    %695 = vector.broadcast %107 : f32 to vector<2x128xf32>
    %696 = arith.addf %694, %695 : vector<2x128xf32>
    %cst_34 = arith.constant 0.000000e+00 : f32
    %697 = vector.broadcast %cst_34 : f32 to vector<2x128xf32>
    %698 = arith.maximumf %696, %697 : vector<2x128xf32>
    %699 = vector.broadcast %72 : f32 to vector<2x128xf32>
    %700 = arith.mulf %436, %699 : vector<2x128xf32>
    %701 = vector.broadcast %73 : f32 to vector<2x128xf32>
    %702 = arith.mulf %438, %701 : vector<2x128xf32>
    %703 = arith.addf %700, %702 : vector<2x128xf32>
    %704 = vector.broadcast %74 : f32 to vector<2x128xf32>
    %705 = arith.mulf %440, %704 : vector<2x128xf32>
    %706 = arith.addf %703, %705 : vector<2x128xf32>
    %707 = vector.broadcast %75 : f32 to vector<2x128xf32>
    %708 = arith.mulf %442, %707 : vector<2x128xf32>
    %709 = arith.addf %706, %708 : vector<2x128xf32>
    %710 = vector.broadcast %76 : f32 to vector<2x128xf32>
    %711 = arith.mulf %444, %710 : vector<2x128xf32>
    %712 = arith.addf %709, %711 : vector<2x128xf32>
    %713 = vector.broadcast %77 : f32 to vector<2x128xf32>
    %714 = arith.mulf %446, %713 : vector<2x128xf32>
    %715 = arith.addf %712, %714 : vector<2x128xf32>
    %716 = vector.broadcast %108 : f32 to vector<2x128xf32>
    %717 = arith.addf %715, %716 : vector<2x128xf32>
    %cst_35 = arith.constant 0.000000e+00 : f32
    %718 = vector.broadcast %cst_35 : f32 to vector<2x128xf32>
    %719 = arith.maximumf %717, %718 : vector<2x128xf32>
    %720 = vector.broadcast %78 : f32 to vector<2x128xf32>
    %721 = arith.mulf %436, %720 : vector<2x128xf32>
    %722 = vector.broadcast %79 : f32 to vector<2x128xf32>
    %723 = arith.mulf %438, %722 : vector<2x128xf32>
    %724 = arith.addf %721, %723 : vector<2x128xf32>
    %725 = vector.broadcast %80 : f32 to vector<2x128xf32>
    %726 = arith.mulf %440, %725 : vector<2x128xf32>
    %727 = arith.addf %724, %726 : vector<2x128xf32>
    %728 = vector.broadcast %81 : f32 to vector<2x128xf32>
    %729 = arith.mulf %442, %728 : vector<2x128xf32>
    %730 = arith.addf %727, %729 : vector<2x128xf32>
    %731 = vector.broadcast %82 : f32 to vector<2x128xf32>
    %732 = arith.mulf %444, %731 : vector<2x128xf32>
    %733 = arith.addf %730, %732 : vector<2x128xf32>
    %734 = vector.broadcast %83 : f32 to vector<2x128xf32>
    %735 = arith.mulf %446, %734 : vector<2x128xf32>
    %736 = arith.addf %733, %735 : vector<2x128xf32>
    %737 = vector.broadcast %109 : f32 to vector<2x128xf32>
    %738 = arith.addf %736, %737 : vector<2x128xf32>
    %cst_36 = arith.constant 0.000000e+00 : f32
    %739 = vector.broadcast %cst_36 : f32 to vector<2x128xf32>
    %740 = arith.maximumf %738, %739 : vector<2x128xf32>
    %741 = vector.broadcast %84 : f32 to vector<2x128xf32>
    %742 = arith.mulf %436, %741 : vector<2x128xf32>
    %743 = vector.broadcast %85 : f32 to vector<2x128xf32>
    %744 = arith.mulf %438, %743 : vector<2x128xf32>
    %745 = arith.addf %742, %744 : vector<2x128xf32>
    %746 = vector.broadcast %86 : f32 to vector<2x128xf32>
    %747 = arith.mulf %440, %746 : vector<2x128xf32>
    %748 = arith.addf %745, %747 : vector<2x128xf32>
    %749 = vector.broadcast %87 : f32 to vector<2x128xf32>
    %750 = arith.mulf %442, %749 : vector<2x128xf32>
    %751 = arith.addf %748, %750 : vector<2x128xf32>
    %752 = vector.broadcast %88 : f32 to vector<2x128xf32>
    %753 = arith.mulf %444, %752 : vector<2x128xf32>
    %754 = arith.addf %751, %753 : vector<2x128xf32>
    %755 = vector.broadcast %89 : f32 to vector<2x128xf32>
    %756 = arith.mulf %446, %755 : vector<2x128xf32>
    %757 = arith.addf %754, %756 : vector<2x128xf32>
    %758 = vector.broadcast %110 : f32 to vector<2x128xf32>
    %759 = arith.addf %757, %758 : vector<2x128xf32>
    %cst_37 = arith.constant 0.000000e+00 : f32
    %760 = vector.broadcast %cst_37 : f32 to vector<2x128xf32>
    %761 = arith.maximumf %759, %760 : vector<2x128xf32>
    %762 = vector.broadcast %90 : f32 to vector<2x128xf32>
    %763 = arith.mulf %436, %762 : vector<2x128xf32>
    %764 = vector.broadcast %91 : f32 to vector<2x128xf32>
    %765 = arith.mulf %438, %764 : vector<2x128xf32>
    %766 = arith.addf %763, %765 : vector<2x128xf32>
    %767 = vector.broadcast %92 : f32 to vector<2x128xf32>
    %768 = arith.mulf %440, %767 : vector<2x128xf32>
    %769 = arith.addf %766, %768 : vector<2x128xf32>
    %770 = vector.broadcast %93 : f32 to vector<2x128xf32>
    %771 = arith.mulf %442, %770 : vector<2x128xf32>
    %772 = arith.addf %769, %771 : vector<2x128xf32>
    %773 = vector.broadcast %94 : f32 to vector<2x128xf32>
    %774 = arith.mulf %444, %773 : vector<2x128xf32>
    %775 = arith.addf %772, %774 : vector<2x128xf32>
    %776 = vector.broadcast %95 : f32 to vector<2x128xf32>
    %777 = arith.mulf %446, %776 : vector<2x128xf32>
    %778 = arith.addf %775, %777 : vector<2x128xf32>
    %779 = vector.broadcast %111 : f32 to vector<2x128xf32>
    %780 = arith.addf %778, %779 : vector<2x128xf32>
    %cst_38 = arith.constant 0.000000e+00 : f32
    %781 = vector.broadcast %cst_38 : f32 to vector<2x128xf32>
    %782 = arith.maximumf %780, %781 : vector<2x128xf32>
    %783 = vector.broadcast %112 : f32 to vector<2x128xf32>
    %784 = arith.mulf %467, %783 : vector<2x128xf32>
    %785 = vector.broadcast %113 : f32 to vector<2x128xf32>
    %786 = arith.mulf %488, %785 : vector<2x128xf32>
    %787 = arith.addf %784, %786 : vector<2x128xf32>
    %788 = vector.broadcast %114 : f32 to vector<2x128xf32>
    %789 = arith.mulf %509, %788 : vector<2x128xf32>
    %790 = arith.addf %787, %789 : vector<2x128xf32>
    %791 = vector.broadcast %115 : f32 to vector<2x128xf32>
    %792 = arith.mulf %530, %791 : vector<2x128xf32>
    %793 = arith.addf %790, %792 : vector<2x128xf32>
    %794 = vector.broadcast %116 : f32 to vector<2x128xf32>
    %795 = arith.mulf %551, %794 : vector<2x128xf32>
    %796 = arith.addf %793, %795 : vector<2x128xf32>
    %797 = vector.broadcast %117 : f32 to vector<2x128xf32>
    %798 = arith.mulf %572, %797 : vector<2x128xf32>
    %799 = arith.addf %796, %798 : vector<2x128xf32>
    %800 = vector.broadcast %118 : f32 to vector<2x128xf32>
    %801 = arith.mulf %593, %800 : vector<2x128xf32>
    %802 = arith.addf %799, %801 : vector<2x128xf32>
    %803 = vector.broadcast %119 : f32 to vector<2x128xf32>
    %804 = arith.mulf %614, %803 : vector<2x128xf32>
    %805 = arith.addf %802, %804 : vector<2x128xf32>
    %806 = vector.broadcast %120 : f32 to vector<2x128xf32>
    %807 = arith.mulf %635, %806 : vector<2x128xf32>
    %808 = arith.addf %805, %807 : vector<2x128xf32>
    %809 = vector.broadcast %121 : f32 to vector<2x128xf32>
    %810 = arith.mulf %656, %809 : vector<2x128xf32>
    %811 = arith.addf %808, %810 : vector<2x128xf32>
    %812 = vector.broadcast %122 : f32 to vector<2x128xf32>
    %813 = arith.mulf %677, %812 : vector<2x128xf32>
    %814 = arith.addf %811, %813 : vector<2x128xf32>
    %815 = vector.broadcast %123 : f32 to vector<2x128xf32>
    %816 = arith.mulf %698, %815 : vector<2x128xf32>
    %817 = arith.addf %814, %816 : vector<2x128xf32>
    %818 = vector.broadcast %124 : f32 to vector<2x128xf32>
    %819 = arith.mulf %719, %818 : vector<2x128xf32>
    %820 = arith.addf %817, %819 : vector<2x128xf32>
    %821 = vector.broadcast %125 : f32 to vector<2x128xf32>
    %822 = arith.mulf %740, %821 : vector<2x128xf32>
    %823 = arith.addf %820, %822 : vector<2x128xf32>
    %824 = vector.broadcast %126 : f32 to vector<2x128xf32>
    %825 = arith.mulf %761, %824 : vector<2x128xf32>
    %826 = arith.addf %823, %825 : vector<2x128xf32>
    %827 = vector.broadcast %127 : f32 to vector<2x128xf32>
    %828 = arith.mulf %782, %827 : vector<2x128xf32>
    %829 = arith.addf %826, %828 : vector<2x128xf32>
    %830 = vector.broadcast %368 : f32 to vector<2x128xf32>
    %831 = arith.addf %829, %830 : vector<2x128xf32>
    %cst_39 = arith.constant 0.000000e+00 : f32
    %832 = vector.broadcast %cst_39 : f32 to vector<2x128xf32>
    %833 = arith.maximumf %831, %832 : vector<2x128xf32>
    %834 = vector.broadcast %128 : f32 to vector<2x128xf32>
    %835 = arith.mulf %467, %834 : vector<2x128xf32>
    %836 = vector.broadcast %129 : f32 to vector<2x128xf32>
    %837 = arith.mulf %488, %836 : vector<2x128xf32>
    %838 = arith.addf %835, %837 : vector<2x128xf32>
    %839 = vector.broadcast %130 : f32 to vector<2x128xf32>
    %840 = arith.mulf %509, %839 : vector<2x128xf32>
    %841 = arith.addf %838, %840 : vector<2x128xf32>
    %842 = vector.broadcast %131 : f32 to vector<2x128xf32>
    %843 = arith.mulf %530, %842 : vector<2x128xf32>
    %844 = arith.addf %841, %843 : vector<2x128xf32>
    %845 = vector.broadcast %132 : f32 to vector<2x128xf32>
    %846 = arith.mulf %551, %845 : vector<2x128xf32>
    %847 = arith.addf %844, %846 : vector<2x128xf32>
    %848 = vector.broadcast %133 : f32 to vector<2x128xf32>
    %849 = arith.mulf %572, %848 : vector<2x128xf32>
    %850 = arith.addf %847, %849 : vector<2x128xf32>
    %851 = vector.broadcast %134 : f32 to vector<2x128xf32>
    %852 = arith.mulf %593, %851 : vector<2x128xf32>
    %853 = arith.addf %850, %852 : vector<2x128xf32>
    %854 = vector.broadcast %135 : f32 to vector<2x128xf32>
    %855 = arith.mulf %614, %854 : vector<2x128xf32>
    %856 = arith.addf %853, %855 : vector<2x128xf32>
    %857 = vector.broadcast %136 : f32 to vector<2x128xf32>
    %858 = arith.mulf %635, %857 : vector<2x128xf32>
    %859 = arith.addf %856, %858 : vector<2x128xf32>
    %860 = vector.broadcast %137 : f32 to vector<2x128xf32>
    %861 = arith.mulf %656, %860 : vector<2x128xf32>
    %862 = arith.addf %859, %861 : vector<2x128xf32>
    %863 = vector.broadcast %138 : f32 to vector<2x128xf32>
    %864 = arith.mulf %677, %863 : vector<2x128xf32>
    %865 = arith.addf %862, %864 : vector<2x128xf32>
    %866 = vector.broadcast %139 : f32 to vector<2x128xf32>
    %867 = arith.mulf %698, %866 : vector<2x128xf32>
    %868 = arith.addf %865, %867 : vector<2x128xf32>
    %869 = vector.broadcast %140 : f32 to vector<2x128xf32>
    %870 = arith.mulf %719, %869 : vector<2x128xf32>
    %871 = arith.addf %868, %870 : vector<2x128xf32>
    %872 = vector.broadcast %141 : f32 to vector<2x128xf32>
    %873 = arith.mulf %740, %872 : vector<2x128xf32>
    %874 = arith.addf %871, %873 : vector<2x128xf32>
    %875 = vector.broadcast %142 : f32 to vector<2x128xf32>
    %876 = arith.mulf %761, %875 : vector<2x128xf32>
    %877 = arith.addf %874, %876 : vector<2x128xf32>
    %878 = vector.broadcast %143 : f32 to vector<2x128xf32>
    %879 = arith.mulf %782, %878 : vector<2x128xf32>
    %880 = arith.addf %877, %879 : vector<2x128xf32>
    %881 = vector.broadcast %369 : f32 to vector<2x128xf32>
    %882 = arith.addf %880, %881 : vector<2x128xf32>
    %cst_40 = arith.constant 0.000000e+00 : f32
    %883 = vector.broadcast %cst_40 : f32 to vector<2x128xf32>
    %884 = arith.maximumf %882, %883 : vector<2x128xf32>
    %885 = vector.broadcast %144 : f32 to vector<2x128xf32>
    %886 = arith.mulf %467, %885 : vector<2x128xf32>
    %887 = vector.broadcast %145 : f32 to vector<2x128xf32>
    %888 = arith.mulf %488, %887 : vector<2x128xf32>
    %889 = arith.addf %886, %888 : vector<2x128xf32>
    %890 = vector.broadcast %146 : f32 to vector<2x128xf32>
    %891 = arith.mulf %509, %890 : vector<2x128xf32>
    %892 = arith.addf %889, %891 : vector<2x128xf32>
    %893 = vector.broadcast %147 : f32 to vector<2x128xf32>
    %894 = arith.mulf %530, %893 : vector<2x128xf32>
    %895 = arith.addf %892, %894 : vector<2x128xf32>
    %896 = vector.broadcast %148 : f32 to vector<2x128xf32>
    %897 = arith.mulf %551, %896 : vector<2x128xf32>
    %898 = arith.addf %895, %897 : vector<2x128xf32>
    %899 = vector.broadcast %149 : f32 to vector<2x128xf32>
    %900 = arith.mulf %572, %899 : vector<2x128xf32>
    %901 = arith.addf %898, %900 : vector<2x128xf32>
    %902 = vector.broadcast %150 : f32 to vector<2x128xf32>
    %903 = arith.mulf %593, %902 : vector<2x128xf32>
    %904 = arith.addf %901, %903 : vector<2x128xf32>
    %905 = vector.broadcast %151 : f32 to vector<2x128xf32>
    %906 = arith.mulf %614, %905 : vector<2x128xf32>
    %907 = arith.addf %904, %906 : vector<2x128xf32>
    %908 = vector.broadcast %152 : f32 to vector<2x128xf32>
    %909 = arith.mulf %635, %908 : vector<2x128xf32>
    %910 = arith.addf %907, %909 : vector<2x128xf32>
    %911 = vector.broadcast %153 : f32 to vector<2x128xf32>
    %912 = arith.mulf %656, %911 : vector<2x128xf32>
    %913 = arith.addf %910, %912 : vector<2x128xf32>
    %914 = vector.broadcast %154 : f32 to vector<2x128xf32>
    %915 = arith.mulf %677, %914 : vector<2x128xf32>
    %916 = arith.addf %913, %915 : vector<2x128xf32>
    %917 = vector.broadcast %155 : f32 to vector<2x128xf32>
    %918 = arith.mulf %698, %917 : vector<2x128xf32>
    %919 = arith.addf %916, %918 : vector<2x128xf32>
    %920 = vector.broadcast %156 : f32 to vector<2x128xf32>
    %921 = arith.mulf %719, %920 : vector<2x128xf32>
    %922 = arith.addf %919, %921 : vector<2x128xf32>
    %923 = vector.broadcast %157 : f32 to vector<2x128xf32>
    %924 = arith.mulf %740, %923 : vector<2x128xf32>
    %925 = arith.addf %922, %924 : vector<2x128xf32>
    %926 = vector.broadcast %158 : f32 to vector<2x128xf32>
    %927 = arith.mulf %761, %926 : vector<2x128xf32>
    %928 = arith.addf %925, %927 : vector<2x128xf32>
    %929 = vector.broadcast %159 : f32 to vector<2x128xf32>
    %930 = arith.mulf %782, %929 : vector<2x128xf32>
    %931 = arith.addf %928, %930 : vector<2x128xf32>
    %932 = vector.broadcast %370 : f32 to vector<2x128xf32>
    %933 = arith.addf %931, %932 : vector<2x128xf32>
    %cst_41 = arith.constant 0.000000e+00 : f32
    %934 = vector.broadcast %cst_41 : f32 to vector<2x128xf32>
    %935 = arith.maximumf %933, %934 : vector<2x128xf32>
    %936 = vector.broadcast %160 : f32 to vector<2x128xf32>
    %937 = arith.mulf %467, %936 : vector<2x128xf32>
    %938 = vector.broadcast %161 : f32 to vector<2x128xf32>
    %939 = arith.mulf %488, %938 : vector<2x128xf32>
    %940 = arith.addf %937, %939 : vector<2x128xf32>
    %941 = vector.broadcast %162 : f32 to vector<2x128xf32>
    %942 = arith.mulf %509, %941 : vector<2x128xf32>
    %943 = arith.addf %940, %942 : vector<2x128xf32>
    %944 = vector.broadcast %163 : f32 to vector<2x128xf32>
    %945 = arith.mulf %530, %944 : vector<2x128xf32>
    %946 = arith.addf %943, %945 : vector<2x128xf32>
    %947 = vector.broadcast %164 : f32 to vector<2x128xf32>
    %948 = arith.mulf %551, %947 : vector<2x128xf32>
    %949 = arith.addf %946, %948 : vector<2x128xf32>
    %950 = vector.broadcast %165 : f32 to vector<2x128xf32>
    %951 = arith.mulf %572, %950 : vector<2x128xf32>
    %952 = arith.addf %949, %951 : vector<2x128xf32>
    %953 = vector.broadcast %166 : f32 to vector<2x128xf32>
    %954 = arith.mulf %593, %953 : vector<2x128xf32>
    %955 = arith.addf %952, %954 : vector<2x128xf32>
    %956 = vector.broadcast %167 : f32 to vector<2x128xf32>
    %957 = arith.mulf %614, %956 : vector<2x128xf32>
    %958 = arith.addf %955, %957 : vector<2x128xf32>
    %959 = vector.broadcast %168 : f32 to vector<2x128xf32>
    %960 = arith.mulf %635, %959 : vector<2x128xf32>
    %961 = arith.addf %958, %960 : vector<2x128xf32>
    %962 = vector.broadcast %169 : f32 to vector<2x128xf32>
    %963 = arith.mulf %656, %962 : vector<2x128xf32>
    %964 = arith.addf %961, %963 : vector<2x128xf32>
    %965 = vector.broadcast %170 : f32 to vector<2x128xf32>
    %966 = arith.mulf %677, %965 : vector<2x128xf32>
    %967 = arith.addf %964, %966 : vector<2x128xf32>
    %968 = vector.broadcast %171 : f32 to vector<2x128xf32>
    %969 = arith.mulf %698, %968 : vector<2x128xf32>
    %970 = arith.addf %967, %969 : vector<2x128xf32>
    %971 = vector.broadcast %172 : f32 to vector<2x128xf32>
    %972 = arith.mulf %719, %971 : vector<2x128xf32>
    %973 = arith.addf %970, %972 : vector<2x128xf32>
    %974 = vector.broadcast %173 : f32 to vector<2x128xf32>
    %975 = arith.mulf %740, %974 : vector<2x128xf32>
    %976 = arith.addf %973, %975 : vector<2x128xf32>
    %977 = vector.broadcast %174 : f32 to vector<2x128xf32>
    %978 = arith.mulf %761, %977 : vector<2x128xf32>
    %979 = arith.addf %976, %978 : vector<2x128xf32>
    %980 = vector.broadcast %175 : f32 to vector<2x128xf32>
    %981 = arith.mulf %782, %980 : vector<2x128xf32>
    %982 = arith.addf %979, %981 : vector<2x128xf32>
    %983 = vector.broadcast %371 : f32 to vector<2x128xf32>
    %984 = arith.addf %982, %983 : vector<2x128xf32>
    %cst_42 = arith.constant 0.000000e+00 : f32
    %985 = vector.broadcast %cst_42 : f32 to vector<2x128xf32>
    %986 = arith.maximumf %984, %985 : vector<2x128xf32>
    %987 = vector.broadcast %176 : f32 to vector<2x128xf32>
    %988 = arith.mulf %467, %987 : vector<2x128xf32>
    %989 = vector.broadcast %177 : f32 to vector<2x128xf32>
    %990 = arith.mulf %488, %989 : vector<2x128xf32>
    %991 = arith.addf %988, %990 : vector<2x128xf32>
    %992 = vector.broadcast %178 : f32 to vector<2x128xf32>
    %993 = arith.mulf %509, %992 : vector<2x128xf32>
    %994 = arith.addf %991, %993 : vector<2x128xf32>
    %995 = vector.broadcast %179 : f32 to vector<2x128xf32>
    %996 = arith.mulf %530, %995 : vector<2x128xf32>
    %997 = arith.addf %994, %996 : vector<2x128xf32>
    %998 = vector.broadcast %180 : f32 to vector<2x128xf32>
    %999 = arith.mulf %551, %998 : vector<2x128xf32>
    %1000 = arith.addf %997, %999 : vector<2x128xf32>
    %1001 = vector.broadcast %181 : f32 to vector<2x128xf32>
    %1002 = arith.mulf %572, %1001 : vector<2x128xf32>
    %1003 = arith.addf %1000, %1002 : vector<2x128xf32>
    %1004 = vector.broadcast %182 : f32 to vector<2x128xf32>
    %1005 = arith.mulf %593, %1004 : vector<2x128xf32>
    %1006 = arith.addf %1003, %1005 : vector<2x128xf32>
    %1007 = vector.broadcast %183 : f32 to vector<2x128xf32>
    %1008 = arith.mulf %614, %1007 : vector<2x128xf32>
    %1009 = arith.addf %1006, %1008 : vector<2x128xf32>
    %1010 = vector.broadcast %184 : f32 to vector<2x128xf32>
    %1011 = arith.mulf %635, %1010 : vector<2x128xf32>
    %1012 = arith.addf %1009, %1011 : vector<2x128xf32>
    %1013 = vector.broadcast %185 : f32 to vector<2x128xf32>
    %1014 = arith.mulf %656, %1013 : vector<2x128xf32>
    %1015 = arith.addf %1012, %1014 : vector<2x128xf32>
    %1016 = vector.broadcast %186 : f32 to vector<2x128xf32>
    %1017 = arith.mulf %677, %1016 : vector<2x128xf32>
    %1018 = arith.addf %1015, %1017 : vector<2x128xf32>
    %1019 = vector.broadcast %187 : f32 to vector<2x128xf32>
    %1020 = arith.mulf %698, %1019 : vector<2x128xf32>
    %1021 = arith.addf %1018, %1020 : vector<2x128xf32>
    %1022 = vector.broadcast %188 : f32 to vector<2x128xf32>
    %1023 = arith.mulf %719, %1022 : vector<2x128xf32>
    %1024 = arith.addf %1021, %1023 : vector<2x128xf32>
    %1025 = vector.broadcast %189 : f32 to vector<2x128xf32>
    %1026 = arith.mulf %740, %1025 : vector<2x128xf32>
    %1027 = arith.addf %1024, %1026 : vector<2x128xf32>
    %1028 = vector.broadcast %190 : f32 to vector<2x128xf32>
    %1029 = arith.mulf %761, %1028 : vector<2x128xf32>
    %1030 = arith.addf %1027, %1029 : vector<2x128xf32>
    %1031 = vector.broadcast %191 : f32 to vector<2x128xf32>
    %1032 = arith.mulf %782, %1031 : vector<2x128xf32>
    %1033 = arith.addf %1030, %1032 : vector<2x128xf32>
    %1034 = vector.broadcast %372 : f32 to vector<2x128xf32>
    %1035 = arith.addf %1033, %1034 : vector<2x128xf32>
    %cst_43 = arith.constant 0.000000e+00 : f32
    %1036 = vector.broadcast %cst_43 : f32 to vector<2x128xf32>
    %1037 = arith.maximumf %1035, %1036 : vector<2x128xf32>
    %1038 = vector.broadcast %192 : f32 to vector<2x128xf32>
    %1039 = arith.mulf %467, %1038 : vector<2x128xf32>
    %1040 = vector.broadcast %193 : f32 to vector<2x128xf32>
    %1041 = arith.mulf %488, %1040 : vector<2x128xf32>
    %1042 = arith.addf %1039, %1041 : vector<2x128xf32>
    %1043 = vector.broadcast %194 : f32 to vector<2x128xf32>
    %1044 = arith.mulf %509, %1043 : vector<2x128xf32>
    %1045 = arith.addf %1042, %1044 : vector<2x128xf32>
    %1046 = vector.broadcast %195 : f32 to vector<2x128xf32>
    %1047 = arith.mulf %530, %1046 : vector<2x128xf32>
    %1048 = arith.addf %1045, %1047 : vector<2x128xf32>
    %1049 = vector.broadcast %196 : f32 to vector<2x128xf32>
    %1050 = arith.mulf %551, %1049 : vector<2x128xf32>
    %1051 = arith.addf %1048, %1050 : vector<2x128xf32>
    %1052 = vector.broadcast %197 : f32 to vector<2x128xf32>
    %1053 = arith.mulf %572, %1052 : vector<2x128xf32>
    %1054 = arith.addf %1051, %1053 : vector<2x128xf32>
    %1055 = vector.broadcast %198 : f32 to vector<2x128xf32>
    %1056 = arith.mulf %593, %1055 : vector<2x128xf32>
    %1057 = arith.addf %1054, %1056 : vector<2x128xf32>
    %1058 = vector.broadcast %199 : f32 to vector<2x128xf32>
    %1059 = arith.mulf %614, %1058 : vector<2x128xf32>
    %1060 = arith.addf %1057, %1059 : vector<2x128xf32>
    %1061 = vector.broadcast %200 : f32 to vector<2x128xf32>
    %1062 = arith.mulf %635, %1061 : vector<2x128xf32>
    %1063 = arith.addf %1060, %1062 : vector<2x128xf32>
    %1064 = vector.broadcast %201 : f32 to vector<2x128xf32>
    %1065 = arith.mulf %656, %1064 : vector<2x128xf32>
    %1066 = arith.addf %1063, %1065 : vector<2x128xf32>
    %1067 = vector.broadcast %202 : f32 to vector<2x128xf32>
    %1068 = arith.mulf %677, %1067 : vector<2x128xf32>
    %1069 = arith.addf %1066, %1068 : vector<2x128xf32>
    %1070 = vector.broadcast %203 : f32 to vector<2x128xf32>
    %1071 = arith.mulf %698, %1070 : vector<2x128xf32>
    %1072 = arith.addf %1069, %1071 : vector<2x128xf32>
    %1073 = vector.broadcast %204 : f32 to vector<2x128xf32>
    %1074 = arith.mulf %719, %1073 : vector<2x128xf32>
    %1075 = arith.addf %1072, %1074 : vector<2x128xf32>
    %1076 = vector.broadcast %205 : f32 to vector<2x128xf32>
    %1077 = arith.mulf %740, %1076 : vector<2x128xf32>
    %1078 = arith.addf %1075, %1077 : vector<2x128xf32>
    %1079 = vector.broadcast %206 : f32 to vector<2x128xf32>
    %1080 = arith.mulf %761, %1079 : vector<2x128xf32>
    %1081 = arith.addf %1078, %1080 : vector<2x128xf32>
    %1082 = vector.broadcast %207 : f32 to vector<2x128xf32>
    %1083 = arith.mulf %782, %1082 : vector<2x128xf32>
    %1084 = arith.addf %1081, %1083 : vector<2x128xf32>
    %1085 = vector.broadcast %373 : f32 to vector<2x128xf32>
    %1086 = arith.addf %1084, %1085 : vector<2x128xf32>
    %cst_44 = arith.constant 0.000000e+00 : f32
    %1087 = vector.broadcast %cst_44 : f32 to vector<2x128xf32>
    %1088 = arith.maximumf %1086, %1087 : vector<2x128xf32>
    %1089 = vector.broadcast %208 : f32 to vector<2x128xf32>
    %1090 = arith.mulf %467, %1089 : vector<2x128xf32>
    %1091 = vector.broadcast %209 : f32 to vector<2x128xf32>
    %1092 = arith.mulf %488, %1091 : vector<2x128xf32>
    %1093 = arith.addf %1090, %1092 : vector<2x128xf32>
    %1094 = vector.broadcast %210 : f32 to vector<2x128xf32>
    %1095 = arith.mulf %509, %1094 : vector<2x128xf32>
    %1096 = arith.addf %1093, %1095 : vector<2x128xf32>
    %1097 = vector.broadcast %211 : f32 to vector<2x128xf32>
    %1098 = arith.mulf %530, %1097 : vector<2x128xf32>
    %1099 = arith.addf %1096, %1098 : vector<2x128xf32>
    %1100 = vector.broadcast %212 : f32 to vector<2x128xf32>
    %1101 = arith.mulf %551, %1100 : vector<2x128xf32>
    %1102 = arith.addf %1099, %1101 : vector<2x128xf32>
    %1103 = vector.broadcast %213 : f32 to vector<2x128xf32>
    %1104 = arith.mulf %572, %1103 : vector<2x128xf32>
    %1105 = arith.addf %1102, %1104 : vector<2x128xf32>
    %1106 = vector.broadcast %214 : f32 to vector<2x128xf32>
    %1107 = arith.mulf %593, %1106 : vector<2x128xf32>
    %1108 = arith.addf %1105, %1107 : vector<2x128xf32>
    %1109 = vector.broadcast %215 : f32 to vector<2x128xf32>
    %1110 = arith.mulf %614, %1109 : vector<2x128xf32>
    %1111 = arith.addf %1108, %1110 : vector<2x128xf32>
    %1112 = vector.broadcast %216 : f32 to vector<2x128xf32>
    %1113 = arith.mulf %635, %1112 : vector<2x128xf32>
    %1114 = arith.addf %1111, %1113 : vector<2x128xf32>
    %1115 = vector.broadcast %217 : f32 to vector<2x128xf32>
    %1116 = arith.mulf %656, %1115 : vector<2x128xf32>
    %1117 = arith.addf %1114, %1116 : vector<2x128xf32>
    %1118 = vector.broadcast %218 : f32 to vector<2x128xf32>
    %1119 = arith.mulf %677, %1118 : vector<2x128xf32>
    %1120 = arith.addf %1117, %1119 : vector<2x128xf32>
    %1121 = vector.broadcast %219 : f32 to vector<2x128xf32>
    %1122 = arith.mulf %698, %1121 : vector<2x128xf32>
    %1123 = arith.addf %1120, %1122 : vector<2x128xf32>
    %1124 = vector.broadcast %220 : f32 to vector<2x128xf32>
    %1125 = arith.mulf %719, %1124 : vector<2x128xf32>
    %1126 = arith.addf %1123, %1125 : vector<2x128xf32>
    %1127 = vector.broadcast %221 : f32 to vector<2x128xf32>
    %1128 = arith.mulf %740, %1127 : vector<2x128xf32>
    %1129 = arith.addf %1126, %1128 : vector<2x128xf32>
    %1130 = vector.broadcast %222 : f32 to vector<2x128xf32>
    %1131 = arith.mulf %761, %1130 : vector<2x128xf32>
    %1132 = arith.addf %1129, %1131 : vector<2x128xf32>
    %1133 = vector.broadcast %223 : f32 to vector<2x128xf32>
    %1134 = arith.mulf %782, %1133 : vector<2x128xf32>
    %1135 = arith.addf %1132, %1134 : vector<2x128xf32>
    %1136 = vector.broadcast %374 : f32 to vector<2x128xf32>
    %1137 = arith.addf %1135, %1136 : vector<2x128xf32>
    %cst_45 = arith.constant 0.000000e+00 : f32
    %1138 = vector.broadcast %cst_45 : f32 to vector<2x128xf32>
    %1139 = arith.maximumf %1137, %1138 : vector<2x128xf32>
    %1140 = vector.broadcast %224 : f32 to vector<2x128xf32>
    %1141 = arith.mulf %467, %1140 : vector<2x128xf32>
    %1142 = vector.broadcast %225 : f32 to vector<2x128xf32>
    %1143 = arith.mulf %488, %1142 : vector<2x128xf32>
    %1144 = arith.addf %1141, %1143 : vector<2x128xf32>
    %1145 = vector.broadcast %226 : f32 to vector<2x128xf32>
    %1146 = arith.mulf %509, %1145 : vector<2x128xf32>
    %1147 = arith.addf %1144, %1146 : vector<2x128xf32>
    %1148 = vector.broadcast %227 : f32 to vector<2x128xf32>
    %1149 = arith.mulf %530, %1148 : vector<2x128xf32>
    %1150 = arith.addf %1147, %1149 : vector<2x128xf32>
    %1151 = vector.broadcast %228 : f32 to vector<2x128xf32>
    %1152 = arith.mulf %551, %1151 : vector<2x128xf32>
    %1153 = arith.addf %1150, %1152 : vector<2x128xf32>
    %1154 = vector.broadcast %229 : f32 to vector<2x128xf32>
    %1155 = arith.mulf %572, %1154 : vector<2x128xf32>
    %1156 = arith.addf %1153, %1155 : vector<2x128xf32>
    %1157 = vector.broadcast %230 : f32 to vector<2x128xf32>
    %1158 = arith.mulf %593, %1157 : vector<2x128xf32>
    %1159 = arith.addf %1156, %1158 : vector<2x128xf32>
    %1160 = vector.broadcast %231 : f32 to vector<2x128xf32>
    %1161 = arith.mulf %614, %1160 : vector<2x128xf32>
    %1162 = arith.addf %1159, %1161 : vector<2x128xf32>
    %1163 = vector.broadcast %232 : f32 to vector<2x128xf32>
    %1164 = arith.mulf %635, %1163 : vector<2x128xf32>
    %1165 = arith.addf %1162, %1164 : vector<2x128xf32>
    %1166 = vector.broadcast %233 : f32 to vector<2x128xf32>
    %1167 = arith.mulf %656, %1166 : vector<2x128xf32>
    %1168 = arith.addf %1165, %1167 : vector<2x128xf32>
    %1169 = vector.broadcast %234 : f32 to vector<2x128xf32>
    %1170 = arith.mulf %677, %1169 : vector<2x128xf32>
    %1171 = arith.addf %1168, %1170 : vector<2x128xf32>
    %1172 = vector.broadcast %235 : f32 to vector<2x128xf32>
    %1173 = arith.mulf %698, %1172 : vector<2x128xf32>
    %1174 = arith.addf %1171, %1173 : vector<2x128xf32>
    %1175 = vector.broadcast %236 : f32 to vector<2x128xf32>
    %1176 = arith.mulf %719, %1175 : vector<2x128xf32>
    %1177 = arith.addf %1174, %1176 : vector<2x128xf32>
    %1178 = vector.broadcast %237 : f32 to vector<2x128xf32>
    %1179 = arith.mulf %740, %1178 : vector<2x128xf32>
    %1180 = arith.addf %1177, %1179 : vector<2x128xf32>
    %1181 = vector.broadcast %238 : f32 to vector<2x128xf32>
    %1182 = arith.mulf %761, %1181 : vector<2x128xf32>
    %1183 = arith.addf %1180, %1182 : vector<2x128xf32>
    %1184 = vector.broadcast %239 : f32 to vector<2x128xf32>
    %1185 = arith.mulf %782, %1184 : vector<2x128xf32>
    %1186 = arith.addf %1183, %1185 : vector<2x128xf32>
    %1187 = vector.broadcast %375 : f32 to vector<2x128xf32>
    %1188 = arith.addf %1186, %1187 : vector<2x128xf32>
    %cst_46 = arith.constant 0.000000e+00 : f32
    %1189 = vector.broadcast %cst_46 : f32 to vector<2x128xf32>
    %1190 = arith.maximumf %1188, %1189 : vector<2x128xf32>
    %1191 = vector.broadcast %240 : f32 to vector<2x128xf32>
    %1192 = arith.mulf %467, %1191 : vector<2x128xf32>
    %1193 = vector.broadcast %241 : f32 to vector<2x128xf32>
    %1194 = arith.mulf %488, %1193 : vector<2x128xf32>
    %1195 = arith.addf %1192, %1194 : vector<2x128xf32>
    %1196 = vector.broadcast %242 : f32 to vector<2x128xf32>
    %1197 = arith.mulf %509, %1196 : vector<2x128xf32>
    %1198 = arith.addf %1195, %1197 : vector<2x128xf32>
    %1199 = vector.broadcast %243 : f32 to vector<2x128xf32>
    %1200 = arith.mulf %530, %1199 : vector<2x128xf32>
    %1201 = arith.addf %1198, %1200 : vector<2x128xf32>
    %1202 = vector.broadcast %244 : f32 to vector<2x128xf32>
    %1203 = arith.mulf %551, %1202 : vector<2x128xf32>
    %1204 = arith.addf %1201, %1203 : vector<2x128xf32>
    %1205 = vector.broadcast %245 : f32 to vector<2x128xf32>
    %1206 = arith.mulf %572, %1205 : vector<2x128xf32>
    %1207 = arith.addf %1204, %1206 : vector<2x128xf32>
    %1208 = vector.broadcast %246 : f32 to vector<2x128xf32>
    %1209 = arith.mulf %593, %1208 : vector<2x128xf32>
    %1210 = arith.addf %1207, %1209 : vector<2x128xf32>
    %1211 = vector.broadcast %247 : f32 to vector<2x128xf32>
    %1212 = arith.mulf %614, %1211 : vector<2x128xf32>
    %1213 = arith.addf %1210, %1212 : vector<2x128xf32>
    %1214 = vector.broadcast %248 : f32 to vector<2x128xf32>
    %1215 = arith.mulf %635, %1214 : vector<2x128xf32>
    %1216 = arith.addf %1213, %1215 : vector<2x128xf32>
    %1217 = vector.broadcast %249 : f32 to vector<2x128xf32>
    %1218 = arith.mulf %656, %1217 : vector<2x128xf32>
    %1219 = arith.addf %1216, %1218 : vector<2x128xf32>
    %1220 = vector.broadcast %250 : f32 to vector<2x128xf32>
    %1221 = arith.mulf %677, %1220 : vector<2x128xf32>
    %1222 = arith.addf %1219, %1221 : vector<2x128xf32>
    %1223 = vector.broadcast %251 : f32 to vector<2x128xf32>
    %1224 = arith.mulf %698, %1223 : vector<2x128xf32>
    %1225 = arith.addf %1222, %1224 : vector<2x128xf32>
    %1226 = vector.broadcast %252 : f32 to vector<2x128xf32>
    %1227 = arith.mulf %719, %1226 : vector<2x128xf32>
    %1228 = arith.addf %1225, %1227 : vector<2x128xf32>
    %1229 = vector.broadcast %253 : f32 to vector<2x128xf32>
    %1230 = arith.mulf %740, %1229 : vector<2x128xf32>
    %1231 = arith.addf %1228, %1230 : vector<2x128xf32>
    %1232 = vector.broadcast %254 : f32 to vector<2x128xf32>
    %1233 = arith.mulf %761, %1232 : vector<2x128xf32>
    %1234 = arith.addf %1231, %1233 : vector<2x128xf32>
    %1235 = vector.broadcast %255 : f32 to vector<2x128xf32>
    %1236 = arith.mulf %782, %1235 : vector<2x128xf32>
    %1237 = arith.addf %1234, %1236 : vector<2x128xf32>
    %1238 = vector.broadcast %376 : f32 to vector<2x128xf32>
    %1239 = arith.addf %1237, %1238 : vector<2x128xf32>
    %cst_47 = arith.constant 0.000000e+00 : f32
    %1240 = vector.broadcast %cst_47 : f32 to vector<2x128xf32>
    %1241 = arith.maximumf %1239, %1240 : vector<2x128xf32>
    %1242 = vector.broadcast %256 : f32 to vector<2x128xf32>
    %1243 = arith.mulf %467, %1242 : vector<2x128xf32>
    %1244 = vector.broadcast %257 : f32 to vector<2x128xf32>
    %1245 = arith.mulf %488, %1244 : vector<2x128xf32>
    %1246 = arith.addf %1243, %1245 : vector<2x128xf32>
    %1247 = vector.broadcast %258 : f32 to vector<2x128xf32>
    %1248 = arith.mulf %509, %1247 : vector<2x128xf32>
    %1249 = arith.addf %1246, %1248 : vector<2x128xf32>
    %1250 = vector.broadcast %259 : f32 to vector<2x128xf32>
    %1251 = arith.mulf %530, %1250 : vector<2x128xf32>
    %1252 = arith.addf %1249, %1251 : vector<2x128xf32>
    %1253 = vector.broadcast %260 : f32 to vector<2x128xf32>
    %1254 = arith.mulf %551, %1253 : vector<2x128xf32>
    %1255 = arith.addf %1252, %1254 : vector<2x128xf32>
    %1256 = vector.broadcast %261 : f32 to vector<2x128xf32>
    %1257 = arith.mulf %572, %1256 : vector<2x128xf32>
    %1258 = arith.addf %1255, %1257 : vector<2x128xf32>
    %1259 = vector.broadcast %262 : f32 to vector<2x128xf32>
    %1260 = arith.mulf %593, %1259 : vector<2x128xf32>
    %1261 = arith.addf %1258, %1260 : vector<2x128xf32>
    %1262 = vector.broadcast %263 : f32 to vector<2x128xf32>
    %1263 = arith.mulf %614, %1262 : vector<2x128xf32>
    %1264 = arith.addf %1261, %1263 : vector<2x128xf32>
    %1265 = vector.broadcast %264 : f32 to vector<2x128xf32>
    %1266 = arith.mulf %635, %1265 : vector<2x128xf32>
    %1267 = arith.addf %1264, %1266 : vector<2x128xf32>
    %1268 = vector.broadcast %265 : f32 to vector<2x128xf32>
    %1269 = arith.mulf %656, %1268 : vector<2x128xf32>
    %1270 = arith.addf %1267, %1269 : vector<2x128xf32>
    %1271 = vector.broadcast %266 : f32 to vector<2x128xf32>
    %1272 = arith.mulf %677, %1271 : vector<2x128xf32>
    %1273 = arith.addf %1270, %1272 : vector<2x128xf32>
    %1274 = vector.broadcast %267 : f32 to vector<2x128xf32>
    %1275 = arith.mulf %698, %1274 : vector<2x128xf32>
    %1276 = arith.addf %1273, %1275 : vector<2x128xf32>
    %1277 = vector.broadcast %268 : f32 to vector<2x128xf32>
    %1278 = arith.mulf %719, %1277 : vector<2x128xf32>
    %1279 = arith.addf %1276, %1278 : vector<2x128xf32>
    %1280 = vector.broadcast %269 : f32 to vector<2x128xf32>
    %1281 = arith.mulf %740, %1280 : vector<2x128xf32>
    %1282 = arith.addf %1279, %1281 : vector<2x128xf32>
    %1283 = vector.broadcast %270 : f32 to vector<2x128xf32>
    %1284 = arith.mulf %761, %1283 : vector<2x128xf32>
    %1285 = arith.addf %1282, %1284 : vector<2x128xf32>
    %1286 = vector.broadcast %271 : f32 to vector<2x128xf32>
    %1287 = arith.mulf %782, %1286 : vector<2x128xf32>
    %1288 = arith.addf %1285, %1287 : vector<2x128xf32>
    %1289 = vector.broadcast %377 : f32 to vector<2x128xf32>
    %1290 = arith.addf %1288, %1289 : vector<2x128xf32>
    %cst_48 = arith.constant 0.000000e+00 : f32
    %1291 = vector.broadcast %cst_48 : f32 to vector<2x128xf32>
    %1292 = arith.maximumf %1290, %1291 : vector<2x128xf32>
    %1293 = vector.broadcast %272 : f32 to vector<2x128xf32>
    %1294 = arith.mulf %467, %1293 : vector<2x128xf32>
    %1295 = vector.broadcast %273 : f32 to vector<2x128xf32>
    %1296 = arith.mulf %488, %1295 : vector<2x128xf32>
    %1297 = arith.addf %1294, %1296 : vector<2x128xf32>
    %1298 = vector.broadcast %274 : f32 to vector<2x128xf32>
    %1299 = arith.mulf %509, %1298 : vector<2x128xf32>
    %1300 = arith.addf %1297, %1299 : vector<2x128xf32>
    %1301 = vector.broadcast %275 : f32 to vector<2x128xf32>
    %1302 = arith.mulf %530, %1301 : vector<2x128xf32>
    %1303 = arith.addf %1300, %1302 : vector<2x128xf32>
    %1304 = vector.broadcast %276 : f32 to vector<2x128xf32>
    %1305 = arith.mulf %551, %1304 : vector<2x128xf32>
    %1306 = arith.addf %1303, %1305 : vector<2x128xf32>
    %1307 = vector.broadcast %277 : f32 to vector<2x128xf32>
    %1308 = arith.mulf %572, %1307 : vector<2x128xf32>
    %1309 = arith.addf %1306, %1308 : vector<2x128xf32>
    %1310 = vector.broadcast %278 : f32 to vector<2x128xf32>
    %1311 = arith.mulf %593, %1310 : vector<2x128xf32>
    %1312 = arith.addf %1309, %1311 : vector<2x128xf32>
    %1313 = vector.broadcast %279 : f32 to vector<2x128xf32>
    %1314 = arith.mulf %614, %1313 : vector<2x128xf32>
    %1315 = arith.addf %1312, %1314 : vector<2x128xf32>
    %1316 = vector.broadcast %280 : f32 to vector<2x128xf32>
    %1317 = arith.mulf %635, %1316 : vector<2x128xf32>
    %1318 = arith.addf %1315, %1317 : vector<2x128xf32>
    %1319 = vector.broadcast %281 : f32 to vector<2x128xf32>
    %1320 = arith.mulf %656, %1319 : vector<2x128xf32>
    %1321 = arith.addf %1318, %1320 : vector<2x128xf32>
    %1322 = vector.broadcast %282 : f32 to vector<2x128xf32>
    %1323 = arith.mulf %677, %1322 : vector<2x128xf32>
    %1324 = arith.addf %1321, %1323 : vector<2x128xf32>
    %1325 = vector.broadcast %283 : f32 to vector<2x128xf32>
    %1326 = arith.mulf %698, %1325 : vector<2x128xf32>
    %1327 = arith.addf %1324, %1326 : vector<2x128xf32>
    %1328 = vector.broadcast %284 : f32 to vector<2x128xf32>
    %1329 = arith.mulf %719, %1328 : vector<2x128xf32>
    %1330 = arith.addf %1327, %1329 : vector<2x128xf32>
    %1331 = vector.broadcast %285 : f32 to vector<2x128xf32>
    %1332 = arith.mulf %740, %1331 : vector<2x128xf32>
    %1333 = arith.addf %1330, %1332 : vector<2x128xf32>
    %1334 = vector.broadcast %286 : f32 to vector<2x128xf32>
    %1335 = arith.mulf %761, %1334 : vector<2x128xf32>
    %1336 = arith.addf %1333, %1335 : vector<2x128xf32>
    %1337 = vector.broadcast %287 : f32 to vector<2x128xf32>
    %1338 = arith.mulf %782, %1337 : vector<2x128xf32>
    %1339 = arith.addf %1336, %1338 : vector<2x128xf32>
    %1340 = vector.broadcast %378 : f32 to vector<2x128xf32>
    %1341 = arith.addf %1339, %1340 : vector<2x128xf32>
    %cst_49 = arith.constant 0.000000e+00 : f32
    %1342 = vector.broadcast %cst_49 : f32 to vector<2x128xf32>
    %1343 = arith.maximumf %1341, %1342 : vector<2x128xf32>
    %1344 = vector.broadcast %288 : f32 to vector<2x128xf32>
    %1345 = arith.mulf %467, %1344 : vector<2x128xf32>
    %1346 = vector.broadcast %289 : f32 to vector<2x128xf32>
    %1347 = arith.mulf %488, %1346 : vector<2x128xf32>
    %1348 = arith.addf %1345, %1347 : vector<2x128xf32>
    %1349 = vector.broadcast %290 : f32 to vector<2x128xf32>
    %1350 = arith.mulf %509, %1349 : vector<2x128xf32>
    %1351 = arith.addf %1348, %1350 : vector<2x128xf32>
    %1352 = vector.broadcast %291 : f32 to vector<2x128xf32>
    %1353 = arith.mulf %530, %1352 : vector<2x128xf32>
    %1354 = arith.addf %1351, %1353 : vector<2x128xf32>
    %1355 = vector.broadcast %292 : f32 to vector<2x128xf32>
    %1356 = arith.mulf %551, %1355 : vector<2x128xf32>
    %1357 = arith.addf %1354, %1356 : vector<2x128xf32>
    %1358 = vector.broadcast %293 : f32 to vector<2x128xf32>
    %1359 = arith.mulf %572, %1358 : vector<2x128xf32>
    %1360 = arith.addf %1357, %1359 : vector<2x128xf32>
    %1361 = vector.broadcast %294 : f32 to vector<2x128xf32>
    %1362 = arith.mulf %593, %1361 : vector<2x128xf32>
    %1363 = arith.addf %1360, %1362 : vector<2x128xf32>
    %1364 = vector.broadcast %295 : f32 to vector<2x128xf32>
    %1365 = arith.mulf %614, %1364 : vector<2x128xf32>
    %1366 = arith.addf %1363, %1365 : vector<2x128xf32>
    %1367 = vector.broadcast %296 : f32 to vector<2x128xf32>
    %1368 = arith.mulf %635, %1367 : vector<2x128xf32>
    %1369 = arith.addf %1366, %1368 : vector<2x128xf32>
    %1370 = vector.broadcast %297 : f32 to vector<2x128xf32>
    %1371 = arith.mulf %656, %1370 : vector<2x128xf32>
    %1372 = arith.addf %1369, %1371 : vector<2x128xf32>
    %1373 = vector.broadcast %298 : f32 to vector<2x128xf32>
    %1374 = arith.mulf %677, %1373 : vector<2x128xf32>
    %1375 = arith.addf %1372, %1374 : vector<2x128xf32>
    %1376 = vector.broadcast %299 : f32 to vector<2x128xf32>
    %1377 = arith.mulf %698, %1376 : vector<2x128xf32>
    %1378 = arith.addf %1375, %1377 : vector<2x128xf32>
    %1379 = vector.broadcast %300 : f32 to vector<2x128xf32>
    %1380 = arith.mulf %719, %1379 : vector<2x128xf32>
    %1381 = arith.addf %1378, %1380 : vector<2x128xf32>
    %1382 = vector.broadcast %301 : f32 to vector<2x128xf32>
    %1383 = arith.mulf %740, %1382 : vector<2x128xf32>
    %1384 = arith.addf %1381, %1383 : vector<2x128xf32>
    %1385 = vector.broadcast %302 : f32 to vector<2x128xf32>
    %1386 = arith.mulf %761, %1385 : vector<2x128xf32>
    %1387 = arith.addf %1384, %1386 : vector<2x128xf32>
    %1388 = vector.broadcast %303 : f32 to vector<2x128xf32>
    %1389 = arith.mulf %782, %1388 : vector<2x128xf32>
    %1390 = arith.addf %1387, %1389 : vector<2x128xf32>
    %1391 = vector.broadcast %379 : f32 to vector<2x128xf32>
    %1392 = arith.addf %1390, %1391 : vector<2x128xf32>
    %cst_50 = arith.constant 0.000000e+00 : f32
    %1393 = vector.broadcast %cst_50 : f32 to vector<2x128xf32>
    %1394 = arith.maximumf %1392, %1393 : vector<2x128xf32>
    %1395 = vector.broadcast %304 : f32 to vector<2x128xf32>
    %1396 = arith.mulf %467, %1395 : vector<2x128xf32>
    %1397 = vector.broadcast %305 : f32 to vector<2x128xf32>
    %1398 = arith.mulf %488, %1397 : vector<2x128xf32>
    %1399 = arith.addf %1396, %1398 : vector<2x128xf32>
    %1400 = vector.broadcast %306 : f32 to vector<2x128xf32>
    %1401 = arith.mulf %509, %1400 : vector<2x128xf32>
    %1402 = arith.addf %1399, %1401 : vector<2x128xf32>
    %1403 = vector.broadcast %307 : f32 to vector<2x128xf32>
    %1404 = arith.mulf %530, %1403 : vector<2x128xf32>
    %1405 = arith.addf %1402, %1404 : vector<2x128xf32>
    %1406 = vector.broadcast %308 : f32 to vector<2x128xf32>
    %1407 = arith.mulf %551, %1406 : vector<2x128xf32>
    %1408 = arith.addf %1405, %1407 : vector<2x128xf32>
    %1409 = vector.broadcast %309 : f32 to vector<2x128xf32>
    %1410 = arith.mulf %572, %1409 : vector<2x128xf32>
    %1411 = arith.addf %1408, %1410 : vector<2x128xf32>
    %1412 = vector.broadcast %310 : f32 to vector<2x128xf32>
    %1413 = arith.mulf %593, %1412 : vector<2x128xf32>
    %1414 = arith.addf %1411, %1413 : vector<2x128xf32>
    %1415 = vector.broadcast %311 : f32 to vector<2x128xf32>
    %1416 = arith.mulf %614, %1415 : vector<2x128xf32>
    %1417 = arith.addf %1414, %1416 : vector<2x128xf32>
    %1418 = vector.broadcast %312 : f32 to vector<2x128xf32>
    %1419 = arith.mulf %635, %1418 : vector<2x128xf32>
    %1420 = arith.addf %1417, %1419 : vector<2x128xf32>
    %1421 = vector.broadcast %313 : f32 to vector<2x128xf32>
    %1422 = arith.mulf %656, %1421 : vector<2x128xf32>
    %1423 = arith.addf %1420, %1422 : vector<2x128xf32>
    %1424 = vector.broadcast %314 : f32 to vector<2x128xf32>
    %1425 = arith.mulf %677, %1424 : vector<2x128xf32>
    %1426 = arith.addf %1423, %1425 : vector<2x128xf32>
    %1427 = vector.broadcast %315 : f32 to vector<2x128xf32>
    %1428 = arith.mulf %698, %1427 : vector<2x128xf32>
    %1429 = arith.addf %1426, %1428 : vector<2x128xf32>
    %1430 = vector.broadcast %316 : f32 to vector<2x128xf32>
    %1431 = arith.mulf %719, %1430 : vector<2x128xf32>
    %1432 = arith.addf %1429, %1431 : vector<2x128xf32>
    %1433 = vector.broadcast %317 : f32 to vector<2x128xf32>
    %1434 = arith.mulf %740, %1433 : vector<2x128xf32>
    %1435 = arith.addf %1432, %1434 : vector<2x128xf32>
    %1436 = vector.broadcast %318 : f32 to vector<2x128xf32>
    %1437 = arith.mulf %761, %1436 : vector<2x128xf32>
    %1438 = arith.addf %1435, %1437 : vector<2x128xf32>
    %1439 = vector.broadcast %319 : f32 to vector<2x128xf32>
    %1440 = arith.mulf %782, %1439 : vector<2x128xf32>
    %1441 = arith.addf %1438, %1440 : vector<2x128xf32>
    %1442 = vector.broadcast %380 : f32 to vector<2x128xf32>
    %1443 = arith.addf %1441, %1442 : vector<2x128xf32>
    %cst_51 = arith.constant 0.000000e+00 : f32
    %1444 = vector.broadcast %cst_51 : f32 to vector<2x128xf32>
    %1445 = arith.maximumf %1443, %1444 : vector<2x128xf32>
    %1446 = vector.broadcast %320 : f32 to vector<2x128xf32>
    %1447 = arith.mulf %467, %1446 : vector<2x128xf32>
    %1448 = vector.broadcast %321 : f32 to vector<2x128xf32>
    %1449 = arith.mulf %488, %1448 : vector<2x128xf32>
    %1450 = arith.addf %1447, %1449 : vector<2x128xf32>
    %1451 = vector.broadcast %322 : f32 to vector<2x128xf32>
    %1452 = arith.mulf %509, %1451 : vector<2x128xf32>
    %1453 = arith.addf %1450, %1452 : vector<2x128xf32>
    %1454 = vector.broadcast %323 : f32 to vector<2x128xf32>
    %1455 = arith.mulf %530, %1454 : vector<2x128xf32>
    %1456 = arith.addf %1453, %1455 : vector<2x128xf32>
    %1457 = vector.broadcast %324 : f32 to vector<2x128xf32>
    %1458 = arith.mulf %551, %1457 : vector<2x128xf32>
    %1459 = arith.addf %1456, %1458 : vector<2x128xf32>
    %1460 = vector.broadcast %325 : f32 to vector<2x128xf32>
    %1461 = arith.mulf %572, %1460 : vector<2x128xf32>
    %1462 = arith.addf %1459, %1461 : vector<2x128xf32>
    %1463 = vector.broadcast %326 : f32 to vector<2x128xf32>
    %1464 = arith.mulf %593, %1463 : vector<2x128xf32>
    %1465 = arith.addf %1462, %1464 : vector<2x128xf32>
    %1466 = vector.broadcast %327 : f32 to vector<2x128xf32>
    %1467 = arith.mulf %614, %1466 : vector<2x128xf32>
    %1468 = arith.addf %1465, %1467 : vector<2x128xf32>
    %1469 = vector.broadcast %328 : f32 to vector<2x128xf32>
    %1470 = arith.mulf %635, %1469 : vector<2x128xf32>
    %1471 = arith.addf %1468, %1470 : vector<2x128xf32>
    %1472 = vector.broadcast %329 : f32 to vector<2x128xf32>
    %1473 = arith.mulf %656, %1472 : vector<2x128xf32>
    %1474 = arith.addf %1471, %1473 : vector<2x128xf32>
    %1475 = vector.broadcast %330 : f32 to vector<2x128xf32>
    %1476 = arith.mulf %677, %1475 : vector<2x128xf32>
    %1477 = arith.addf %1474, %1476 : vector<2x128xf32>
    %1478 = vector.broadcast %331 : f32 to vector<2x128xf32>
    %1479 = arith.mulf %698, %1478 : vector<2x128xf32>
    %1480 = arith.addf %1477, %1479 : vector<2x128xf32>
    %1481 = vector.broadcast %332 : f32 to vector<2x128xf32>
    %1482 = arith.mulf %719, %1481 : vector<2x128xf32>
    %1483 = arith.addf %1480, %1482 : vector<2x128xf32>
    %1484 = vector.broadcast %333 : f32 to vector<2x128xf32>
    %1485 = arith.mulf %740, %1484 : vector<2x128xf32>
    %1486 = arith.addf %1483, %1485 : vector<2x128xf32>
    %1487 = vector.broadcast %334 : f32 to vector<2x128xf32>
    %1488 = arith.mulf %761, %1487 : vector<2x128xf32>
    %1489 = arith.addf %1486, %1488 : vector<2x128xf32>
    %1490 = vector.broadcast %335 : f32 to vector<2x128xf32>
    %1491 = arith.mulf %782, %1490 : vector<2x128xf32>
    %1492 = arith.addf %1489, %1491 : vector<2x128xf32>
    %1493 = vector.broadcast %381 : f32 to vector<2x128xf32>
    %1494 = arith.addf %1492, %1493 : vector<2x128xf32>
    %cst_52 = arith.constant 0.000000e+00 : f32
    %1495 = vector.broadcast %cst_52 : f32 to vector<2x128xf32>
    %1496 = arith.maximumf %1494, %1495 : vector<2x128xf32>
    %1497 = vector.broadcast %336 : f32 to vector<2x128xf32>
    %1498 = arith.mulf %467, %1497 : vector<2x128xf32>
    %1499 = vector.broadcast %337 : f32 to vector<2x128xf32>
    %1500 = arith.mulf %488, %1499 : vector<2x128xf32>
    %1501 = arith.addf %1498, %1500 : vector<2x128xf32>
    %1502 = vector.broadcast %338 : f32 to vector<2x128xf32>
    %1503 = arith.mulf %509, %1502 : vector<2x128xf32>
    %1504 = arith.addf %1501, %1503 : vector<2x128xf32>
    %1505 = vector.broadcast %339 : f32 to vector<2x128xf32>
    %1506 = arith.mulf %530, %1505 : vector<2x128xf32>
    %1507 = arith.addf %1504, %1506 : vector<2x128xf32>
    %1508 = vector.broadcast %340 : f32 to vector<2x128xf32>
    %1509 = arith.mulf %551, %1508 : vector<2x128xf32>
    %1510 = arith.addf %1507, %1509 : vector<2x128xf32>
    %1511 = vector.broadcast %341 : f32 to vector<2x128xf32>
    %1512 = arith.mulf %572, %1511 : vector<2x128xf32>
    %1513 = arith.addf %1510, %1512 : vector<2x128xf32>
    %1514 = vector.broadcast %342 : f32 to vector<2x128xf32>
    %1515 = arith.mulf %593, %1514 : vector<2x128xf32>
    %1516 = arith.addf %1513, %1515 : vector<2x128xf32>
    %1517 = vector.broadcast %343 : f32 to vector<2x128xf32>
    %1518 = arith.mulf %614, %1517 : vector<2x128xf32>
    %1519 = arith.addf %1516, %1518 : vector<2x128xf32>
    %1520 = vector.broadcast %344 : f32 to vector<2x128xf32>
    %1521 = arith.mulf %635, %1520 : vector<2x128xf32>
    %1522 = arith.addf %1519, %1521 : vector<2x128xf32>
    %1523 = vector.broadcast %345 : f32 to vector<2x128xf32>
    %1524 = arith.mulf %656, %1523 : vector<2x128xf32>
    %1525 = arith.addf %1522, %1524 : vector<2x128xf32>
    %1526 = vector.broadcast %346 : f32 to vector<2x128xf32>
    %1527 = arith.mulf %677, %1526 : vector<2x128xf32>
    %1528 = arith.addf %1525, %1527 : vector<2x128xf32>
    %1529 = vector.broadcast %347 : f32 to vector<2x128xf32>
    %1530 = arith.mulf %698, %1529 : vector<2x128xf32>
    %1531 = arith.addf %1528, %1530 : vector<2x128xf32>
    %1532 = vector.broadcast %348 : f32 to vector<2x128xf32>
    %1533 = arith.mulf %719, %1532 : vector<2x128xf32>
    %1534 = arith.addf %1531, %1533 : vector<2x128xf32>
    %1535 = vector.broadcast %349 : f32 to vector<2x128xf32>
    %1536 = arith.mulf %740, %1535 : vector<2x128xf32>
    %1537 = arith.addf %1534, %1536 : vector<2x128xf32>
    %1538 = vector.broadcast %350 : f32 to vector<2x128xf32>
    %1539 = arith.mulf %761, %1538 : vector<2x128xf32>
    %1540 = arith.addf %1537, %1539 : vector<2x128xf32>
    %1541 = vector.broadcast %351 : f32 to vector<2x128xf32>
    %1542 = arith.mulf %782, %1541 : vector<2x128xf32>
    %1543 = arith.addf %1540, %1542 : vector<2x128xf32>
    %1544 = vector.broadcast %382 : f32 to vector<2x128xf32>
    %1545 = arith.addf %1543, %1544 : vector<2x128xf32>
    %cst_53 = arith.constant 0.000000e+00 : f32
    %1546 = vector.broadcast %cst_53 : f32 to vector<2x128xf32>
    %1547 = arith.maximumf %1545, %1546 : vector<2x128xf32>
    %1548 = vector.broadcast %352 : f32 to vector<2x128xf32>
    %1549 = arith.mulf %467, %1548 : vector<2x128xf32>
    %1550 = vector.broadcast %353 : f32 to vector<2x128xf32>
    %1551 = arith.mulf %488, %1550 : vector<2x128xf32>
    %1552 = arith.addf %1549, %1551 : vector<2x128xf32>
    %1553 = vector.broadcast %354 : f32 to vector<2x128xf32>
    %1554 = arith.mulf %509, %1553 : vector<2x128xf32>
    %1555 = arith.addf %1552, %1554 : vector<2x128xf32>
    %1556 = vector.broadcast %355 : f32 to vector<2x128xf32>
    %1557 = arith.mulf %530, %1556 : vector<2x128xf32>
    %1558 = arith.addf %1555, %1557 : vector<2x128xf32>
    %1559 = vector.broadcast %356 : f32 to vector<2x128xf32>
    %1560 = arith.mulf %551, %1559 : vector<2x128xf32>
    %1561 = arith.addf %1558, %1560 : vector<2x128xf32>
    %1562 = vector.broadcast %357 : f32 to vector<2x128xf32>
    %1563 = arith.mulf %572, %1562 : vector<2x128xf32>
    %1564 = arith.addf %1561, %1563 : vector<2x128xf32>
    %1565 = vector.broadcast %358 : f32 to vector<2x128xf32>
    %1566 = arith.mulf %593, %1565 : vector<2x128xf32>
    %1567 = arith.addf %1564, %1566 : vector<2x128xf32>
    %1568 = vector.broadcast %359 : f32 to vector<2x128xf32>
    %1569 = arith.mulf %614, %1568 : vector<2x128xf32>
    %1570 = arith.addf %1567, %1569 : vector<2x128xf32>
    %1571 = vector.broadcast %360 : f32 to vector<2x128xf32>
    %1572 = arith.mulf %635, %1571 : vector<2x128xf32>
    %1573 = arith.addf %1570, %1572 : vector<2x128xf32>
    %1574 = vector.broadcast %361 : f32 to vector<2x128xf32>
    %1575 = arith.mulf %656, %1574 : vector<2x128xf32>
    %1576 = arith.addf %1573, %1575 : vector<2x128xf32>
    %1577 = vector.broadcast %362 : f32 to vector<2x128xf32>
    %1578 = arith.mulf %677, %1577 : vector<2x128xf32>
    %1579 = arith.addf %1576, %1578 : vector<2x128xf32>
    %1580 = vector.broadcast %363 : f32 to vector<2x128xf32>
    %1581 = arith.mulf %698, %1580 : vector<2x128xf32>
    %1582 = arith.addf %1579, %1581 : vector<2x128xf32>
    %1583 = vector.broadcast %364 : f32 to vector<2x128xf32>
    %1584 = arith.mulf %719, %1583 : vector<2x128xf32>
    %1585 = arith.addf %1582, %1584 : vector<2x128xf32>
    %1586 = vector.broadcast %365 : f32 to vector<2x128xf32>
    %1587 = arith.mulf %740, %1586 : vector<2x128xf32>
    %1588 = arith.addf %1585, %1587 : vector<2x128xf32>
    %1589 = vector.broadcast %366 : f32 to vector<2x128xf32>
    %1590 = arith.mulf %761, %1589 : vector<2x128xf32>
    %1591 = arith.addf %1588, %1590 : vector<2x128xf32>
    %1592 = vector.broadcast %367 : f32 to vector<2x128xf32>
    %1593 = arith.mulf %782, %1592 : vector<2x128xf32>
    %1594 = arith.addf %1591, %1593 : vector<2x128xf32>
    %1595 = vector.broadcast %383 : f32 to vector<2x128xf32>
    %1596 = arith.addf %1594, %1595 : vector<2x128xf32>
    %cst_54 = arith.constant 0.000000e+00 : f32
    %1597 = vector.broadcast %cst_54 : f32 to vector<2x128xf32>
    %1598 = arith.maximumf %1596, %1597 : vector<2x128xf32>
    %1599 = vector.broadcast %384 : f32 to vector<2x128xf32>
    %1600 = arith.mulf %833, %1599 : vector<2x128xf32>
    %1601 = vector.broadcast %385 : f32 to vector<2x128xf32>
    %1602 = arith.mulf %884, %1601 : vector<2x128xf32>
    %1603 = arith.addf %1600, %1602 : vector<2x128xf32>
    %1604 = vector.broadcast %386 : f32 to vector<2x128xf32>
    %1605 = arith.mulf %935, %1604 : vector<2x128xf32>
    %1606 = arith.addf %1603, %1605 : vector<2x128xf32>
    %1607 = vector.broadcast %387 : f32 to vector<2x128xf32>
    %1608 = arith.mulf %986, %1607 : vector<2x128xf32>
    %1609 = arith.addf %1606, %1608 : vector<2x128xf32>
    %1610 = vector.broadcast %388 : f32 to vector<2x128xf32>
    %1611 = arith.mulf %1037, %1610 : vector<2x128xf32>
    %1612 = arith.addf %1609, %1611 : vector<2x128xf32>
    %1613 = vector.broadcast %389 : f32 to vector<2x128xf32>
    %1614 = arith.mulf %1088, %1613 : vector<2x128xf32>
    %1615 = arith.addf %1612, %1614 : vector<2x128xf32>
    %1616 = vector.broadcast %390 : f32 to vector<2x128xf32>
    %1617 = arith.mulf %1139, %1616 : vector<2x128xf32>
    %1618 = arith.addf %1615, %1617 : vector<2x128xf32>
    %1619 = vector.broadcast %391 : f32 to vector<2x128xf32>
    %1620 = arith.mulf %1190, %1619 : vector<2x128xf32>
    %1621 = arith.addf %1618, %1620 : vector<2x128xf32>
    %1622 = vector.broadcast %392 : f32 to vector<2x128xf32>
    %1623 = arith.mulf %1241, %1622 : vector<2x128xf32>
    %1624 = arith.addf %1621, %1623 : vector<2x128xf32>
    %1625 = vector.broadcast %393 : f32 to vector<2x128xf32>
    %1626 = arith.mulf %1292, %1625 : vector<2x128xf32>
    %1627 = arith.addf %1624, %1626 : vector<2x128xf32>
    %1628 = vector.broadcast %394 : f32 to vector<2x128xf32>
    %1629 = arith.mulf %1343, %1628 : vector<2x128xf32>
    %1630 = arith.addf %1627, %1629 : vector<2x128xf32>
    %1631 = vector.broadcast %395 : f32 to vector<2x128xf32>
    %1632 = arith.mulf %1394, %1631 : vector<2x128xf32>
    %1633 = arith.addf %1630, %1632 : vector<2x128xf32>
    %1634 = vector.broadcast %396 : f32 to vector<2x128xf32>
    %1635 = arith.mulf %1445, %1634 : vector<2x128xf32>
    %1636 = arith.addf %1633, %1635 : vector<2x128xf32>
    %1637 = vector.broadcast %397 : f32 to vector<2x128xf32>
    %1638 = arith.mulf %1496, %1637 : vector<2x128xf32>
    %1639 = arith.addf %1636, %1638 : vector<2x128xf32>
    %1640 = vector.broadcast %398 : f32 to vector<2x128xf32>
    %1641 = arith.mulf %1547, %1640 : vector<2x128xf32>
    %1642 = arith.addf %1639, %1641 : vector<2x128xf32>
    %1643 = vector.broadcast %399 : f32 to vector<2x128xf32>
    %1644 = arith.mulf %1598, %1643 : vector<2x128xf32>
    %1645 = arith.addf %1642, %1644 : vector<2x128xf32>
    %1646 = vector.broadcast %432 : f32 to vector<2x128xf32>
    %1647 = arith.addf %1645, %1646 : vector<2x128xf32>
    %cst_55 = arith.constant 0.000000e+00 : f32
    %1648 = vector.broadcast %cst_55 : f32 to vector<2x128xf32>
    %1649 = arith.maximumf %1647, %1648 : vector<2x128xf32>
    %c0_56 = arith.constant 0 : index
    %c0_57 = arith.constant 0 : index
    %c0_58 = arith.constant 0 : index
    %c0_59 = arith.constant 0 : index
    %1650 = vector.load %arg4[%c0_56, %c0_57, %c0_58, %c0_59] : memref<1x3x2x128xf32, #tpu.memory_space<vmem>>, vector<1x1x2x128xf32>
    %1651 = vector.shape_cast %1650 : vector<1x1x2x128xf32> to vector<2x128xf32>
    %1652 = arith.addf %1649, %1651 : vector<2x128xf32>
    %1653 = math.tanh %1652 : vector<2x128xf32>
    %c0_60 = arith.constant 0 : index
    %c0_61 = arith.constant 0 : index
    %c0_62 = arith.constant 0 : index
    %c0_63 = arith.constant 0 : index
    %1654 = vector.load %arg5[%c0_60, %c0_61, %c0_62, %c0_63] : memref<1x3x2x128xf32, #tpu.memory_space<vmem>>, vector<1x1x2x128xf32>
    %1655 = vector.shape_cast %1654 : vector<1x1x2x128xf32> to vector<2x128xf32>
    %1656 = vector.shape_cast %1653 : vector<2x128xf32> to vector<1x1x2x128xf32>
    tpu.vector_store %arg5[%c0_60, %c0_61, %c0_62, %c0_63], %1656 {strides = array<i32>} : memref<1x3x2x128xf32, #tpu.memory_space<vmem>>, vector<1x1x2x128xf32>,
    %1657 = vector.broadcast %400 : f32 to vector<2x128xf32>
    %1658 = arith.mulf %833, %1657 : vector<2x128xf32>
    %1659 = vector.broadcast %401 : f32 to vector<2x128xf32>
    %1660 = arith.mulf %884, %1659 : vector<2x128xf32>
    %1661 = arith.addf %1658, %1660 : vector<2x128xf32>
    %1662 = vector.broadcast %402 : f32 to vector<2x128xf32>
    %1663 = arith.mulf %935, %1662 : vector<2x128xf32>
    %1664 = arith.addf %1661, %1663 : vector<2x128xf32>
    %1665 = vector.broadcast %403 : f32 to vector<2x128xf32>
    %1666 = arith.mulf %986, %1665 : vector<2x128xf32>
    %1667 = arith.addf %1664, %1666 : vector<2x128xf32>
    %1668 = vector.broadcast %404 : f32 to vector<2x128xf32>
    %1669 = arith.mulf %1037, %1668 : vector<2x128xf32>
    %1670 = arith.addf %1667, %1669 : vector<2x128xf32>
    %1671 = vector.broadcast %405 : f32 to vector<2x128xf32>
    %1672 = arith.mulf %1088, %1671 : vector<2x128xf32>
    %1673 = arith.addf %1670, %1672 : vector<2x128xf32>
    %1674 = vector.broadcast %406 : f32 to vector<2x128xf32>
    %1675 = arith.mulf %1139, %1674 : vector<2x128xf32>
    %1676 = arith.addf %1673, %1675 : vector<2x128xf32>
    %1677 = vector.broadcast %407 : f32 to vector<2x128xf32>
    %1678 = arith.mulf %1190, %1677 : vector<2x128xf32>
    %1679 = arith.addf %1676, %1678 : vector<2x128xf32>
    %1680 = vector.broadcast %408 : f32 to vector<2x128xf32>
    %1681 = arith.mulf %1241, %1680 : vector<2x128xf32>
    %1682 = arith.addf %1679, %1681 : vector<2x128xf32>
    %1683 = vector.broadcast %409 : f32 to vector<2x128xf32>
    %1684 = arith.mulf %1292, %1683 : vector<2x128xf32>
    %1685 = arith.addf %1682, %1684 : vector<2x128xf32>
    %1686 = vector.broadcast %410 : f32 to vector<2x128xf32>
    %1687 = arith.mulf %1343, %1686 : vector<2x128xf32>
    %1688 = arith.addf %1685, %1687 : vector<2x128xf32>
    %1689 = vector.broadcast %411 : f32 to vector<2x128xf32>
    %1690 = arith.mulf %1394, %1689 : vector<2x128xf32>
    %1691 = arith.addf %1688, %1690 : vector<2x128xf32>
    %1692 = vector.broadcast %412 : f32 to vector<2x128xf32>
    %1693 = arith.mulf %1445, %1692 : vector<2x128xf32>
    %1694 = arith.addf %1691, %1693 : vector<2x128xf32>
    %1695 = vector.broadcast %413 : f32 to vector<2x128xf32>
    %1696 = arith.mulf %1496, %1695 : vector<2x128xf32>
    %1697 = arith.addf %1694, %1696 : vector<2x128xf32>
    %1698 = vector.broadcast %414 : f32 to vector<2x128xf32>
    %1699 = arith.mulf %1547, %1698 : vector<2x128xf32>
    %1700 = arith.addf %1697, %1699 : vector<2x128xf32>
    %1701 = vector.broadcast %415 : f32 to vector<2x128xf32>
    %1702 = arith.mulf %1598, %1701 : vector<2x128xf32>
    %1703 = arith.addf %1700, %1702 : vector<2x128xf32>
    %1704 = vector.broadcast %433 : f32 to vector<2x128xf32>
    %1705 = arith.addf %1703, %1704 : vector<2x128xf32>
    %cst_64 = arith.constant 0.000000e+00 : f32
    %1706 = vector.broadcast %cst_64 : f32 to vector<2x128xf32>
    %1707 = arith.maximumf %1705, %1706 : vector<2x128xf32>
    %c0_65 = arith.constant 0 : index
    %c1_66 = arith.constant 1 : index
    %c0_67 = arith.constant 0 : index
    %c0_68 = arith.constant 0 : index
    %1708 = vector.load %arg4[%c0_65, %c1_66, %c0_67, %c0_68] : memref<1x3x2x128xf32, #tpu.memory_space<vmem>>, vector<1x1x2x128xf32>
    %1709 = vector.shape_cast %1708 : vector<1x1x2x128xf32> to vector<2x128xf32>
    %1710 = arith.addf %1707, %1709 : vector<2x128xf32>
    %1711 = math.tanh %1710 : vector<2x128xf32>
    %c0_69 = arith.constant 0 : index
    %c1_70 = arith.constant 1 : index
    %c0_71 = arith.constant 0 : index
    %c0_72 = arith.constant 0 : index
    %1712 = vector.load %arg5[%c0_69, %c1_70, %c0_71, %c0_72] : memref<1x3x2x128xf32, #tpu.memory_space<vmem>>, vector<1x1x2x128xf32>
    %1713 = vector.shape_cast %1712 : vector<1x1x2x128xf32> to vector<2x128xf32>
    %1714 = vector.shape_cast %1711 : vector<2x128xf32> to vector<1x1x2x128xf32>
    tpu.vector_store %arg5[%c0_69, %c1_70, %c0_71, %c0_72], %1714 {strides = array<i32>} : memref<1x3x2x128xf32, #tpu.memory_space<vmem>>, vector<1x1x2x128xf32>,
    %1715 = vector.broadcast %416 : f32 to vector<2x128xf32>
    %1716 = arith.mulf %833, %1715 : vector<2x128xf32>
    %1717 = vector.broadcast %417 : f32 to vector<2x128xf32>
    %1718 = arith.mulf %884, %1717 : vector<2x128xf32>
    %1719 = arith.addf %1716, %1718 : vector<2x128xf32>
    %1720 = vector.broadcast %418 : f32 to vector<2x128xf32>
    %1721 = arith.mulf %935, %1720 : vector<2x128xf32>
    %1722 = arith.addf %1719, %1721 : vector<2x128xf32>
    %1723 = vector.broadcast %419 : f32 to vector<2x128xf32>
    %1724 = arith.mulf %986, %1723 : vector<2x128xf32>
    %1725 = arith.addf %1722, %1724 : vector<2x128xf32>
    %1726 = vector.broadcast %420 : f32 to vector<2x128xf32>
    %1727 = arith.mulf %1037, %1726 : vector<2x128xf32>
    %1728 = arith.addf %1725, %1727 : vector<2x128xf32>
    %1729 = vector.broadcast %421 : f32 to vector<2x128xf32>
    %1730 = arith.mulf %1088, %1729 : vector<2x128xf32>
    %1731 = arith.addf %1728, %1730 : vector<2x128xf32>
    %1732 = vector.broadcast %422 : f32 to vector<2x128xf32>
    %1733 = arith.mulf %1139, %1732 : vector<2x128xf32>
    %1734 = arith.addf %1731, %1733 : vector<2x128xf32>
    %1735 = vector.broadcast %423 : f32 to vector<2x128xf32>
    %1736 = arith.mulf %1190, %1735 : vector<2x128xf32>
    %1737 = arith.addf %1734, %1736 : vector<2x128xf32>
    %1738 = vector.broadcast %424 : f32 to vector<2x128xf32>
    %1739 = arith.mulf %1241, %1738 : vector<2x128xf32>
    %1740 = arith.addf %1737, %1739 : vector<2x128xf32>
    %1741 = vector.broadcast %425 : f32 to vector<2x128xf32>
    %1742 = arith.mulf %1292, %1741 : vector<2x128xf32>
    %1743 = arith.addf %1740, %1742 : vector<2x128xf32>
    %1744 = vector.broadcast %426 : f32 to vector<2x128xf32>
    %1745 = arith.mulf %1343, %1744 : vector<2x128xf32>
    %1746 = arith.addf %1743, %1745 : vector<2x128xf32>
    %1747 = vector.broadcast %427 : f32 to vector<2x128xf32>
    %1748 = arith.mulf %1394, %1747 : vector<2x128xf32>
    %1749 = arith.addf %1746, %1748 : vector<2x128xf32>
    %1750 = vector.broadcast %428 : f32 to vector<2x128xf32>
    %1751 = arith.mulf %1445, %1750 : vector<2x128xf32>
    %1752 = arith.addf %1749, %1751 : vector<2x128xf32>
    %1753 = vector.broadcast %429 : f32 to vector<2x128xf32>
    %1754 = arith.mulf %1496, %1753 : vector<2x128xf32>
    %1755 = arith.addf %1752, %1754 : vector<2x128xf32>
    %1756 = vector.broadcast %430 : f32 to vector<2x128xf32>
    %1757 = arith.mulf %1547, %1756 : vector<2x128xf32>
    %1758 = arith.addf %1755, %1757 : vector<2x128xf32>
    %1759 = vector.broadcast %431 : f32 to vector<2x128xf32>
    %1760 = arith.mulf %1598, %1759 : vector<2x128xf32>
    %1761 = arith.addf %1758, %1760 : vector<2x128xf32>
    %1762 = vector.broadcast %434 : f32 to vector<2x128xf32>
    %1763 = arith.addf %1761, %1762 : vector<2x128xf32>
    %cst_73 = arith.constant 0.000000e+00 : f32
    %1764 = vector.broadcast %cst_73 : f32 to vector<2x128xf32>
    %1765 = arith.maximumf %1763, %1764 : vector<2x128xf32>
    %c0_74 = arith.constant 0 : index
    %c2_75 = arith.constant 2 : index
    %c0_76 = arith.constant 0 : index
    %c0_77 = arith.constant 0 : index
    %1766 = vector.load %arg4[%c0_74, %c2_75, %c0_76, %c0_77] : memref<1x3x2x128xf32, #tpu.memory_space<vmem>>, vector<1x1x2x128xf32>
    %1767 = vector.shape_cast %1766 : vector<1x1x2x128xf32> to vector<2x128xf32>
    %1768 = arith.addf %1765, %1767 : vector<2x128xf32>
    %1769 = math.tanh %1768 : vector<2x128xf32>
    %c0_78 = arith.constant 0 : index
    %c2_79 = arith.constant 2 : index
    %c0_80 = arith.constant 0 : index
    %c0_81 = arith.constant 0 : index
    %1770 = vector.load %arg5[%c0_78, %c2_79, %c0_80, %c0_81] : memref<1x3x2x128xf32, #tpu.memory_space<vmem>>, vector<1x1x2x128xf32>
    %1771 = vector.shape_cast %1770 : vector<1x1x2x128xf32> to vector<2x128xf32>
    %1772 = vector.shape_cast %1769 : vector<2x128xf32> to vector<1x1x2x128xf32>
    tpu.vector_store %arg5[%c0_78, %c2_79, %c0_80, %c0_81], %1772 {strides = array<i32>} : memref<1x3x2x128xf32, #tpu.memory_space<vmem>>, vector<1x1x2x128xf32>,
    return
  }
  func.func @transform_0(%arg0: i32, %arg1: i32) -> i32 {
    %c0_i32 = arith.constant 0 : i32
    %c0_i32_0 = arith.constant 0 : i32
    return %c0_i32 : i32
  }
  func.func @transform_1(%arg0: i32, %arg1: i32) -> (i32, i32, i32, i32) {
    %c0_i32 = arith.constant 0 : i32
    %c0_i32_0 = arith.constant 0 : i32
    %c0_i32_1 = arith.constant 0 : i32
    return %arg0, %c0_i32, %arg1, %c0_i32_0 : i32, i32, i32, i32
  }
  func.func @transform_2(%arg0: i32, %arg1: i32) -> (i32, i32, i32, i32) {
    %c0_i32 = arith.constant 0 : i32
    %c0_i32_0 = arith.constant 0 : i32
    %c0_i32_1 = arith.constant 0 : i32
    return %arg0, %c0_i32, %arg1, %c0_i32_0 : i32, i32, i32, i32
  }
  func.func @transform_3(%arg0: i32, %arg1: i32) -> (i32, i32, i32, i32) {
    %c0_i32 = arith.constant 0 : i32
    %c0_i32_0 = arith.constant 0 : i32
    %c0_i32_1 = arith.constant 0 : i32
    return %arg0, %c0_i32, %arg1, %c0_i32_0 : i32, i32, i32, i32
  }
}

</mosaic_0001>

<llo_original>
// kernel: tpu_custom_call.1
$region0: #{tpu_custom_call.1}
  #allocation0 [shape = 'u32[]', space=smem, size = 0x4, offset = 0x4, fixed_abs, tag = 'smem constant byte address 0x4 - core index']
  #allocation1 [shape = 'u32[144,128]{1,0:T(1,128)}', space=vmem, size = 0x12000, scoped, tag = 'internal scratch']
  %s0 = inlined_call_operand.hbm [shape: f32[435], index: 0, kind: input, shape index: {}]
  %s1 = inlined_call_operand.hbm [shape: f32[2,6,2,128], index: 1, kind: input, shape index: {}]
  %s2 = inlined_call_operand.hbm [shape: f32[2,3,2,128], index: 2, kind: input, shape index: {}]
  %s3 = inlined_call_operand.hbm [shape: f32[2,3,2,128], index: 3, kind: output, shape index: {}]
  %s4 = sld [smem:[#allocation0]]
  $region57: #{tpu_custom_call.1} parent=0
    _
  %s6 = ssub.s32 1, %s4
  %s7 = scalar_select 0, %s6, %s4
  $region1: #{tpu_custom_call.1} parent=0
    #allocation2 [shape = 'u8[2048]{0}', space=smem, size = 0x800, scoped, tag = 'input window, operand 0, single buffered']
    #allocation3 [shape = 's32[2]{0}', space=sflag, size = 0x8, scoped, tag = 'scoped memory for tpu_custom_call.1']
    #allocation4 [shape = 's32[2]{0}', space=sflag, size = 0x8, scoped, tag = 'scoped memory for tpu_custom_call.1']
    #allocation5 [shape = 's32[2]{0}', space=sflag, size = 0x8, scoped, tag = 'scoped memory for tpu_custom_call.1']
    #allocation6 [shape = 'u8[12288]{0}', space=vmem, size = 0x3000, scoped, tag = 'input window, operand 1']
    #allocation7 [shape = 'u8[6144]{0}', space=vmem, size = 0x1800, scoped, tag = 'input window, operand 2']
    #allocation8 [shape = 's32[2]{0}', space=sflag, size = 0x8, scoped, tag = 'scoped memory for tpu_custom_call.1']
    #allocation9 [shape = 'u8[6144]{0}', space=vmem, size = 0x1800, scoped, tag = 'output window, operand 0']
    %8 = vsyncpa [#allocation5], 0
    %9 = vsyncpa [#allocation3], 0
    %s10 = scalar_lea.sflag [#allocation3], 1
    %11 = vsyncpa %s10, 0
    %12 = vsyncpa [#allocation8], 0
    %s13 = scalar_lea.sflag [#allocation8], 1
    %14 = vsyncpa %s13, 0
    %15 = vsyncpa [#allocation4], 0
    %s16 = scalar_lea.sflag [#allocation4], 1
    %17 = vsyncpa %s16, 0
    loop: start=0, step=1, limit=4
    $region2: #{tpu_custom_call.1} parent=1 // loop_pre_header
      _
    $region3: #{tpu_custom_call.1} parent=1 // loop_header
      %s19 = sphi 0, %s23
      %p20 = scmp.ge.s32.totalorder %s19, 4
      %s26 = sphi 0, %s38
      %s27 = sphi 0, %s34
      %s28 = sphi 0, %s26
      %s29 = sphi 0, %s27
      %s30 = sphi 0, %s28
      %s31 = sphi 0, %s29
      %s39 = sphi 0, %s39
      %s41 = sphi 0, %s39
      %s42 = sphi 0, %s41
      %s56 = sphi 0, %s42
      %s64 = sphi 0, %s66
      %s67 = sphi 0, %s64
      %s68 = sphi 0, %s67
      %s84 = sphi 0, %s68
      %s92 = sphi 0, %s94
      %s95 = sphi 0, %s92
      %s96 = sphi 0, %s95
      %s112 = sphi 0, %s96
      %s120 = sphi 0, %s122
      %s123 = sphi 0, %s120
      %s124 = sphi 0, %s123
      %s140 = sphi 0, %s124
    $region4: #{tpu_custom_call.1} parent=1 // loop_header_branch
      %22 = sbr.rel (%p20) target = $region8
    $region5: #{tpu_custom_call.1} parent=1 // loop_body
      %s24 = ssub.s32 %s19, 1
      %s25 = ssub.s32 %s19, 2
      %s32 = sadd.s32 1, %s27
      %p33 = scmp.ge.s32.totalorder %s32, 1
      %s34 = scalar_select %p33, 0, %s32
      %s35 = sadd.s32 1, %s26
      %s36 = scalar_select %p33, %s35, %s26
      %p37 = scmp.ge.s32.totalorder %s36, 2
      %s38 = scalar_select %p37, 0, %s36
      %s40 = sadd.s32 %s39, 1
      %p43 = scmp.eq.s32.totalorder %s19, 1
      %p44 = scmp.ne.s32.totalorder %s39, %s41
      %p45 = scmp.eq.s32.totalorder %s19, 0
      %p46 = por %p44, %p45
      %p47 = scmp.ne.s32.totalorder %s39, %s41
      %p48 = scmp.eq.s32.totalorder %s24, 1
      %p49 = por %p47, %p48
      %p50 = scmp.ne.s32.totalorder %s41, %s42
      %p51 = scmp.eq.s32.totalorder %s24, 0
      %p52 = por %p50, %p51
      %p53 = scmp.ne.s32.totalorder %s41, %s42
      %p54 = scmp.eq.s32.totalorder %s25, 1
      %p55 = por %p53, %p54
      %p57 = scmp.ne.s32.totalorder %s42, %s56
      %p58 = scmp.eq.s32.totalorder %s25, 0
      %p59 = por %p57, %p58
      %s60 = ssub.s32 %s26, %s38
      %s61 = ssub.s32 %s27, %s34
      %s62 = sor.u32 %s60, %s61
      %p63 = scmp.eq.s32.totalorder %s62, 0
      %s65 = sadd.s32 %s64, 1
      %s66 = scalar_select %p63, %s64, %s65
      %p69 = pneg %p63
      %p70 = scmp.eq.s32.totalorder %s19, 1
      %p71 = por %p69, %p70
      %p72 = scmp.ne.s32.totalorder %s64, %s67
      %p73 = scmp.eq.s32.totalorder %s19, 0
      %p74 = por %p72, %p73
      %p75 = scmp.ne.s32.totalorder %s64, %s67
      %p76 = scmp.eq.s32.totalorder %s24, 1
      %p77 = por %p75, %p76
      %p78 = scmp.ne.s32.totalorder %s67, %s68
      %p79 = scmp.eq.s32.totalorder %s24, 0
      %p80 = por %p78, %p79
      %p81 = scmp.ne.s32.totalorder %s67, %s68
      %p82 = scmp.eq.s32.totalorder %s25, 1
      %p83 = por %p81, %p82
      %p85 = scmp.ne.s32.totalorder %s68, %s84
      %p86 = scmp.eq.s32.totalorder %s25, 0
      %p87 = por %p85, %p86
      %s88 = ssub.s32 %s26, %s38
      %s89 = ssub.s32 %s27, %s34
      %s90 = sor.u32 %s88, %s89
      %p91 = scmp.eq.s32.totalorder %s90, 0
      %s93 = sadd.s32 %s92, 1
      %s94 = scalar_select %p91, %s92, %s93
      %p97 = pneg %p91
      %p98 = scmp.eq.s32.totalorder %s19, 1
      %p99 = por %p97, %p98
      %p100 = scmp.ne.s32.totalorder %s92, %s95
      %p101 = scmp.eq.s32.totalorder %s19, 0
      %p102 = por %p100, %p101
      %p103 = scmp.ne.s32.totalorder %s92, %s95
      %p104 = scmp.eq.s32.totalorder %s24, 1
      %p105 = por %p103, %p104
      %p106 = scmp.ne.s32.totalorder %s95, %s96
      %p107 = scmp.eq.s32.totalorder %s24, 0
      %p108 = por %p106, %p107
      %p109 = scmp.ne.s32.totalorder %s95, %s96
      %p110 = scmp.eq.s32.totalorder %s25, 1
      %p111 = por %p109, %p110
      %p113 = scmp.ne.s32.totalorder %s96, %s112
      %p114 = scmp.eq.s32.totalorder %s25, 0
      %p115 = por %p113, %p114
      %s116 = ssub.s32 %s26, %s38
      %s117 = ssub.s32 %s27, %s34
      %s118 = sor.u32 %s116, %s117
      %p119 = scmp.eq.s32.totalorder %s118, 0
      %s121 = sadd.s32 %s120, 1
      %s122 = scalar_select %p119, %s120, %s121
      %p125 = pneg %p119
      %p126 = scmp.eq.s32.totalorder %s19, 1
      %p127 = por %p125, %p126
      %p128 = scmp.ne.s32.totalorder %s120, %s123
      %p129 = scmp.eq.s32.totalorder %s19, 0
      %p130 = por %p128, %p129
      %p131 = scmp.ne.s32.totalorder %s120, %s123
      %p132 = scmp.eq.s32.totalorder %s24, 1
      %p133 = por %p131, %p132
      %p134 = scmp.ne.s32.totalorder %s123, %s124
      %p135 = scmp.eq.s32.totalorder %s24, 0
      %p136 = por %p134, %p135
      %p137 = scmp.ne.s32.totalorder %s123, %s124
      %p138 = scmp.eq.s32.totalorder %s25, 1
      %p139 = por %p137, %p138
      %p141 = scmp.ne.s32.totalorder %s124, %s140
      %p142 = scmp.eq.s32.totalorder %s25, 0
      %p143 = por %p141, %p142
      %p144 = scmp.le.s32.totalorder 1, %s19
      %p145 = scmp.lt.s32.totalorder %s19, 3
      %p146 = pnand %p144, %p145
      %p147 = pneg %p146
      // Predicated region
      $region9: #{tpu_custom_call.1} parent=5 // pred_check
        _
      $region10: #{tpu_custom_call.1} parent=5 // pred_check_branch
        %149 = sbr.rel (%p146) target = $region12
      $region11: #{tpu_custom_call.1} parent=5 // pred_region
        %s150 = ssub.s32 %s19, 1
        // Predicated region
        $region13: #{tpu_custom_call.1} parent=11 // pred_check
          %p151 = pneg %p52
        $region14: #{tpu_custom_call.1} parent=11 // pred_check_branch
          %153 = sbr.rel (%p151) target = $region16
        $region15: #{tpu_custom_call.1} parent=11 // pred_region
          %s155 = ssub.s32 64, 64
          %156 = vsyncadd [#allocation5], %s155
          %159 = dma.hbm_to_smem %s0, 64, [#allocation2], [#allocation5]
        $region16: #{tpu_custom_call.1} parent=11 // pred_fallthru
          _
      $region12: #{tpu_custom_call.1} parent=5 // pred_fallthru
        _
      %p160 = scmp.lt.s32.totalorder %s19, 2
      // Predicated region
      $region17: #{tpu_custom_call.1} parent=5 // pred_check
        %p161 = pneg %p160
      $region18: #{tpu_custom_call.1} parent=5 // pred_check_branch
        %163 = sbr.rel (%p161) target = $region20
      $region19: #{tpu_custom_call.1} parent=5 // pred_region
        // Predicated region
        $region21: #{tpu_custom_call.1} parent=19 // pred_check
          %p164 = pneg %p74
        $region22: #{tpu_custom_call.1} parent=19 // pred_check_branch
          %166 = sbr.rel (%p164) target = $region24
        $region23: #{tpu_custom_call.1} parent=19 // pred_region
          %s167 = sand.u32 %s64, 1
          %s168 = scalar_lea.sflag [#allocation3], %s167
          %s169 = sand.u32 %s64, 1
          %s170 = smul.addr %s169, 12
          %s171 = scalar_lea.vmem [#allocation6], %s170
          %s173 = ssub.s32 192, 192
          %174 = vsyncadd %s168, %s173
          %s175 = smul.addr %s26, 6
          %s176 = sadd.s32 %s27, %s175
          %s177 = smul.addr %s176, 32
          %s178 = scalar_lea.hbm %s1, %s177
          %s179 = sshll.u32 %s171, 4
          %s180 = int_to_ptr.vmem [resolvable:$true] %s179
          %185 = dma.hbm_to_vmem [thread:$0]  %s178, 192, %s180, %s168, 32, 32, 2
        $region24: #{tpu_custom_call.1} parent=19 // pred_fallthru
          _
        // Predicated region
        $region25: #{tpu_custom_call.1} parent=19 // pred_check
          %p186 = pneg %p102
        $region26: #{tpu_custom_call.1} parent=19 // pred_check_branch
          %188 = sbr.rel (%p186) target = $region28
        $region27: #{tpu_custom_call.1} parent=19 // pred_region
          %s189 = sand.u32 %s92, 1
          %s190 = scalar_lea.sflag [#allocation8], %s189
          %s191 = sand.u32 %s92, 1
          %s192 = smul.addr %s191, 6
          %s193 = scalar_lea.vmem [#allocation7], %s192
          %s195 = ssub.s32 96, 96
          %196 = vsyncadd %s190, %s195
          %s197 = smul.addr %s26, 3
          %s198 = sadd.s32 %s27, %s197
          %s199 = smul.addr %s198, 32
          %s200 = scalar_lea.hbm %s2, %s199
          %s201 = sshll.u32 %s193, 4
          %s202 = int_to_ptr.vmem [resolvable:$true] %s201
          %207 = dma.hbm_to_vmem [thread:$0]  %s200, 96, %s202, %s190, 32, 32, 2
        $region28: #{tpu_custom_call.1} parent=19 // pred_fallthru
          _
      $region20: #{tpu_custom_call.1} parent=5 // pred_fallthru
        _
      %p208 = scmp.le.s32.totalorder 1, %s19
      %p209 = scmp.lt.s32.totalorder %s19, 3
      %p210 = pnand %p208, %p209
      %p211 = pneg %p210
      // Predicated region
      $region29: #{tpu_custom_call.1} parent=5 // pred_check
        _
      $region30: #{tpu_custom_call.1} parent=5 // pred_check_branch
        %213 = sbr.rel (%p210) target = $region32
      $region31: #{tpu_custom_call.1} parent=5 // pred_region
        %s214 = ssub.s32 %s19, 1
        // Predicated region
        $region33: #{tpu_custom_call.1} parent=31 // pred_check
          %p215 = pneg %p52
        $region34: #{tpu_custom_call.1} parent=31 // pred_check_branch
          %217 = sbr.rel (%p215) target = $region36
        $region35: #{tpu_custom_call.1} parent=31 // pred_region
          %218 = dma.done [#allocation5], 64
        $region36: #{tpu_custom_call.1} parent=31 // pred_fallthru
          _
        %s219 = sand.u32 %s67, 1
        %s220 = scalar_lea.sflag [#allocation3], %s219
        %s221 = sand.u32 %s67, 1
        %s222 = smul.addr %s221, 12
        %s223 = scalar_lea.vmem [#allocation6], %s222
        // Predicated region
        $region37: #{tpu_custom_call.1} parent=31 // pred_check
          %p224 = pneg %p80
        $region38: #{tpu_custom_call.1} parent=31 // pred_check_branch
          %226 = sbr.rel (%p224) target = $region40
        $region39: #{tpu_custom_call.1} parent=31 // pred_region
          %227 = dma.done %s220, 192
        $region40: #{tpu_custom_call.1} parent=31 // pred_fallthru
          _
        %s228 = sand.u32 %s95, 1
        %s229 = scalar_lea.sflag [#allocation8], %s228
        %s230 = sand.u32 %s95, 1
        %s231 = smul.addr %s230, 6
        %s232 = scalar_lea.vmem [#allocation7], %s231
        // Predicated region
        $region41: #{tpu_custom_call.1} parent=31 // pred_check
          %p233 = pneg %p108
        $region42: #{tpu_custom_call.1} parent=31 // pred_check_branch
          %235 = sbr.rel (%p233) target = $region44
        $region43: #{tpu_custom_call.1} parent=31 // pred_region
          %236 = dma.done %s229, 96
        $region44: #{tpu_custom_call.1} parent=31 // pred_fallthru
          _
        %237 = sfence
        %p238 = pneg %p52
        %p239 = pneg %p49
        %s240 = sand.u32 %s67, 1
        %s241 = scalar_lea.sflag [#allocation3], %s240
        %s242 = sand.u32 %s67, 1
        %s243 = smul.addr %s242, 12
        %s244 = scalar_lea.vmem [#allocation6], %s243
        %p245 = pneg %p80
        %p246 = pneg %p77
        %s247 = sand.u32 %s95, 1
        %s248 = scalar_lea.sflag [#allocation8], %s247
        %s249 = sand.u32 %s95, 1
        %s250 = smul.addr %s249, 6
        %s251 = scalar_lea.vmem [#allocation7], %s250
        %p252 = pneg %p108
        %p253 = pneg %p105
        %p254 = pneg %p136
        %p255 = pneg %p133
        %s256 = sand.u32 %s123, 1
        %s257 = scalar_lea.sflag [#allocation4], %s256
        %s258 = sand.u32 %s123, 1
        %s259 = smul.addr %s258, 6
        %s260 = scalar_lea.vmem [#allocation9], %s259
        %s261 = sld [smem:[#allocation2]]
        %s262 = sld [smem:[#allocation2 + $0x1]]
        %s263 = sld [smem:[#allocation2 + $0x2]]
        %s264 = sld [smem:[#allocation2 + $0x3]]
        %s265 = sld [smem:[#allocation2 + $0x4]]
        %s266 = sld [smem:[#allocation2 + $0x5]]
        %s267 = sld [smem:[#allocation2 + $0x6]]
        %s268 = sld [smem:[#allocation2 + $0x7]]
        %s269 = sld [smem:[#allocation2 + $0x8]]
        %s270 = sld [smem:[#allocation2 + $0x9]]
        %s271 = sld [smem:[#allocation2 + $0xa]]
        %s272 = sld [smem:[#allocation2 + $0xb]]
        %s273 = sld [smem:[#allocation2 + $0xc]]
        %s274 = sld [smem:[#allocation2 + $0xd]]
        %s275 = sld [smem:[#allocation2 + $0xe]]
        %s276 = sld [smem:[#allocation2 + $0xf]]
        %s277 = sld [smem:[#allocation2 + $0x10]]
        %s278 = sld [smem:[#allocation2 + $0x11]]
        %s279 = sld [smem:[#allocation2 + $0x12]]
        %s280 = sld [smem:[#allocation2 + $0x13]]
        %s281 = sld [smem:[#allocation2 + $0x14]]
        %s282 = sld [smem:[#allocation2 + $0x15]]
        %s283 = sld [smem:[#allocation2 + $0x16]]
        %s284 = sld [smem:[#allocation2 + $0x17]]
        %s285 = sld [smem:[#allocation2 + $0x18]]
        %s286 = sld [smem:[#allocation2 + $0x19]]
        %s287 = sld [smem:[#allocation2 + $0x1a]]
        %s288 = sld [smem:[#allocation2 + $0x1b]]
        %s289 = sld [smem:[#allocation2 + $0x1c]]
        %s290 = sld [smem:[#allocation2 + $0x1d]]
        %s291 = sld [smem:[#allocation2 + $0x1e]]
        %s292 = sld [smem:[#allocation2 + $0x1f]]
        %s293 = sld [smem:[#allocation2 + $0x20]]
        %s294 = sld [smem:[#allocation2 + $0x21]]
        %s295 = sld [smem:[#allocation2 + $0x22]]
        %s296 = sld [smem:[#allocation2 + $0x23]]
        %s297 = sld [smem:[#allocation2 + $0x24]]
        %s298 = sld [smem:[#allocation2 + $0x25]]
        %s299 = sld [smem:[#allocation2 + $0x26]]
        %s300 = sld [smem:[#allocation2 + $0x27]]
        %s301 = sld [smem:[#allocation2 + $0x28]]
        %s302 = sld [smem:[#allocation2 + $0x29]]
        %s303 = sld [smem:[#allocation2 + $0x2a]]
        %s304 = sld [smem:[#allocation2 + $0x2b]]
        %s305 = sld [smem:[#allocation2 + $0x2c]]
        %s306 = sld [smem:[#allocation2 + $0x2d]]
        %s307 = sld [smem:[#allocation2 + $0x2e]]
        %s308 = sld [smem:[#allocation2 + $0x2f]]
        %s309 = sld [smem:[#allocation2 + $0x30]]
        %s310 = sld [smem:[#allocation2 + $0x31]]
        %s311 = sld [smem:[#allocation2 + $0x32]]
        %s312 = sld [smem:[#allocation2 + $0x33]]
        %s313 = sld [smem:[#allocation2 + $0x34]]
        %s314 = sld [smem:[#allocation2 + $0x35]]
        %s315 = sld [smem:[#allocation2 + $0x36]]
        %s316 = sld [smem:[#allocation2 + $0x37]]
        %s317 = sld [smem:[#allocation2 + $0x38]]
        %s318 = sld [smem:[#allocation2 + $0x39]]
        %s319 = sld [smem:[#allocation2 + $0x3a]]
        %s320 = sld [smem:[#allocation2 + $0x3b]]
        %s321 = sld [smem:[#allocation2 + $0x3c]]
        %s322 = sld [smem:[#allocation2 + $0x3d]]
        %s323 = sld [smem:[#allocation2 + $0x3e]]
        %s324 = sld [smem:[#allocation2 + $0x3f]]
        %s325 = sld [smem:[#allocation2 + $0x40]]
        %s326 = sld [smem:[#allocation2 + $0x41]]
        %s327 = sld [smem:[#allocation2 + $0x42]]
        %s328 = sld [smem:[#allocation2 + $0x43]]
        %s329 = sld [smem:[#allocation2 + $0x44]]
        %s330 = sld [smem:[#allocation2 + $0x45]]
        %s331 = sld [smem:[#allocation2 + $0x46]]
        %s332 = sld [smem:[#allocation2 + $0x47]]
        %s333 = sld [smem:[#allocation2 + $0x48]]
        %s334 = sld [smem:[#allocation2 + $0x49]]
        %s335 = sld [smem:[#allocation2 + $0x4a]]
        %s336 = sld [smem:[#allocation2 + $0x4b]]
        %s337 = sld [smem:[#allocation2 + $0x4c]]
        %s338 = sld [smem:[#allocation2 + $0x4d]]
        %s339 = sld [smem:[#allocation2 + $0x4e]]
        %s340 = sld [smem:[#allocation2 + $0x4f]]
        %s341 = sld [smem:[#allocation2 + $0x50]]
        %s342 = sld [smem:[#allocation2 + $0x51]]
        %s343 = sld [smem:[#allocation2 + $0x52]]
        %s344 = sld [smem:[#allocation2 + $0x53]]
        %s345 = sld [smem:[#allocation2 + $0x54]]
        %s346 = sld [smem:[#allocation2 + $0x55]]
        %s347 = sld [smem:[#allocation2 + $0x56]]
        %s348 = sld [smem:[#allocation2 + $0x57]]
        %s349 = sld [smem:[#allocation2 + $0x58]]
        %s350 = sld [smem:[#allocation2 + $0x59]]
        %s351 = sld [smem:[#allocation2 + $0x5a]]
        %s352 = sld [smem:[#allocation2 + $0x5b]]
        %s353 = sld [smem:[#allocation2 + $0x5c]]
        %s354 = sld [smem:[#allocation2 + $0x5d]]
        %s355 = sld [smem:[#allocation2 + $0x5e]]
        %s356 = sld [smem:[#allocation2 + $0x5f]]
        %s357 = sld [smem:[#allocation2 + $0x60]]
        %s358 = sld [smem:[#allocation2 + $0x61]]
        %s359 = sld [smem:[#allocation2 + $0x62]]
        %s360 = sld [smem:[#allocation2 + $0x63]]
        %s361 = sld [smem:[#allocation2 + $0x64]]
        %s362 = sld [smem:[#allocation2 + $0x65]]
        %s363 = sld [smem:[#allocation2 + $0x66]]
        %s364 = sld [smem:[#allocation2 + $0x67]]
        %s365 = sld [smem:[#allocation2 + $0x68]]
        %s366 = sld [smem:[#allocation2 + $0x69]]
        %s367 = sld [smem:[#allocation2 + $0x6a]]
        %s368 = sld [smem:[#allocation2 + $0x6b]]
        %s369 = sld [smem:[#allocation2 + $0x6c]]
        %s370 = sld [smem:[#allocation2 + $0x6d]]
        %s371 = sld [smem:[#allocation2 + $0x6e]]
        %s372 = sld [smem:[#allocation2 + $0x6f]]
        %s373 = sld [smem:[#allocation2 + $0x70]]
        %s374 = sld [smem:[#allocation2 + $0x71]]
        %s375 = sld [smem:[#allocation2 + $0x72]]
        %s376 = sld [smem:[#allocation2 + $0x73]]
        %s377 = sld [smem:[#allocation2 + $0x74]]
        %s378 = sld [smem:[#allocation2 + $0x75]]
        %s379 = sld [smem:[#allocation2 + $0x76]]
        %s380 = sld [smem:[#allocation2 + $0x77]]
        %s381 = sld [smem:[#allocation2 + $0x78]]
        %s382 = sld [smem:[#allocation2 + $0x79]]
        %s383 = sld [smem:[#allocation2 + $0x7a]]
        %s384 = sld [smem:[#allocation2 + $0x7b]]
        %s385 = sld [smem:[#allocation2 + $0x7c]]
        %s386 = sld [smem:[#allocation2 + $0x7d]]
        %s387 = sld [smem:[#allocation2 + $0x7e]]
        %s388 = sld [smem:[#allocation2 + $0x7f]]
        %s389 = sld [smem:[#allocation2 + $0x80]]
        %s390 = sld [smem:[#allocation2 + $0x81]]
        %s391 = sld [smem:[#allocation2 + $0x82]]
        %s392 = sld [smem:[#allocation2 + $0x83]]
        %s393 = sld [smem:[#allocation2 + $0x84]]
        %s394 = sld [smem:[#allocation2 + $0x85]]
        %s395 = sld [smem:[#allocation2 + $0x86]]
        %s396 = sld [smem:[#allocation2 + $0x87]]
        %s397 = sld [smem:[#allocation2 + $0x88]]
        %s398 = sld [smem:[#allocation2 + $0x89]]
        %s399 = sld [smem:[#allocation2 + $0x8a]]
        %s400 = sld [smem:[#allocation2 + $0x8b]]
        %s401 = sld [smem:[#allocation2 + $0x8c]]
        %s402 = sld [smem:[#allocation2 + $0x8d]]
        %s403 = sld [smem:[#allocation2 + $0x8e]]
        %s404 = sld [smem:[#allocation2 + $0x8f]]
        %s405 = sld [smem:[#allocation2 + $0x90]]
        %s406 = sld [smem:[#allocation2 + $0x91]]
        %s407 = sld [smem:[#allocation2 + $0x92]]
        %s408 = sld [smem:[#allocation2 + $0x93]]
        %s409 = sld [smem:[#allocation2 + $0x94]]
        %s410 = sld [smem:[#allocation2 + $0x95]]
        %s411 = sld [smem:[#allocation2 + $0x96]]
        %s412 = sld [smem:[#allocation2 + $0x97]]
        %s413 = sld [smem:[#allocation2 + $0x98]]
        %s414 = sld [smem:[#allocation2 + $0x99]]
        %s415 = sld [smem:[#allocation2 + $0x9a]]
        %s416 = sld [smem:[#allocation2 + $0x9b]]
        %s417 = sld [smem:[#allocation2 + $0x9c]]
        %s418 = sld [smem:[#allocation2 + $0x9d]]
        %s419 = sld [smem:[#allocation2 + $0x9e]]
        %s420 = sld [smem:[#allocation2 + $0x9f]]
        %s421 = sld [smem:[#allocation2 + $0xa0]]
        %s422 = sld [smem:[#allocation2 + $0xa1]]
        %s423 = sld [smem:[#allocation2 + $0xa2]]
        %s424 = sld [smem:[#allocation2 + $0xa3]]
        %s425 = sld [smem:[#allocation2 + $0xa4]]
        %s426 = sld [smem:[#allocation2 + $0xa5]]
        %s427 = sld [smem:[#allocation2 + $0xa6]]
        %s428 = sld [smem:[#allocation2 + $0xa7]]
        %s429 = sld [smem:[#allocation2 + $0xa8]]
        %s430 = sld [smem:[#allocation2 + $0xa9]]
        %s431 = sld [smem:[#allocation2 + $0xaa]]
        %s432 = sld [smem:[#allocation2 + $0xab]]
        %s433 = sld [smem:[#allocation2 + $0xac]]
        %s434 = sld [smem:[#allocation2 + $0xad]]
        %s435 = sld [smem:[#allocation2 + $0xae]]
        %s436 = sld [smem:[#allocation2 + $0xaf]]
        %s437 = sld [smem:[#allocation2 + $0xb0]]
        %s438 = sld [smem:[#allocation2 + $0xb1]]
        %s439 = sld [smem:[#allocation2 + $0xb2]]
        %s440 = sld [smem:[#allocation2 + $0xb3]]
        %s441 = sld [smem:[#allocation2 + $0xb4]]
        %s442 = sld [smem:[#allocation2 + $0xb5]]
        %s443 = sld [smem:[#allocation2 + $0xb6]]
        %s444 = sld [smem:[#allocation2 + $0xb7]]
        %s445 = sld [smem:[#allocation2 + $0xb8]]
        %s446 = sld [smem:[#allocation2 + $0xb9]]
        %s447 = sld [smem:[#allocation2 + $0xba]]
        %s448 = sld [smem:[#allocation2 + $0xbb]]
        %s449 = sld [smem:[#allocation2 + $0xbc]]
        %s450 = sld [smem:[#allocation2 + $0xbd]]
        %s451 = sld [smem:[#allocation2 + $0xbe]]
        %s452 = sld [smem:[#allocation2 + $0xbf]]
        %s453 = sld [smem:[#allocation2 + $0xc0]]
        %s454 = sld [smem:[#allocation2 + $0xc1]]
        %s455 = sld [smem:[#allocation2 + $0xc2]]
        %s456 = sld [smem:[#allocation2 + $0xc3]]
        %s457 = sld [smem:[#allocation2 + $0xc4]]
        %s458 = sld [smem:[#allocation2 + $0xc5]]
        %s459 = sld [smem:[#allocation2 + $0xc6]]
        %s460 = sld [smem:[#allocation2 + $0xc7]]
        %s461 = sld [smem:[#allocation2 + $0xc8]]
        %s462 = sld [smem:[#allocation2 + $0xc9]]
        %s463 = sld [smem:[#allocation2 + $0xca]]
        %s464 = sld [smem:[#allocation2 + $0xcb]]
        %s465 = sld [smem:[#allocation2 + $0xcc]]
        %s466 = sld [smem:[#allocation2 + $0xcd]]
        %s467 = sld [smem:[#allocation2 + $0xce]]
        %s468 = sld [smem:[#allocation2 + $0xcf]]
        %s469 = sld [smem:[#allocation2 + $0xd0]]
        %s470 = sld [smem:[#allocation2 + $0xd1]]
        %s471 = sld [smem:[#allocation2 + $0xd2]]
        %s472 = sld [smem:[#allocation2 + $0xd3]]
        %s473 = sld [smem:[#allocation2 + $0xd4]]
        %s474 = sld [smem:[#allocation2 + $0xd5]]
        %s475 = sld [smem:[#allocation2 + $0xd6]]
        %s476 = sld [smem:[#allocation2 + $0xd7]]
        %s477 = sld [smem:[#allocation2 + $0xd8]]
        %s478 = sld [smem:[#allocation2 + $0xd9]]
        %s479 = sld [smem:[#allocation2 + $0xda]]
        %s480 = sld [smem:[#allocation2 + $0xdb]]
        %s481 = sld [smem:[#allocation2 + $0xdc]]
        %s482 = sld [smem:[#allocation2 + $0xdd]]
        %s483 = sld [smem:[#allocation2 + $0xde]]
        %s484 = sld [smem:[#allocation2 + $0xdf]]
        %s485 = sld [smem:[#allocation2 + $0xe0]]
        %s486 = sld [smem:[#allocation2 + $0xe1]]
        %s487 = sld [smem:[#allocation2 + $0xe2]]
        %s488 = sld [smem:[#allocation2 + $0xe3]]
        %s489 = sld [smem:[#allocation2 + $0xe4]]
        %s490 = sld [smem:[#allocation2 + $0xe5]]
        %s491 = sld [smem:[#allocation2 + $0xe6]]
        %s492 = sld [smem:[#allocation2 + $0xe7]]
        %s493 = sld [smem:[#allocation2 + $0xe8]]
        %s494 = sld [smem:[#allocation2 + $0xe9]]
        %s495 = sld [smem:[#allocation2 + $0xea]]
        %s496 = sld [smem:[#allocation2 + $0xeb]]
        %s497 = sld [smem:[#allocation2 + $0xec]]
        %s498 = sld [smem:[#allocation2 + $0xed]]
        %s499 = sld [smem:[#allocation2 + $0xee]]
        %s500 = sld [smem:[#allocation2 + $0xef]]
        %s501 = sld [smem:[#allocation2 + $0xf0]]
        %s502 = sld [smem:[#allocation2 + $0xf1]]
        %s503 = sld [smem:[#allocation2 + $0xf2]]
        %s504 = sld [smem:[#allocation2 + $0xf3]]
        %s505 = sld [smem:[#allocation2 + $0xf4]]
        %s506 = sld [smem:[#allocation2 + $0xf5]]
        %s507 = sld [smem:[#allocation2 + $0xf6]]
        %s508 = sld [smem:[#allocation2 + $0xf7]]
        %s509 = sld [smem:[#allocation2 + $0xf8]]
        %s510 = sld [smem:[#allocation2 + $0xf9]]
        %s511 = sld [smem:[#allocation2 + $0xfa]]
        %s512 = sld [smem:[#allocation2 + $0xfb]]
        %s513 = sld [smem:[#allocation2 + $0xfc]]
        %s514 = sld [smem:[#allocation2 + $0xfd]]
        %s515 = sld [smem:[#allocation2 + $0xfe]]
        %s516 = sld [smem:[#allocation2 + $0xff]]
        %s517 = sld [smem:[#allocation2 + $0x100]]
        %s518 = sld [smem:[#allocation2 + $0x101]]
        %s519 = sld [smem:[#allocation2 + $0x102]]
        %s520 = sld [smem:[#allocation2 + $0x103]]
        %s521 = sld [smem:[#allocation2 + $0x104]]
        %s522 = sld [smem:[#allocation2 + $0x105]]
        %s523 = sld [smem:[#allocation2 + $0x106]]
        %s524 = sld [smem:[#allocation2 + $0x107]]
        %s525 = sld [smem:[#allocation2 + $0x108]]
        %s526 = sld [smem:[#allocation2 + $0x109]]
        %s527 = sld [smem:[#allocation2 + $0x10a]]
        %s528 = sld [smem:[#allocation2 + $0x10b]]
        %s529 = sld [smem:[#allocation2 + $0x10c]]
        %s530 = sld [smem:[#allocation2 + $0x10d]]
        %s531 = sld [smem:[#allocation2 + $0x10e]]
        %s532 = sld [smem:[#allocation2 + $0x10f]]
        %s533 = sld [smem:[#allocation2 + $0x110]]
        %s534 = sld [smem:[#allocation2 + $0x111]]
        %s535 = sld [smem:[#allocation2 + $0x112]]
        %s536 = sld [smem:[#allocation2 + $0x113]]
        %s537 = sld [smem:[#allocation2 + $0x114]]
        %s538 = sld [smem:[#allocation2 + $0x115]]
        %s539 = sld [smem:[#allocation2 + $0x116]]
        %s540 = sld [smem:[#allocation2 + $0x117]]
        %s541 = sld [smem:[#allocation2 + $0x118]]
        %s542 = sld [smem:[#allocation2 + $0x119]]
        %s543 = sld [smem:[#allocation2 + $0x11a]]
        %s544 = sld [smem:[#allocation2 + $0x11b]]
        %s545 = sld [smem:[#allocation2 + $0x11c]]
        %s546 = sld [smem:[#allocation2 + $0x11d]]
        %s547 = sld [smem:[#allocation2 + $0x11e]]
        %s548 = sld [smem:[#allocation2 + $0x11f]]
        %s549 = sld [smem:[#allocation2 + $0x120]]
        %s550 = sld [smem:[#allocation2 + $0x121]]
        %s551 = sld [smem:[#allocation2 + $0x122]]
        %s552 = sld [smem:[#allocation2 + $0x123]]
        %s553 = sld [smem:[#allocation2 + $0x124]]
        %s554 = sld [smem:[#allocation2 + $0x125]]
        %s555 = sld [smem:[#allocation2 + $0x126]]
        %s556 = sld [smem:[#allocation2 + $0x127]]
        %s557 = sld [smem:[#allocation2 + $0x128]]
        %s558 = sld [smem:[#allocation2 + $0x129]]
        %s559 = sld [smem:[#allocation2 + $0x12a]]
        %s560 = sld [smem:[#allocation2 + $0x12b]]
        %s561 = sld [smem:[#allocation2 + $0x12c]]
        %s562 = sld [smem:[#allocation2 + $0x12d]]
        %s563 = sld [smem:[#allocation2 + $0x12e]]
        %s564 = sld [smem:[#allocation2 + $0x12f]]
        %s565 = sld [smem:[#allocation2 + $0x130]]
        %s566 = sld [smem:[#allocation2 + $0x131]]
        %s567 = sld [smem:[#allocation2 + $0x132]]
        %s568 = sld [smem:[#allocation2 + $0x133]]
        %s569 = sld [smem:[#allocation2 + $0x134]]
        %s570 = sld [smem:[#allocation2 + $0x135]]
        %s571 = sld [smem:[#allocation2 + $0x136]]
        %s572 = sld [smem:[#allocation2 + $0x137]]
        %s573 = sld [smem:[#allocation2 + $0x138]]
        %s574 = sld [smem:[#allocation2 + $0x139]]
        %s575 = sld [smem:[#allocation2 + $0x13a]]
        %s576 = sld [smem:[#allocation2 + $0x13b]]
        %s577 = sld [smem:[#allocation2 + $0x13c]]
        %s578 = sld [smem:[#allocation2 + $0x13d]]
        %s579 = sld [smem:[#allocation2 + $0x13e]]
        %s580 = sld [smem:[#allocation2 + $0x13f]]
        %s581 = sld [smem:[#allocation2 + $0x140]]
        %s582 = sld [smem:[#allocation2 + $0x141]]
        %s583 = sld [smem:[#allocation2 + $0x142]]
        %s584 = sld [smem:[#allocation2 + $0x143]]
        %s585 = sld [smem:[#allocation2 + $0x144]]
        %s586 = sld [smem:[#allocation2 + $0x145]]
        %s587 = sld [smem:[#allocation2 + $0x146]]
        %s588 = sld [smem:[#allocation2 + $0x147]]
        %s589 = sld [smem:[#allocation2 + $0x148]]
        %s590 = sld [smem:[#allocation2 + $0x149]]
        %s591 = sld [smem:[#allocation2 + $0x14a]]
        %s592 = sld [smem:[#allocation2 + $0x14b]]
        %s593 = sld [smem:[#allocation2 + $0x14c]]
        %s594 = sld [smem:[#allocation2 + $0x14d]]
        %s595 = sld [smem:[#allocation2 + $0x14e]]
        %s596 = sld [smem:[#allocation2 + $0x14f]]
        %s597 = sld [smem:[#allocation2 + $0x150]]
        %s598 = sld [smem:[#allocation2 + $0x151]]
        %s599 = sld [smem:[#allocation2 + $0x152]]
        %s600 = sld [smem:[#allocation2 + $0x153]]
        %s601 = sld [smem:[#allocation2 + $0x154]]
        %s602 = sld [smem:[#allocation2 + $0x155]]
        %s603 = sld [smem:[#allocation2 + $0x156]]
        %s604 = sld [smem:[#allocation2 + $0x157]]
        %s605 = sld [smem:[#allocation2 + $0x158]]
        %s606 = sld [smem:[#allocation2 + $0x159]]
        %s607 = sld [smem:[#allocation2 + $0x15a]]
        %s608 = sld [smem:[#allocation2 + $0x15b]]
        %s609 = sld [smem:[#allocation2 + $0x15c]]
        %s610 = sld [smem:[#allocation2 + $0x15d]]
        %s611 = sld [smem:[#allocation2 + $0x15e]]
        %s612 = sld [smem:[#allocation2 + $0x15f]]
        %s613 = sld [smem:[#allocation2 + $0x160]]
        %s614 = sld [smem:[#allocation2 + $0x161]]
        %s615 = sld [smem:[#allocation2 + $0x162]]
        %s616 = sld [smem:[#allocation2 + $0x163]]
        %s617 = sld [smem:[#allocation2 + $0x164]]
        %s618 = sld [smem:[#allocation2 + $0x165]]
        %s619 = sld [smem:[#allocation2 + $0x166]]
        %s620 = sld [smem:[#allocation2 + $0x167]]
        %s621 = sld [smem:[#allocation2 + $0x168]]
        %s622 = sld [smem:[#allocation2 + $0x169]]
        %s623 = sld [smem:[#allocation2 + $0x16a]]
        %s624 = sld [smem:[#allocation2 + $0x16b]]
        %s625 = sld [smem:[#allocation2 + $0x16c]]
        %s626 = sld [smem:[#allocation2 + $0x16d]]
        %s627 = sld [smem:[#allocation2 + $0x16e]]
        %s628 = sld [smem:[#allocation2 + $0x16f]]
        %s629 = sld [smem:[#allocation2 + $0x170]]
        %s630 = sld [smem:[#allocation2 + $0x171]]
        %s631 = sld [smem:[#allocation2 + $0x172]]
        %s632 = sld [smem:[#allocation2 + $0x173]]
        %s633 = sld [smem:[#allocation2 + $0x174]]
        %s634 = sld [smem:[#allocation2 + $0x175]]
        %s635 = sld [smem:[#allocation2 + $0x176]]
        %s636 = sld [smem:[#allocation2 + $0x177]]
        %s637 = sld [smem:[#allocation2 + $0x178]]
        %s638 = sld [smem:[#allocation2 + $0x179]]
        %s639 = sld [smem:[#allocation2 + $0x17a]]
        %s640 = sld [smem:[#allocation2 + $0x17b]]
        %s641 = sld [smem:[#allocation2 + $0x17c]]
        %s642 = sld [smem:[#allocation2 + $0x17d]]
        %s643 = sld [smem:[#allocation2 + $0x17e]]
        %s644 = sld [smem:[#allocation2 + $0x17f]]
        %s645 = sld [smem:[#allocation2 + $0x180]]
        %s646 = sld [smem:[#allocation2 + $0x181]]
        %s647 = sld [smem:[#allocation2 + $0x182]]
        %s648 = sld [smem:[#allocation2 + $0x183]]
        %s649 = sld [smem:[#allocation2 + $0x184]]
        %s650 = sld [smem:[#allocation2 + $0x185]]
        %s651 = sld [smem:[#allocation2 + $0x186]]
        %s652 = sld [smem:[#allocation2 + $0x187]]
        %s653 = sld [smem:[#allocation2 + $0x188]]
        %s654 = sld [smem:[#allocation2 + $0x189]]
        %s655 = sld [smem:[#allocation2 + $0x18a]]
        %s656 = sld [smem:[#allocation2 + $0x18b]]
        %s657 = sld [smem:[#allocation2 + $0x18c]]
        %s658 = sld [smem:[#allocation2 + $0x18d]]
        %s659 = sld [smem:[#allocation2 + $0x18e]]
        %s660 = sld [smem:[#allocation2 + $0x18f]]
        %s661 = sld [smem:[#allocation2 + $0x190]]
        %s662 = sld [smem:[#allocation2 + $0x191]]
        %s663 = sld [smem:[#allocation2 + $0x192]]
        %s664 = sld [smem:[#allocation2 + $0x193]]
        %s665 = sld [smem:[#allocation2 + $0x194]]
        %s666 = sld [smem:[#allocation2 + $0x195]]
        %s667 = sld [smem:[#allocation2 + $0x196]]
        %s668 = sld [smem:[#allocation2 + $0x197]]
        %s669 = sld [smem:[#allocation2 + $0x198]]
        %s670 = sld [smem:[#allocation2 + $0x199]]
        %s671 = sld [smem:[#allocation2 + $0x19a]]
        %s672 = sld [smem:[#allocation2 + $0x19b]]
        %s673 = sld [smem:[#allocation2 + $0x19c]]
        %s674 = sld [smem:[#allocation2 + $0x19d]]
        %s675 = sld [smem:[#allocation2 + $0x19e]]
        %s676 = sld [smem:[#allocation2 + $0x19f]]
        %s677 = sld [smem:[#allocation2 + $0x1a0]]
        %s678 = sld [smem:[#allocation2 + $0x1a1]]
        %s679 = sld [smem:[#allocation2 + $0x1a2]]
        %s680 = sld [smem:[#allocation2 + $0x1a3]]
        %s681 = sld [smem:[#allocation2 + $0x1a4]]
        %s682 = sld [smem:[#allocation2 + $0x1a5]]
        %s683 = sld [smem:[#allocation2 + $0x1a6]]
        %s684 = sld [smem:[#allocation2 + $0x1a7]]
        %s685 = sld [smem:[#allocation2 + $0x1a8]]
        %s686 = sld [smem:[#allocation2 + $0x1a9]]
        %s687 = sld [smem:[#allocation2 + $0x1aa]]
        %s688 = sld [smem:[#allocation2 + $0x1ab]]
        %s689 = sld [smem:[#allocation2 + $0x1ac]]
        %s690 = sld [smem:[#allocation2 + $0x1ad]]
        %s691 = sld [smem:[#allocation2 + $0x1ae]]
        %s692 = sld [smem:[#allocation2 + $0x1af]]
        %s693 = sld [smem:[#allocation2 + $0x1b0]]
        %s694 = sld [smem:[#allocation2 + $0x1b1]]
        %s695 = sld [smem:[#allocation2 + $0x1b2]]
        %v696 = vld [vmem:[%s223] sm:$0x3]
        %s697 = scalar_lea.vmem %s223, 2 [#allocation6]
        %v698 = vld [vmem:[%s697] sm:$0x3]
        %s699 = scalar_lea.vmem %s223, 4 [#allocation6]
        %v700 = vld [vmem:[%s699] sm:$0x3]
        %s701 = scalar_lea.vmem %s223, 6 [#allocation6]
        %v702 = vld [vmem:[%s701] sm:$0x3]
        %s703 = scalar_lea.vmem %s223, 8 [#allocation6]
        %v704 = vld [vmem:[%s703] sm:$0x3]
        %s705 = scalar_lea.vmem %s223, 10 [#allocation6]
        %v706 = vld [vmem:[%s705] sm:$0x3]
        %v707 = vstv %s261
        %v708 = vmul.f32 %v696, %v707
        %v709 = vstv %s262
        %v710 = vmul.f32 %v698, %v709
        %v711 = vadd.f32 %v708, %v710
        %v712 = vstv %s263
        %v713 = vmul.f32 %v700, %v712
        %v714 = vadd.f32 %v711, %v713
        %v715 = vstv %s264
        %v716 = vmul.f32 %v702, %v715
        %v717 = vadd.f32 %v714, %v716
        %v718 = vstv %s265
        %v719 = vmul.f32 %v704, %v718
        %v720 = vadd.f32 %v717, %v719
        %v721 = vstv %s266
        %v722 = vmul.f32 %v706, %v721
        %v723 = vadd.f32 %v720, %v722
        %v724 = vstv %s357
        %v725 = vadd.f32 %v723, %v724
        %v726 = vmax.f32 %v725, 0.0
        %v727 = vstv %s267
        %v728 = vmul.f32 %v696, %v727
        %v729 = vstv %s268
        %v730 = vmul.f32 %v698, %v729
        %v731 = vadd.f32 %v728, %v730
        %v732 = vstv %s269
        %v733 = vmul.f32 %v700, %v732
        %v734 = vadd.f32 %v731, %v733
        %v735 = vstv %s270
        %v736 = vmul.f32 %v702, %v735
        %v737 = vadd.f32 %v734, %v736
        %v738 = vstv %s271
        %v739 = vmul.f32 %v704, %v738
        %v740 = vadd.f32 %v737, %v739
        %v741 = vstv %s272
        %v742 = vmul.f32 %v706, %v741
        %v743 = vadd.f32 %v740, %v742
        %v744 = vstv %s358
        %v745 = vadd.f32 %v743, %v744
        %v746 = vmax.f32 %v745, 0.0
        %v747 = vstv %s273
        %v748 = vmul.f32 %v696, %v747
        %v749 = vstv %s274
        %v750 = vmul.f32 %v698, %v749
        %v751 = vadd.f32 %v748, %v750
        %v752 = vstv %s275
        %v753 = vmul.f32 %v700, %v752
        %v754 = vadd.f32 %v751, %v753
        %v755 = vstv %s276
        %v756 = vmul.f32 %v702, %v755
        %v757 = vadd.f32 %v754, %v756
        %v758 = vstv %s277
        %v759 = vmul.f32 %v704, %v758
        %v760 = vadd.f32 %v757, %v759
        %v761 = vstv %s278
        %v762 = vmul.f32 %v706, %v761
        %v763 = vadd.f32 %v760, %v762
        %v764 = vstv %s359
        %v765 = vadd.f32 %v763, %v764
        %v766 = vmax.f32 %v765, 0.0
        %v767 = vstv %s279
        %v768 = vmul.f32 %v696, %v767
        %v769 = vstv %s280
        %v770 = vmul.f32 %v698, %v769
        %v771 = vadd.f32 %v768, %v770
        %v772 = vstv %s281
        %v773 = vmul.f32 %v700, %v772
        %v774 = vadd.f32 %v771, %v773
        %v775 = vstv %s282
        %v776 = vmul.f32 %v702, %v775
        %v777 = vadd.f32 %v774, %v776
        %v778 = vstv %s283
        %v779 = vmul.f32 %v704, %v778
        %v780 = vadd.f32 %v777, %v779
        %v781 = vstv %s284
        %v782 = vmul.f32 %v706, %v781
        %v783 = vadd.f32 %v780, %v782
        %v784 = vstv %s360
        %v785 = vadd.f32 %v783, %v784
        %v786 = vmax.f32 %v785, 0.0
        %v787 = vstv %s285
        %v788 = vmul.f32 %v696, %v787
        %v789 = vstv %s286
        %v790 = vmul.f32 %v698, %v789
        %v791 = vadd.f32 %v788, %v790
        %v792 = vstv %s287
        %v793 = vmul.f32 %v700, %v792
        %v794 = vadd.f32 %v791, %v793
        %v795 = vstv %s288
        %v796 = vmul.f32 %v702, %v795
        %v797 = vadd.f32 %v794, %v796
        %v798 = vstv %s289
        %v799 = vmul.f32 %v704, %v798
        %v800 = vadd.f32 %v797, %v799
        %v801 = vstv %s290
        %v802 = vmul.f32 %v706, %v801
        %v803 = vadd.f32 %v800, %v802
        %v804 = vstv %s361
        %v805 = vadd.f32 %v803, %v804
        %v806 = vmax.f32 %v805, 0.0
        %v807 = vstv %s291
        %v808 = vmul.f32 %v696, %v807
        %v809 = vstv %s292
        %v810 = vmul.f32 %v698, %v809
        %v811 = vadd.f32 %v808, %v810
        %v812 = vstv %s293
        %v813 = vmul.f32 %v700, %v812
        %v814 = vadd.f32 %v811, %v813
        %v815 = vstv %s294
        %v816 = vmul.f32 %v702, %v815
        %v817 = vadd.f32 %v814, %v816
        %v818 = vstv %s295
        %v819 = vmul.f32 %v704, %v818
        %v820 = vadd.f32 %v817, %v819
        %v821 = vstv %s296
        %v822 = vmul.f32 %v706, %v821
        %v823 = vadd.f32 %v820, %v822
        %v824 = vstv %s362
        %v825 = vadd.f32 %v823, %v824
        %v826 = vmax.f32 %v825, 0.0
        %v827 = vstv %s297
        %v828 = vmul.f32 %v696, %v827
        %v829 = vstv %s298
        %v830 = vmul.f32 %v698, %v829
        %v831 = vadd.f32 %v828, %v830
        %v832 = vstv %s299
        %v833 = vmul.f32 %v700, %v832
        %v834 = vadd.f32 %v831, %v833
        %v835 = vstv %s300
        %v836 = vmul.f32 %v702, %v835
        %v837 = vadd.f32 %v834, %v836
        %v838 = vstv %s301
        %v839 = vmul.f32 %v704, %v838
        %v840 = vadd.f32 %v837, %v839
        %v841 = vstv %s302
        %v842 = vmul.f32 %v706, %v841
        %v843 = vadd.f32 %v840, %v842
        %v844 = vstv %s363
        %v845 = vadd.f32 %v843, %v844
        %v846 = vmax.f32 %v845, 0.0
        %v847 = vstv %s303
        %v848 = vmul.f32 %v696, %v847
        %v849 = vstv %s304
        %v850 = vmul.f32 %v698, %v849
        %v851 = vadd.f32 %v848, %v850
        %v852 = vstv %s305
        %v853 = vmul.f32 %v700, %v852
        %v854 = vadd.f32 %v851, %v853
        %v855 = vstv %s306
        %v856 = vmul.f32 %v702, %v855
        %v857 = vadd.f32 %v854, %v856
        %v858 = vstv %s307
        %v859 = vmul.f32 %v704, %v858
        %v860 = vadd.f32 %v857, %v859
        %v861 = vstv %s308
        %v862 = vmul.f32 %v706, %v861
        %v863 = vadd.f32 %v860, %v862
        %v864 = vstv %s364
        %v865 = vadd.f32 %v863, %v864
        %v866 = vmax.f32 %v865, 0.0
        %v867 = vstv %s309
        %v868 = vmul.f32 %v696, %v867
        %v869 = vstv %s310
        %v870 = vmul.f32 %v698, %v869
        %v871 = vadd.f32 %v868, %v870
        %v872 = vstv %s311
        %v873 = vmul.f32 %v700, %v872
        %v874 = vadd.f32 %v871, %v873
        %v875 = vstv %s312
        %v876 = vmul.f32 %v702, %v875
        %v877 = vadd.f32 %v874, %v876
        %v878 = vstv %s313
        %v879 = vmul.f32 %v704, %v878
        %v880 = vadd.f32 %v877, %v879
        %v881 = vstv %s314
        %v882 = vmul.f32 %v706, %v881
        %v883 = vadd.f32 %v880, %v882
        %v884 = vstv %s365
        %v885 = vadd.f32 %v883, %v884
        %v886 = vmax.f32 %v885, 0.0
        %v887 = vstv %s315
        %v888 = vmul.f32 %v696, %v887
        %v889 = vstv %s316
        %v890 = vmul.f32 %v698, %v889
        %v891 = vadd.f32 %v888, %v890
        %v892 = vstv %s317
        %v893 = vmul.f32 %v700, %v892
        %v894 = vadd.f32 %v891, %v893
        %v895 = vstv %s318
        %v896 = vmul.f32 %v702, %v895
        %v897 = vadd.f32 %v894, %v896
        %v898 = vstv %s319
        %v899 = vmul.f32 %v704, %v898
        %v900 = vadd.f32 %v897, %v899
        %v901 = vstv %s320
        %v902 = vmul.f32 %v706, %v901
        %v903 = vadd.f32 %v900, %v902
        %v904 = vstv %s366
        %v905 = vadd.f32 %v903, %v904
        %v906 = vmax.f32 %v905, 0.0
        %v907 = vstv %s321
        %v908 = vmul.f32 %v696, %v907
        %v909 = vstv %s322
        %v910 = vmul.f32 %v698, %v909
        %v911 = vadd.f32 %v908, %v910
        %v912 = vstv %s323
        %v913 = vmul.f32 %v700, %v912
        %v914 = vadd.f32 %v911, %v913
        %v915 = vstv %s324
        %v916 = vmul.f32 %v702, %v915
        %v917 = vadd.f32 %v914, %v916
        %v918 = vstv %s325
        %v919 = vmul.f32 %v704, %v918
        %v920 = vadd.f32 %v917, %v919
        %v921 = vstv %s326
        %v922 = vmul.f32 %v706, %v921
        %v923 = vadd.f32 %v920, %v922
        %v924 = vstv %s367
        %v925 = vadd.f32 %v923, %v924
        %v926 = vmax.f32 %v925, 0.0
        %v927 = vstv %s327
        %v928 = vmul.f32 %v696, %v927
        %v929 = vstv %s328
        %v930 = vmul.f32 %v698, %v929
        %v931 = vadd.f32 %v928, %v930
        %v932 = vstv %s329
        %v933 = vmul.f32 %v700, %v932
        %v934 = vadd.f32 %v931, %v933
        %v935 = vstv %s330
        %v936 = vmul.f32 %v702, %v935
        %v937 = vadd.f32 %v934, %v936
        %v938 = vstv %s331
        %v939 = vmul.f32 %v704, %v938
        %v940 = vadd.f32 %v937, %v939
        %v941 = vstv %s332
        %v942 = vmul.f32 %v706, %v941
        %v943 = vadd.f32 %v940, %v942
        %v944 = vstv %s368
        %v945 = vadd.f32 %v943, %v944
        %v946 = vmax.f32 %v945, 0.0
        %v947 = vstv %s333
        %v948 = vmul.f32 %v696, %v947
        %v949 = vstv %s334
        %v950 = vmul.f32 %v698, %v949
        %v951 = vadd.f32 %v948, %v950
        %v952 = vstv %s335
        %v953 = vmul.f32 %v700, %v952
        %v954 = vadd.f32 %v951, %v953
        %v955 = vstv %s336
        %v956 = vmul.f32 %v702, %v955
        %v957 = vadd.f32 %v954, %v956
        %v958 = vstv %s337
        %v959 = vmul.f32 %v704, %v958
        %v960 = vadd.f32 %v957, %v959
        %v961 = vstv %s338
        %v962 = vmul.f32 %v706, %v961
        %v963 = vadd.f32 %v960, %v962
        %v964 = vstv %s369
        %v965 = vadd.f32 %v963, %v964
        %v966 = vmax.f32 %v965, 0.0
        %v967 = vstv %s339
        %v968 = vmul.f32 %v696, %v967
        %v969 = vstv %s340
        %v970 = vmul.f32 %v698, %v969
        %v971 = vadd.f32 %v968, %v970
        %v972 = vstv %s341
        %v973 = vmul.f32 %v700, %v972
        %v974 = vadd.f32 %v971, %v973
        %v975 = vstv %s342
        %v976 = vmul.f32 %v702, %v975
        %v977 = vadd.f32 %v974, %v976
        %v978 = vstv %s343
        %v979 = vmul.f32 %v704, %v978
        %v980 = vadd.f32 %v977, %v979
        %v981 = vstv %s344
        %v982 = vmul.f32 %v706, %v981
        %v983 = vadd.f32 %v980, %v982
        %v984 = vstv %s370
        %v985 = vadd.f32 %v983, %v984
        %v986 = vmax.f32 %v985, 0.0
        %v987 = vstv %s345
        %v988 = vmul.f32 %v696, %v987
        %v989 = vstv %s346
        %v990 = vmul.f32 %v698, %v989
        %v991 = vadd.f32 %v988, %v990
        %v992 = vstv %s347
        %v993 = vmul.f32 %v700, %v992
        %v994 = vadd.f32 %v991, %v993
        %v995 = vstv %s348
        %v996 = vmul.f32 %v702, %v995
        %v997 = vadd.f32 %v994, %v996
        %v998 = vstv %s349
        %v999 = vmul.f32 %v704, %v998
        %v1000 = vadd.f32 %v997, %v999
        %v1001 = vstv %s350
        %v1002 = vmul.f32 %v706, %v1001
        %v1003 = vadd.f32 %v1000, %v1002
        %v1004 = vstv %s371
        %v1005 = vadd.f32 %v1003, %v1004
        %v1006 = vmax.f32 %v1005, 0.0
        %v1007 = vstv %s351
        %v1008 = vmul.f32 %v696, %v1007
        %v1009 = vstv %s352
        %v1010 = vmul.f32 %v698, %v1009
        %v1011 = vadd.f32 %v1008, %v1010
        %v1012 = vstv %s353
        %v1013 = vmul.f32 %v700, %v1012
        %v1014 = vadd.f32 %v1011, %v1013
        %v1015 = vstv %s354
        %v1016 = vmul.f32 %v702, %v1015
        %v1017 = vadd.f32 %v1014, %v1016
        %v1018 = vstv %s355
        %v1019 = vmul.f32 %v704, %v1018
        %v1020 = vadd.f32 %v1017, %v1019
        %v1021 = vstv %s356
        %v1022 = vmul.f32 %v706, %v1021
        %v1023 = vadd.f32 %v1020, %v1022
        %v1024 = vstv %s372
        %v1025 = vadd.f32 %v1023, %v1024
        %v1026 = vmax.f32 %v1025, 0.0
        %v1027 = vstv %s373
        %v1028 = vmul.f32 %v726, %v1027
        %v1029 = vstv %s374
        %v1030 = vmul.f32 %v746, %v1029
        %v1031 = vadd.f32 %v1028, %v1030
        %v1032 = vstv %s375
        %v1033 = vmul.f32 %v766, %v1032
        %v1034 = vadd.f32 %v1031, %v1033
        %v1035 = vstv %s376
        %v1036 = vmul.f32 %v786, %v1035
        %v1037 = vadd.f32 %v1034, %v1036
        %v1038 = vstv %s377
        %v1039 = vmul.f32 %v806, %v1038
        %v1040 = vadd.f32 %v1037, %v1039
        %v1041 = vstv %s378
        %v1042 = vmul.f32 %v826, %v1041
        %v1043 = vadd.f32 %v1040, %v1042
        %v1044 = vstv %s379
        %v1045 = vmul.f32 %v846, %v1044
        %v1046 = vadd.f32 %v1043, %v1045
        %v1047 = vstv %s380
        %v1048 = vmul.f32 %v866, %v1047
        %v1049 = vadd.f32 %v1046, %v1048
        %v1050 = vstv %s381
        %v1051 = vmul.f32 %v886, %v1050
        %v1052 = vadd.f32 %v1049, %v1051
        %v1053 = vstv %s382
        %v1054 = vmul.f32 %v906, %v1053
        %v1055 = vadd.f32 %v1052, %v1054
        %v1056 = vstv %s383
        %v1057 = vmul.f32 %v926, %v1056
        %v1058 = vadd.f32 %v1055, %v1057
        %v1059 = vstv %s384
        %v1060 = vmul.f32 %v946, %v1059
        %v1061 = vadd.f32 %v1058, %v1060
        %v1062 = vstv %s385
        %v1063 = vmul.f32 %v966, %v1062
        %v1064 = vadd.f32 %v1061, %v1063
        %v1065 = vstv %s386
        %v1066 = vmul.f32 %v986, %v1065
        %v1067 = vadd.f32 %v1064, %v1066
        %v1068 = vstv %s387
        %v1069 = vmul.f32 %v1006, %v1068
        %v1070 = vadd.f32 %v1067, %v1069
        %v1071 = vstv %s388
        %v1072 = vmul.f32 %v1026, %v1071
        %v1073 = vadd.f32 %v1070, %v1072
        %v1074 = vstv %s629
        %v1075 = vadd.f32 %v1073, %v1074
        %v1076 = vmax.f32 %v1075, 0.0
        %v1077 = vstv %s389
        %v1078 = vmul.f32 %v726, %v1077
        %v1079 = vstv %s390
        %v1080 = vmul.f32 %v746, %v1079
        %v1081 = vadd.f32 %v1078, %v1080
        %v1082 = vstv %s391
        %v1083 = vmul.f32 %v766, %v1082
        %v1084 = vadd.f32 %v1081, %v1083
        %v1085 = vstv %s392
        %v1086 = vmul.f32 %v786, %v1085
        %v1087 = vadd.f32 %v1084, %v1086
        %v1088 = vstv %s393
        %v1089 = vmul.f32 %v806, %v1088
        %v1090 = vadd.f32 %v1087, %v1089
        %v1091 = vstv %s394
        %v1092 = vmul.f32 %v826, %v1091
        %v1093 = vadd.f32 %v1090, %v1092
        %v1094 = vstv %s395
        %v1095 = vmul.f32 %v846, %v1094
        %v1096 = vadd.f32 %v1093, %v1095
        %v1097 = vstv %s396
        %v1098 = vmul.f32 %v866, %v1097
        %v1099 = vadd.f32 %v1096, %v1098
        %v1100 = vstv %s397
        %v1101 = vmul.f32 %v886, %v1100
        %v1102 = vadd.f32 %v1099, %v1101
        %v1103 = vstv %s398
        %v1104 = vmul.f32 %v906, %v1103
        %v1105 = vadd.f32 %v1102, %v1104
        %v1106 = vstv %s399
        %v1107 = vmul.f32 %v926, %v1106
        %v1108 = vadd.f32 %v1105, %v1107
        %v1109 = vstv %s400
        %v1110 = vmul.f32 %v946, %v1109
        %v1111 = vadd.f32 %v1108, %v1110
        %v1112 = vstv %s401
        %v1113 = vmul.f32 %v966, %v1112
        %v1114 = vadd.f32 %v1111, %v1113
        %v1115 = vstv %s402
        %v1116 = vmul.f32 %v986, %v1115
        %v1117 = vadd.f32 %v1114, %v1116
        %v1118 = vstv %s403
        %v1119 = vmul.f32 %v1006, %v1118
        %v1120 = vadd.f32 %v1117, %v1119
        %v1121 = vstv %s404
        %v1122 = vmul.f32 %v1026, %v1121
        %v1123 = vadd.f32 %v1120, %v1122
        %v1124 = vstv %s630
        %v1125 = vadd.f32 %v1123, %v1124
        %v1126 = vmax.f32 %v1125, 0.0
        %v1127 = vstv %s405
        %v1128 = vmul.f32 %v726, %v1127
        %v1129 = vstv %s406
        %v1130 = vmul.f32 %v746, %v1129
        %v1131 = vadd.f32 %v1128, %v1130
        %v1132 = vstv %s407
        %v1133 = vmul.f32 %v766, %v1132
        %v1134 = vadd.f32 %v1131, %v1133
        %v1135 = vstv %s408
        %v1136 = vmul.f32 %v786, %v1135
        %v1137 = vadd.f32 %v1134, %v1136
        %v1138 = vstv %s409
        %v1139 = vmul.f32 %v806, %v1138
        %v1140 = vadd.f32 %v1137, %v1139
        %v1141 = vstv %s410
        %v1142 = vmul.f32 %v826, %v1141
        %v1143 = vadd.f32 %v1140, %v1142
        %v1144 = vstv %s411
        %v1145 = vmul.f32 %v846, %v1144
        %v1146 = vadd.f32 %v1143, %v1145
        %v1147 = vstv %s412
        %v1148 = vmul.f32 %v866, %v1147
        %v1149 = vadd.f32 %v1146, %v1148
        %v1150 = vstv %s413
        %v1151 = vmul.f32 %v886, %v1150
        %v1152 = vadd.f32 %v1149, %v1151
        %v1153 = vstv %s414
        %v1154 = vmul.f32 %v906, %v1153
        %v1155 = vadd.f32 %v1152, %v1154
        %v1156 = vstv %s415
        %v1157 = vmul.f32 %v926, %v1156
        %v1158 = vadd.f32 %v1155, %v1157
        %v1159 = vstv %s416
        %v1160 = vmul.f32 %v946, %v1159
        %v1161 = vadd.f32 %v1158, %v1160
        %v1162 = vstv %s417
        %v1163 = vmul.f32 %v966, %v1162
        %v1164 = vadd.f32 %v1161, %v1163
        %v1165 = vstv %s418
        %v1166 = vmul.f32 %v986, %v1165
        %v1167 = vadd.f32 %v1164, %v1166
        %v1168 = vstv %s419
        %v1169 = vmul.f32 %v1006, %v1168
        %v1170 = vadd.f32 %v1167, %v1169
        %v1171 = vstv %s420
        %v1172 = vmul.f32 %v1026, %v1171
        %v1173 = vadd.f32 %v1170, %v1172
        %v1174 = vstv %s631
        %v1175 = vadd.f32 %v1173, %v1174
        %v1176 = vmax.f32 %v1175, 0.0
        %v1177 = vstv %s421
        %v1178 = vmul.f32 %v726, %v1177
        %v1179 = vstv %s422
        %v1180 = vmul.f32 %v746, %v1179
        %v1181 = vadd.f32 %v1178, %v1180
        %v1182 = vstv %s423
        %v1183 = vmul.f32 %v766, %v1182
        %v1184 = vadd.f32 %v1181, %v1183
        %v1185 = vstv %s424
        %v1186 = vmul.f32 %v786, %v1185
        %v1187 = vadd.f32 %v1184, %v1186
        %v1188 = vstv %s425
        %v1189 = vmul.f32 %v806, %v1188
        %v1190 = vadd.f32 %v1187, %v1189
        %v1191 = vstv %s426
        %v1192 = vmul.f32 %v826, %v1191
        %v1193 = vadd.f32 %v1190, %v1192
        %v1194 = vstv %s427
        %v1195 = vmul.f32 %v846, %v1194
        %v1196 = vadd.f32 %v1193, %v1195
        %v1197 = vstv %s428
        %v1198 = vmul.f32 %v866, %v1197
        %v1199 = vadd.f32 %v1196, %v1198
        %v1200 = vstv %s429
        %v1201 = vmul.f32 %v886, %v1200
        %v1202 = vadd.f32 %v1199, %v1201
        %v1203 = vstv %s430
        %v1204 = vmul.f32 %v906, %v1203
        %v1205 = vadd.f32 %v1202, %v1204
        %v1206 = vstv %s431
        %v1207 = vmul.f32 %v926, %v1206
        %v1208 = vadd.f32 %v1205, %v1207
        %v1209 = vstv %s432
        %v1210 = vmul.f32 %v946, %v1209
        %v1211 = vadd.f32 %v1208, %v1210
        %v1212 = vstv %s433
        %v1213 = vmul.f32 %v966, %v1212
        %v1214 = vadd.f32 %v1211, %v1213
        %v1215 = vstv %s434
        %v1216 = vmul.f32 %v986, %v1215
        %v1217 = vadd.f32 %v1214, %v1216
        %v1218 = vstv %s435
        %v1219 = vmul.f32 %v1006, %v1218
        %v1220 = vadd.f32 %v1217, %v1219
        %v1221 = vstv %s436
        %v1222 = vmul.f32 %v1026, %v1221
        %v1223 = vadd.f32 %v1220, %v1222
        %v1224 = vstv %s632
        %v1225 = vadd.f32 %v1223, %v1224
        %v1226 = vmax.f32 %v1225, 0.0
        %v1227 = vstv %s437
        %v1228 = vmul.f32 %v726, %v1227
        %v1229 = vstv %s438
        %v1230 = vmul.f32 %v746, %v1229
        %v1231 = vadd.f32 %v1228, %v1230
        %v1232 = vstv %s439
        %v1233 = vmul.f32 %v766, %v1232
        %v1234 = vadd.f32 %v1231, %v1233
        %v1235 = vstv %s440
        %v1236 = vmul.f32 %v786, %v1235
        %v1237 = vadd.f32 %v1234, %v1236
        %v1238 = vstv %s441
        %v1239 = vmul.f32 %v806, %v1238
        %v1240 = vadd.f32 %v1237, %v1239
        %v1241 = vstv %s442
        %v1242 = vmul.f32 %v826, %v1241
        %v1243 = vadd.f32 %v1240, %v1242
        %v1244 = vstv %s443
        %v1245 = vmul.f32 %v846, %v1244
        %v1246 = vadd.f32 %v1243, %v1245
        %v1247 = vstv %s444
        %v1248 = vmul.f32 %v866, %v1247
        %v1249 = vadd.f32 %v1246, %v1248
        %v1250 = vstv %s445
        %v1251 = vmul.f32 %v886, %v1250
        %v1252 = vadd.f32 %v1249, %v1251
        %v1253 = vstv %s446
        %v1254 = vmul.f32 %v906, %v1253
        %v1255 = vadd.f32 %v1252, %v1254
        %v1256 = vstv %s447
        %v1257 = vmul.f32 %v926, %v1256
        %v1258 = vadd.f32 %v1255, %v1257
        %v1259 = vstv %s448
        %v1260 = vmul.f32 %v946, %v1259
        %v1261 = vadd.f32 %v1258, %v1260
        %v1262 = vstv %s449
        %v1263 = vmul.f32 %v966, %v1262
        %v1264 = vadd.f32 %v1261, %v1263
        %v1265 = vstv %s450
        %v1266 = vmul.f32 %v986, %v1265
        %v1267 = vadd.f32 %v1264, %v1266
        %v1268 = vstv %s451
        %v1269 = vmul.f32 %v1006, %v1268
        %v1270 = vadd.f32 %v1267, %v1269
        %v1271 = vstv %s452
        %v1272 = vmul.f32 %v1026, %v1271
        %v1273 = vadd.f32 %v1270, %v1272
        %v1274 = vstv %s633
        %v1275 = vadd.f32 %v1273, %v1274
        %v1276 = vmax.f32 %v1275, 0.0
        %v1277 = vstv %s453
        %v1278 = vmul.f32 %v726, %v1277
        %v1279 = vstv %s454
        %v1280 = vmul.f32 %v746, %v1279
        %v1281 = vadd.f32 %v1278, %v1280
        %v1282 = vstv %s455
        %v1283 = vmul.f32 %v766, %v1282
        %v1284 = vadd.f32 %v1281, %v1283
        %v1285 = vstv %s456
        %v1286 = vmul.f32 %v786, %v1285
        %v1287 = vadd.f32 %v1284, %v1286
        %v1288 = vstv %s457
        %v1289 = vmul.f32 %v806, %v1288
        %v1290 = vadd.f32 %v1287, %v1289
        %v1291 = vstv %s458
        %v1292 = vmul.f32 %v826, %v1291
        %v1293 = vadd.f32 %v1290, %v1292
        %v1294 = vstv %s459
        %v1295 = vmul.f32 %v846, %v1294
        %v1296 = vadd.f32 %v1293, %v1295
        %v1297 = vstv %s460
        %v1298 = vmul.f32 %v866, %v1297
        %v1299 = vadd.f32 %v1296, %v1298
        %v1300 = vstv %s461
        %v1301 = vmul.f32 %v886, %v1300
        %v1302 = vadd.f32 %v1299, %v1301
        %v1303 = vstv %s462
        %v1304 = vmul.f32 %v906, %v1303
        %v1305 = vadd.f32 %v1302, %v1304
        %v1306 = vstv %s463
        %v1307 = vmul.f32 %v926, %v1306
        %v1308 = vadd.f32 %v1305, %v1307
        %v1309 = vstv %s464
        %v1310 = vmul.f32 %v946, %v1309
        %v1311 = vadd.f32 %v1308, %v1310
        %v1312 = vstv %s465
        %v1313 = vmul.f32 %v966, %v1312
        %v1314 = vadd.f32 %v1311, %v1313
        %v1315 = vstv %s466
        %v1316 = vmul.f32 %v986, %v1315
        %v1317 = vadd.f32 %v1314, %v1316
        %v1318 = vstv %s467
        %v1319 = vmul.f32 %v1006, %v1318
        %v1320 = vadd.f32 %v1317, %v1319
        %v1321 = vstv %s468
        %v1322 = vmul.f32 %v1026, %v1321
        %v1323 = vadd.f32 %v1320, %v1322
        %v1324 = vstv %s634
        %v1325 = vadd.f32 %v1323, %v1324
        %v1326 = vmax.f32 %v1325, 0.0
        %v1327 = vstv %s469
        %v1328 = vmul.f32 %v726, %v1327
        %v1329 = vstv %s470
        %v1330 = vmul.f32 %v746, %v1329
        %v1331 = vadd.f32 %v1328, %v1330
        %v1332 = vstv %s471
        %v1333 = vmul.f32 %v766, %v1332
        %v1334 = vadd.f32 %v1331, %v1333
        %v1335 = vstv %s472
        %v1336 = vmul.f32 %v786, %v1335
        %v1337 = vadd.f32 %v1334, %v1336
        %v1338 = vstv %s473
        %v1339 = vmul.f32 %v806, %v1338
        %v1340 = vadd.f32 %v1337, %v1339
        %v1341 = vstv %s474
        %v1342 = vmul.f32 %v826, %v1341
        %v1343 = vadd.f32 %v1340, %v1342
        %v1344 = vstv %s475
        %v1345 = vmul.f32 %v846, %v1344
        %v1346 = vadd.f32 %v1343, %v1345
        %v1347 = vstv %s476
        %v1348 = vmul.f32 %v866, %v1347
        %v1349 = vadd.f32 %v1346, %v1348
        %v1350 = vstv %s477
        %v1351 = vmul.f32 %v886, %v1350
        %v1352 = vadd.f32 %v1349, %v1351
        %v1353 = vstv %s478
        %v1354 = vmul.f32 %v906, %v1353
        %v1355 = vadd.f32 %v1352, %v1354
        %v1356 = vstv %s479
        %v1357 = vmul.f32 %v926, %v1356
        %v1358 = vadd.f32 %v1355, %v1357
        %v1359 = vstv %s480
        %v1360 = vmul.f32 %v946, %v1359
        %v1361 = vadd.f32 %v1358, %v1360
        %v1362 = vstv %s481
        %v1363 = vmul.f32 %v966, %v1362
        %v1364 = vadd.f32 %v1361, %v1363
        %v1365 = vstv %s482
        %v1366 = vmul.f32 %v986, %v1365
        %v1367 = vadd.f32 %v1364, %v1366
        %v1368 = vstv %s483
        %v1369 = vmul.f32 %v1006, %v1368
        %v1370 = vadd.f32 %v1367, %v1369
        %v1371 = vstv %s484
        %v1372 = vmul.f32 %v1026, %v1371
        %v1373 = vadd.f32 %v1370, %v1372
        %v1374 = vstv %s635
        %v1375 = vadd.f32 %v1373, %v1374
        %v1376 = vmax.f32 %v1375, 0.0
        %v1377 = vstv %s485
        %v1378 = vmul.f32 %v726, %v1377
        %v1379 = vstv %s486
        %v1380 = vmul.f32 %v746, %v1379
        %v1381 = vadd.f32 %v1378, %v1380
        %v1382 = vstv %s487
        %v1383 = vmul.f32 %v766, %v1382
        %v1384 = vadd.f32 %v1381, %v1383
        %v1385 = vstv %s488
        %v1386 = vmul.f32 %v786, %v1385
        %v1387 = vadd.f32 %v1384, %v1386
        %v1388 = vstv %s489
        %v1389 = vmul.f32 %v806, %v1388
        %v1390 = vadd.f32 %v1387, %v1389
        %v1391 = vstv %s490
        %v1392 = vmul.f32 %v826, %v1391
        %v1393 = vadd.f32 %v1390, %v1392
        %v1394 = vstv %s491
        %v1395 = vmul.f32 %v846, %v1394
        %v1396 = vadd.f32 %v1393, %v1395
        %v1397 = vstv %s492
        %v1398 = vmul.f32 %v866, %v1397
        %v1399 = vadd.f32 %v1396, %v1398
        %v1400 = vstv %s493
        %v1401 = vmul.f32 %v886, %v1400
        %v1402 = vadd.f32 %v1399, %v1401
        %v1403 = vstv %s494
        %v1404 = vmul.f32 %v906, %v1403
        %v1405 = vadd.f32 %v1402, %v1404
        %v1406 = vstv %s495
        %v1407 = vmul.f32 %v926, %v1406
        %v1408 = vadd.f32 %v1405, %v1407
        %v1409 = vstv %s496
        %v1410 = vmul.f32 %v946, %v1409
        %v1411 = vadd.f32 %v1408, %v1410
        %v1412 = vstv %s497
        %v1413 = vmul.f32 %v966, %v1412
        %v1414 = vadd.f32 %v1411, %v1413
        %v1415 = vstv %s498
        %v1416 = vmul.f32 %v986, %v1415
        %v1417 = vadd.f32 %v1414, %v1416
        %v1418 = vstv %s499
        %v1419 = vmul.f32 %v1006, %v1418
        %v1420 = vadd.f32 %v1417, %v1419
        %v1421 = vstv %s500
        %v1422 = vmul.f32 %v1026, %v1421
        %v1423 = vadd.f32 %v1420, %v1422
        %v1424 = vstv %s636
        %v1425 = vadd.f32 %v1423, %v1424
        %v1426 = vmax.f32 %v1425, 0.0
        %v1427 = vstv %s501
        %v1428 = vmul.f32 %v726, %v1427
        %v1429 = vstv %s502
        %v1430 = vmul.f32 %v746, %v1429
        %v1431 = vadd.f32 %v1428, %v1430
        %v1432 = vstv %s503
        %v1433 = vmul.f32 %v766, %v1432
        %v1434 = vadd.f32 %v1431, %v1433
        %v1435 = vstv %s504
        %v1436 = vmul.f32 %v786, %v1435
        %v1437 = vadd.f32 %v1434, %v1436
        %v1438 = vstv %s505
        %v1439 = vmul.f32 %v806, %v1438
        %v1440 = vadd.f32 %v1437, %v1439
        %v1441 = vstv %s506
        %v1442 = vmul.f32 %v826, %v1441
        %v1443 = vadd.f32 %v1440, %v1442
        %v1444 = vstv %s507
        %v1445 = vmul.f32 %v846, %v1444
        %v1446 = vadd.f32 %v1443, %v1445
        %v1447 = vstv %s508
        %v1448 = vmul.f32 %v866, %v1447
        %v1449 = vadd.f32 %v1446, %v1448
        %v1450 = vstv %s509
        %v1451 = vmul.f32 %v886, %v1450
        %v1452 = vadd.f32 %v1449, %v1451
        %v1453 = vstv %s510
        %v1454 = vmul.f32 %v906, %v1453
        %v1455 = vadd.f32 %v1452, %v1454
        %v1456 = vstv %s511
        %v1457 = vmul.f32 %v926, %v1456
        %v1458 = vadd.f32 %v1455, %v1457
        %v1459 = vstv %s512
        %v1460 = vmul.f32 %v946, %v1459
        %v1461 = vadd.f32 %v1458, %v1460
        %v1462 = vstv %s513
        %v1463 = vmul.f32 %v966, %v1462
        %v1464 = vadd.f32 %v1461, %v1463
        %v1465 = vstv %s514
        %v1466 = vmul.f32 %v986, %v1465
        %v1467 = vadd.f32 %v1464, %v1466
        %v1468 = vstv %s515
        %v1469 = vmul.f32 %v1006, %v1468
        %v1470 = vadd.f32 %v1467, %v1469
        %v1471 = vstv %s516
        %v1472 = vmul.f32 %v1026, %v1471
        %v1473 = vadd.f32 %v1470, %v1472
        %v1474 = vstv %s637
        %v1475 = vadd.f32 %v1473, %v1474
        %v1476 = vmax.f32 %v1475, 0.0
        %v1477 = vstv %s517
        %v1478 = vmul.f32 %v726, %v1477
        %v1479 = vstv %s518
        %v1480 = vmul.f32 %v746, %v1479
        %v1481 = vadd.f32 %v1478, %v1480
        %v1482 = vstv %s519
        %v1483 = vmul.f32 %v766, %v1482
        %v1484 = vadd.f32 %v1481, %v1483
        %v1485 = vstv %s520
        %v1486 = vmul.f32 %v786, %v1485
        %v1487 = vadd.f32 %v1484, %v1486
        %v1488 = vstv %s521
        %v1489 = vmul.f32 %v806, %v1488
        %v1490 = vadd.f32 %v1487, %v1489
        %v1491 = vstv %s522
        %v1492 = vmul.f32 %v826, %v1491
        %v1493 = vadd.f32 %v1490, %v1492
        %v1494 = vstv %s523
        %v1495 = vmul.f32 %v846, %v1494
        %v1496 = vadd.f32 %v1493, %v1495
        %v1497 = vstv %s524
        %v1498 = vmul.f32 %v866, %v1497
        %v1499 = vadd.f32 %v1496, %v1498
        %v1500 = vstv %s525
        %v1501 = vmul.f32 %v886, %v1500
        %v1502 = vadd.f32 %v1499, %v1501
        %v1503 = vstv %s526
        %v1504 = vmul.f32 %v906, %v1503
        %v1505 = vadd.f32 %v1502, %v1504
        %v1506 = vstv %s527
        %v1507 = vmul.f32 %v926, %v1506
        %v1508 = vadd.f32 %v1505, %v1507
        %v1509 = vstv %s528
        %v1510 = vmul.f32 %v946, %v1509
        %v1511 = vadd.f32 %v1508, %v1510
        %v1512 = vstv %s529
        %v1513 = vmul.f32 %v966, %v1512
        %v1514 = vadd.f32 %v1511, %v1513
        %v1515 = vstv %s530
        %v1516 = vmul.f32 %v986, %v1515
        %v1517 = vadd.f32 %v1514, %v1516
        %v1518 = vstv %s531
        %v1519 = vmul.f32 %v1006, %v1518
        %v1520 = vadd.f32 %v1517, %v1519
        %v1521 = vstv %s532
        %v1522 = vmul.f32 %v1026, %v1521
        %v1523 = vadd.f32 %v1520, %v1522
        %v1524 = vstv %s638
        %v1525 = vadd.f32 %v1523, %v1524
        %v1526 = vmax.f32 %v1525, 0.0
        %v1527 = vstv %s533
        %v1528 = vmul.f32 %v726, %v1527
        %v1529 = vstv %s534
        %v1530 = vmul.f32 %v746, %v1529
        %v1531 = vadd.f32 %v1528, %v1530
        %v1532 = vstv %s535
        %v1533 = vmul.f32 %v766, %v1532
        %v1534 = vadd.f32 %v1531, %v1533
        %v1535 = vstv %s536
        %v1536 = vmul.f32 %v786, %v1535
        %v1537 = vadd.f32 %v1534, %v1536
        %v1538 = vstv %s537
        %v1539 = vmul.f32 %v806, %v1538
        %v1540 = vadd.f32 %v1537, %v1539
        %v1541 = vstv %s538
        %v1542 = vmul.f32 %v826, %v1541
        %v1543 = vadd.f32 %v1540, %v1542
        %v1544 = vstv %s539
        %v1545 = vmul.f32 %v846, %v1544
        %v1546 = vadd.f32 %v1543, %v1545
        %v1547 = vstv %s540
        %v1548 = vmul.f32 %v866, %v1547
        %v1549 = vadd.f32 %v1546, %v1548
        %v1550 = vstv %s541
        %v1551 = vmul.f32 %v886, %v1550
        %v1552 = vadd.f32 %v1549, %v1551
        %v1553 = vstv %s542
        %v1554 = vmul.f32 %v906, %v1553
        %v1555 = vadd.f32 %v1552, %v1554
        %v1556 = vstv %s543
        %v1557 = vmul.f32 %v926, %v1556
        %v1558 = vadd.f32 %v1555, %v1557
        %v1559 = vstv %s544
        %v1560 = vmul.f32 %v946, %v1559
        %v1561 = vadd.f32 %v1558, %v1560
        %v1562 = vstv %s545
        %v1563 = vmul.f32 %v966, %v1562
        %v1564 = vadd.f32 %v1561, %v1563
        %v1565 = vstv %s546
        %v1566 = vmul.f32 %v986, %v1565
        %v1567 = vadd.f32 %v1564, %v1566
        %v1568 = vstv %s547
        %v1569 = vmul.f32 %v1006, %v1568
        %v1570 = vadd.f32 %v1567, %v1569
        %v1571 = vstv %s548
        %v1572 = vmul.f32 %v1026, %v1571
        %v1573 = vadd.f32 %v1570, %v1572
        %v1574 = vstv %s639
        %v1575 = vadd.f32 %v1573, %v1574
        %v1576 = vmax.f32 %v1575, 0.0
        %v1577 = vstv %s549
        %v1578 = vmul.f32 %v726, %v1577
        %v1579 = vstv %s550
        %v1580 = vmul.f32 %v746, %v1579
        %v1581 = vadd.f32 %v1578, %v1580
        %v1582 = vstv %s551
        %v1583 = vmul.f32 %v766, %v1582
        %v1584 = vadd.f32 %v1581, %v1583
        %v1585 = vstv %s552
        %v1586 = vmul.f32 %v786, %v1585
        %v1587 = vadd.f32 %v1584, %v1586
        %v1588 = vstv %s553
        %v1589 = vmul.f32 %v806, %v1588
        %v1590 = vadd.f32 %v1587, %v1589
        %v1591 = vstv %s554
        %v1592 = vmul.f32 %v826, %v1591
        %v1593 = vadd.f32 %v1590, %v1592
        %v1594 = vstv %s555
        %v1595 = vmul.f32 %v846, %v1594
        %v1596 = vadd.f32 %v1593, %v1595
        %v1597 = vstv %s556
        %v1598 = vmul.f32 %v866, %v1597
        %v1599 = vadd.f32 %v1596, %v1598
        %v1600 = vstv %s557
        %v1601 = vmul.f32 %v886, %v1600
        %v1602 = vadd.f32 %v1599, %v1601
        %v1603 = vstv %s558
        %v1604 = vmul.f32 %v906, %v1603
        %v1605 = vadd.f32 %v1602, %v1604
        %v1606 = vstv %s559
        %v1607 = vmul.f32 %v926, %v1606
        %v1608 = vadd.f32 %v1605, %v1607
        %v1609 = vstv %s560
        %v1610 = vmul.f32 %v946, %v1609
        %v1611 = vadd.f32 %v1608, %v1610
        %v1612 = vstv %s561
        %v1613 = vmul.f32 %v966, %v1612
        %v1614 = vadd.f32 %v1611, %v1613
        %v1615 = vstv %s562
        %v1616 = vmul.f32 %v986, %v1615
        %v1617 = vadd.f32 %v1614, %v1616
        %v1618 = vstv %s563
        %v1619 = vmul.f32 %v1006, %v1618
        %v1620 = vadd.f32 %v1617, %v1619
        %v1621 = vstv %s564
        %v1622 = vmul.f32 %v1026, %v1621
        %v1623 = vadd.f32 %v1620, %v1622
        %v1624 = vstv %s640
        %v1625 = vadd.f32 %v1623, %v1624
        %v1626 = vmax.f32 %v1625, 0.0
        %v1627 = vstv %s565
        %v1628 = vmul.f32 %v726, %v1627
        %v1629 = vstv %s566
        %v1630 = vmul.f32 %v746, %v1629
        %v1631 = vadd.f32 %v1628, %v1630
        %v1632 = vstv %s567
        %v1633 = vmul.f32 %v766, %v1632
        %v1634 = vadd.f32 %v1631, %v1633
        %v1635 = vstv %s568
        %v1636 = vmul.f32 %v786, %v1635
        %v1637 = vadd.f32 %v1634, %v1636
        %v1638 = vstv %s569
        %v1639 = vmul.f32 %v806, %v1638
        %v1640 = vadd.f32 %v1637, %v1639
        %v1641 = vstv %s570
        %v1642 = vmul.f32 %v826, %v1641
        %v1643 = vadd.f32 %v1640, %v1642
        %v1644 = vstv %s571
        %v1645 = vmul.f32 %v846, %v1644
        %v1646 = vadd.f32 %v1643, %v1645
        %v1647 = vstv %s572
        %v1648 = vmul.f32 %v866, %v1647
        %v1649 = vadd.f32 %v1646, %v1648
        %v1650 = vstv %s573
        %v1651 = vmul.f32 %v886, %v1650
        %v1652 = vadd.f32 %v1649, %v1651
        %v1653 = vstv %s574
        %v1654 = vmul.f32 %v906, %v1653
        %v1655 = vadd.f32 %v1652, %v1654
        %v1656 = vstv %s575
        %v1657 = vmul.f32 %v926, %v1656
        %v1658 = vadd.f32 %v1655, %v1657
        %v1659 = vstv %s576
        %v1660 = vmul.f32 %v946, %v1659
        %v1661 = vadd.f32 %v1658, %v1660
        %v1662 = vstv %s577
        %v1663 = vmul.f32 %v966, %v1662
        %v1664 = vadd.f32 %v1661, %v1663
        %v1665 = vstv %s578
        %v1666 = vmul.f32 %v986, %v1665
        %v1667 = vadd.f32 %v1664, %v1666
        %v1668 = vstv %s579
        %v1669 = vmul.f32 %v1006, %v1668
        %v1670 = vadd.f32 %v1667, %v1669
        %v1671 = vstv %s580
        %v1672 = vmul.f32 %v1026, %v1671
        %v1673 = vadd.f32 %v1670, %v1672
        %v1674 = vstv %s641
        %v1675 = vadd.f32 %v1673, %v1674
        %v1676 = vmax.f32 %v1675, 0.0
        %v1677 = vstv %s581
        %v1678 = vmul.f32 %v726, %v1677
        %v1679 = vstv %s582
        %v1680 = vmul.f32 %v746, %v1679
        %v1681 = vadd.f32 %v1678, %v1680
        %v1682 = vstv %s583
        %v1683 = vmul.f32 %v766, %v1682
        %v1684 = vadd.f32 %v1681, %v1683
        %v1685 = vstv %s584
        %v1686 = vmul.f32 %v786, %v1685
        %v1687 = vadd.f32 %v1684, %v1686
        %v1688 = vstv %s585
        %v1689 = vmul.f32 %v806, %v1688
        %v1690 = vadd.f32 %v1687, %v1689
        %v1691 = vstv %s586
        %v1692 = vmul.f32 %v826, %v1691
        %v1693 = vadd.f32 %v1690, %v1692
        %v1694 = vstv %s587
        %v1695 = vmul.f32 %v846, %v1694
        %v1696 = vadd.f32 %v1693, %v1695
        %v1697 = vstv %s588
        %v1698 = vmul.f32 %v866, %v1697
        %v1699 = vadd.f32 %v1696, %v1698
        %v1700 = vstv %s589
        %v1701 = vmul.f32 %v886, %v1700
        %v1702 = vadd.f32 %v1699, %v1701
        %v1703 = vstv %s590
        %v1704 = vmul.f32 %v906, %v1703
        %v1705 = vadd.f32 %v1702, %v1704
        %v1706 = vstv %s591
        %v1707 = vmul.f32 %v926, %v1706
        %v1708 = vadd.f32 %v1705, %v1707
        %v1709 = vstv %s592
        %v1710 = vmul.f32 %v946, %v1709
        %v1711 = vadd.f32 %v1708, %v1710
        %v1712 = vstv %s593
        %v1713 = vmul.f32 %v966, %v1712
        %v1714 = vadd.f32 %v1711, %v1713
        %v1715 = vstv %s594
        %v1716 = vmul.f32 %v986, %v1715
        %v1717 = vadd.f32 %v1714, %v1716
        %v1718 = vstv %s595
        %v1719 = vmul.f32 %v1006, %v1718
        %v1720 = vadd.f32 %v1717, %v1719
        %v1721 = vstv %s596
        %v1722 = vmul.f32 %v1026, %v1721
        %v1723 = vadd.f32 %v1720, %v1722
        %v1724 = vstv %s642
        %v1725 = vadd.f32 %v1723, %v1724
        %v1726 = vmax.f32 %v1725, 0.0
        %v1727 = vstv %s597
        %v1728 = vmul.f32 %v726, %v1727
        %v1729 = vstv %s598
        %v1730 = vmul.f32 %v746, %v1729
        %v1731 = vadd.f32 %v1728, %v1730
        %v1732 = vstv %s599
        %v1733 = vmul.f32 %v766, %v1732
        %v1734 = vadd.f32 %v1731, %v1733
        %v1735 = vstv %s600
        %v1736 = vmul.f32 %v786, %v1735
        %v1737 = vadd.f32 %v1734, %v1736
        %v1738 = vstv %s601
        %v1739 = vmul.f32 %v806, %v1738
        %v1740 = vadd.f32 %v1737, %v1739
        %v1741 = vstv %s602
        %v1742 = vmul.f32 %v826, %v1741
        %v1743 = vadd.f32 %v1740, %v1742
        %v1744 = vstv %s603
        %v1745 = vmul.f32 %v846, %v1744
        %v1746 = vadd.f32 %v1743, %v1745
        %v1747 = vstv %s604
        %v1748 = vmul.f32 %v866, %v1747
        %v1749 = vadd.f32 %v1746, %v1748
        %v1750 = vstv %s605
        %v1751 = vmul.f32 %v886, %v1750
        %v1752 = vadd.f32 %v1749, %v1751
        %v1753 = vstv %s606
        %v1754 = vmul.f32 %v906, %v1753
        %v1755 = vadd.f32 %v1752, %v1754
        %v1756 = vstv %s607
        %v1757 = vmul.f32 %v926, %v1756
        %v1758 = vadd.f32 %v1755, %v1757
        %v1759 = vstv %s608
        %v1760 = vmul.f32 %v946, %v1759
        %v1761 = vadd.f32 %v1758, %v1760
        %v1762 = vstv %s609
        %v1763 = vmul.f32 %v966, %v1762
        %v1764 = vadd.f32 %v1761, %v1763
        %v1765 = vstv %s610
        %v1766 = vmul.f32 %v986, %v1765
        %v1767 = vadd.f32 %v1764, %v1766
        %v1768 = vstv %s611
        %v1769 = vmul.f32 %v1006, %v1768
        %v1770 = vadd.f32 %v1767, %v1769
        %v1771 = vstv %s612
        %v1772 = vmul.f32 %v1026, %v1771
        %v1773 = vadd.f32 %v1770, %v1772
        %v1774 = vstv %s643
        %v1775 = vadd.f32 %v1773, %v1774
        %v1776 = vmax.f32 %v1775, 0.0
        %v1777 = vstv %s613
        %v1778 = vmul.f32 %v726, %v1777
        %v1779 = vstv %s614
        %v1780 = vmul.f32 %v746, %v1779
        %v1781 = vadd.f32 %v1778, %v1780
        %v1782 = vstv %s615
        %v1783 = vmul.f32 %v766, %v1782
        %v1784 = vadd.f32 %v1781, %v1783
        %v1785 = vstv %s616
        %v1786 = vmul.f32 %v786, %v1785
        %v1787 = vadd.f32 %v1784, %v1786
        %v1788 = vstv %s617
        %v1789 = vmul.f32 %v806, %v1788
        %v1790 = vadd.f32 %v1787, %v1789
        %v1791 = vstv %s618
        %v1792 = vmul.f32 %v826, %v1791
        %v1793 = vadd.f32 %v1790, %v1792
        %v1794 = vstv %s619
        %v1795 = vmul.f32 %v846, %v1794
        %v1796 = vadd.f32 %v1793, %v1795
        %v1797 = vstv %s620
        %v1798 = vmul.f32 %v866, %v1797
        %v1799 = vadd.f32 %v1796, %v1798
        %v1800 = vstv %s621
        %v1801 = vmul.f32 %v886, %v1800
        %v1802 = vadd.f32 %v1799, %v1801
        %v1803 = vstv %s622
        %v1804 = vmul.f32 %v906, %v1803
        %v1805 = vadd.f32 %v1802, %v1804
        %v1806 = vstv %s623
        %v1807 = vmul.f32 %v926, %v1806
        %v1808 = vadd.f32 %v1805, %v1807
        %v1809 = vstv %s624
        %v1810 = vmul.f32 %v946, %v1809
        %v1811 = vadd.f32 %v1808, %v1810
        %v1812 = vstv %s625
        %v1813 = vmul.f32 %v966, %v1812
        %v1814 = vadd.f32 %v1811, %v1813
        %v1815 = vstv %s626
        %v1816 = vmul.f32 %v986, %v1815
        %v1817 = vadd.f32 %v1814, %v1816
        %v1818 = vstv %s627
        %v1819 = vmul.f32 %v1006, %v1818
        %v1820 = vadd.f32 %v1817, %v1819
        %v1821 = vstv %s628
        %v1822 = vmul.f32 %v1026, %v1821
        %v1823 = vadd.f32 %v1820, %v1822
        %v1824 = vstv %s644
        %v1825 = vadd.f32 %v1823, %v1824
        %v1826 = vmax.f32 %v1825, 0.0
        %v1827 = vstv %s645
        %v1828 = vmul.f32 %v1076, %v1827
        %v1829 = vstv %s646
        %v1830 = vmul.f32 %v1126, %v1829
        %v1831 = vadd.f32 %v1828, %v1830
        %v1832 = vstv %s647
        %v1833 = vmul.f32 %v1176, %v1832
        %v1834 = vadd.f32 %v1831, %v1833
        %v1835 = vstv %s648
        %v1836 = vmul.f32 %v1226, %v1835
        %v1837 = vadd.f32 %v1834, %v1836
        %v1838 = vstv %s649
        %v1839 = vmul.f32 %v1276, %v1838
        %v1840 = vadd.f32 %v1837, %v1839
        %v1841 = vstv %s650
        %v1842 = vmul.f32 %v1326, %v1841
        %v1843 = vadd.f32 %v1840, %v1842
        %v1844 = vstv %s651
        %v1845 = vmul.f32 %v1376, %v1844
        %v1846 = vadd.f32 %v1843, %v1845
        %v1847 = vstv %s652
        %v1848 = vmul.f32 %v1426, %v1847
        %v1849 = vadd.f32 %v1846, %v1848
        %v1850 = vstv %s653
        %v1851 = vmul.f32 %v1476, %v1850
        %v1852 = vadd.f32 %v1849, %v1851
        %v1853 = vstv %s654
        %v1854 = vmul.f32 %v1526, %v1853
        %v1855 = vadd.f32 %v1852, %v1854
        %v1856 = vstv %s655
        %v1857 = vmul.f32 %v1576, %v1856
        %v1858 = vadd.f32 %v1855, %v1857
        %v1859 = vstv %s656
        %v1860 = vmul.f32 %v1626, %v1859
        %v1861 = vadd.f32 %v1858, %v1860
        %v1862 = vstv %s657
        %v1863 = vmul.f32 %v1676, %v1862
        %v1864 = vadd.f32 %v1861, %v1863
        %v1865 = vstv %s658
        %v1866 = vmul.f32 %v1726, %v1865
        %v1867 = vadd.f32 %v1864, %v1866
        %v1868 = vstv %s659
        %v1869 = vmul.f32 %v1776, %v1868
        %v1870 = vadd.f32 %v1867, %v1869
        %v1871 = vstv %s660
        %v1872 = vmul.f32 %v1826, %v1871
        %v1873 = vadd.f32 %v1870, %v1872
        %v1874 = vstv %s693
        %v1875 = vadd.f32 %v1873, %v1874
        %v1876 = vmax.f32 %v1875, 0.0
        %v1877 = vld [vmem:[%s232] sm:$0x3]
        %v1878 = vadd.f32 %v1876, %v1877
        %v1879 = vtanh.pop %v1878
        %1880 = vst [vmem:[%s260] sm:$0x3] %v1879
        %v1881 = vstv %s661
        %v1882 = vmul.f32 %v1076, %v1881
        %v1883 = vstv %s662
        %v1884 = vmul.f32 %v1126, %v1883
        %v1885 = vadd.f32 %v1882, %v1884
        %v1886 = vstv %s663
        %v1887 = vmul.f32 %v1176, %v1886
        %v1888 = vadd.f32 %v1885, %v1887
        %v1889 = vstv %s664
        %v1890 = vmul.f32 %v1226, %v1889
        %v1891 = vadd.f32 %v1888, %v1890
        %v1892 = vstv %s665
        %v1893 = vmul.f32 %v1276, %v1892
        %v1894 = vadd.f32 %v1891, %v1893
        %v1895 = vstv %s666
        %v1896 = vmul.f32 %v1326, %v1895
        %v1897 = vadd.f32 %v1894, %v1896
        %v1898 = vstv %s667
        %v1899 = vmul.f32 %v1376, %v1898
        %v1900 = vadd.f32 %v1897, %v1899
        %v1901 = vstv %s668
        %v1902 = vmul.f32 %v1426, %v1901
        %v1903 = vadd.f32 %v1900, %v1902
        %v1904 = vstv %s669
        %v1905 = vmul.f32 %v1476, %v1904
        %v1906 = vadd.f32 %v1903, %v1905
        %v1907 = vstv %s670
        %v1908 = vmul.f32 %v1526, %v1907
        %v1909 = vadd.f32 %v1906, %v1908
        %v1910 = vstv %s671
        %v1911 = vmul.f32 %v1576, %v1910
        %v1912 = vadd.f32 %v1909, %v1911
        %v1913 = vstv %s672
        %v1914 = vmul.f32 %v1626, %v1913
        %v1915 = vadd.f32 %v1912, %v1914
        %v1916 = vstv %s673
        %v1917 = vmul.f32 %v1676, %v1916
        %v1918 = vadd.f32 %v1915, %v1917
        %v1919 = vstv %s674
        %v1920 = vmul.f32 %v1726, %v1919
        %v1921 = vadd.f32 %v1918, %v1920
        %v1922 = vstv %s675
        %v1923 = vmul.f32 %v1776, %v1922
        %v1924 = vadd.f32 %v1921, %v1923
        %v1925 = vstv %s676
        %v1926 = vmul.f32 %v1826, %v1925
        %v1927 = vadd.f32 %v1924, %v1926
        %v1928 = vstv %s694
        %v1929 = vadd.f32 %v1927, %v1928
        %v1930 = vmax.f32 %v1929, 0.0
        %s1931 = scalar_lea.vmem %s232, 2 [#allocation7]
        %v1932 = vld [vmem:[%s1931] sm:$0x3]
        %v1933 = vadd.f32 %v1930, %v1932
        %v1934 = vtanh.pop %v1933
        %s1935 = scalar_lea.vmem %s260, 2 [#allocation9]
        %1936 = vst [vmem:[%s1935] sm:$0x3] %v1934
        %v1937 = vstv %s677
        %v1938 = vmul.f32 %v1076, %v1937
        %v1939 = vstv %s678
        %v1940 = vmul.f32 %v1126, %v1939
        %v1941 = vadd.f32 %v1938, %v1940
        %v1942 = vstv %s679
        %v1943 = vmul.f32 %v1176, %v1942
        %v1944 = vadd.f32 %v1941, %v1943
        %v1945 = vstv %s680
        %v1946 = vmul.f32 %v1226, %v1945
        %v1947 = vadd.f32 %v1944, %v1946
        %v1948 = vstv %s681
        %v1949 = vmul.f32 %v1276, %v1948
        %v1950 = vadd.f32 %v1947, %v1949
        %v1951 = vstv %s682
        %v1952 = vmul.f32 %v1326, %v1951
        %v1953 = vadd.f32 %v1950, %v1952
        %v1954 = vstv %s683
        %v1955 = vmul.f32 %v1376, %v1954
        %v1956 = vadd.f32 %v1953, %v1955
        %v1957 = vstv %s684
        %v1958 = vmul.f32 %v1426, %v1957
        %v1959 = vadd.f32 %v1956, %v1958
        %v1960 = vstv %s685
        %v1961 = vmul.f32 %v1476, %v1960
        %v1962 = vadd.f32 %v1959, %v1961
        %v1963 = vstv %s686
        %v1964 = vmul.f32 %v1526, %v1963
        %v1965 = vadd.f32 %v1962, %v1964
        %v1966 = vstv %s687
        %v1967 = vmul.f32 %v1576, %v1966
        %v1968 = vadd.f32 %v1965, %v1967
        %v1969 = vstv %s688
        %v1970 = vmul.f32 %v1626, %v1969
        %v1971 = vadd.f32 %v1968, %v1970
        %v1972 = vstv %s689
        %v1973 = vmul.f32 %v1676, %v1972
        %v1974 = vadd.f32 %v1971, %v1973
        %v1975 = vstv %s690
        %v1976 = vmul.f32 %v1726, %v1975
        %v1977 = vadd.f32 %v1974, %v1976
        %v1978 = vstv %s691
        %v1979 = vmul.f32 %v1776, %v1978
        %v1980 = vadd.f32 %v1977, %v1979
        %v1981 = vstv %s692
        %v1982 = vmul.f32 %v1826, %v1981
        %v1983 = vadd.f32 %v1980, %v1982
        %v1984 = vstv %s695
        %v1985 = vadd.f32 %v1983, %v1984
        %v1986 = vmax.f32 %v1985, 0.0
        %s1987 = scalar_lea.vmem %s232, 4 [#allocation7]
        %v1988 = vld [vmem:[%s1987] sm:$0x3]
        %v1989 = vadd.f32 %v1986, %v1988
        %v1990 = vtanh.pop %v1989
        %s1991 = scalar_lea.vmem %s260, 4 [#allocation9]
        %1992 = vst [vmem:[%s1991] sm:$0x3] %v1990
        %s1993 = sand.u32 %s123, 1
        %s1994 = scalar_lea.sflag [#allocation4], %s1993
        %s1995 = sand.u32 %s123, 1
        %s1996 = smul.addr %s1995, 6
        %s1997 = scalar_lea.vmem [#allocation9], %s1996
        // Predicated region
        $region45: #{tpu_custom_call.1} parent=31 // pred_check
          %p1998 = pneg %p133
        $region46: #{tpu_custom_call.1} parent=31 // pred_check_branch
          %2000 = sbr.rel (%p1998) target = $region48
        $region47: #{tpu_custom_call.1} parent=31 // pred_region
          %s2002 = ssub.s32 96, 96
          %2003 = vsyncadd %s1994, %s2002
          %s2004 = smul.addr %s28, 3
          %s2005 = sadd.s32 %s29, %s2004
          %s2006 = smul.addr %s2005, 32
          %s2007 = scalar_lea.hbm %s3, %s2006
          %s2008 = sshll.u32 %s1997, 4
          %s2009 = int_to_ptr.vmem [resolvable:$true] %s2008
          %2014 = dma.vmem_to_hbm [thread:$0]  %s2009, 96, %s2007, %s1994, 32, 32, 2
        $region48: #{tpu_custom_call.1} parent=31 // pred_fallthru
          _
      $region32: #{tpu_custom_call.1} parent=5 // pred_fallthru
        _
      %p2015 = scmp.le.s32.totalorder 2, %s19
      // Predicated region
      $region49: #{tpu_custom_call.1} parent=5 // pred_check
        %p2016 = pneg %p2015
      $region50: #{tpu_custom_call.1} parent=5 // pred_check_branch
        %2018 = sbr.rel (%p2016) target = $region52
      $region51: #{tpu_custom_call.1} parent=5 // pred_region
        %s2019 = ssub.s32 %s19, 2
        // Predicated region
        $region53: #{tpu_custom_call.1} parent=51 // pred_check
          %p2020 = pneg %p139
        $region54: #{tpu_custom_call.1} parent=51 // pred_check_branch
          %2022 = sbr.rel (%p2020) target = $region56
        $region55: #{tpu_custom_call.1} parent=51 // pred_region
          %s2023 = sand.u32 %s124, 1
          %s2024 = scalar_lea.sflag [#allocation4], %s2023
          %s2025 = sand.u32 %s124, 1
          %s2026 = smul.addr %s2025, 6
          %s2027 = scalar_lea.vmem [#allocation9], %s2026
          %2028 = dma.done %s2024, 96
        $region56: #{tpu_custom_call.1} parent=51 // pred_fallthru
          _
      $region52: #{tpu_custom_call.1} parent=5 // pred_fallthru
        _
    $region6: #{tpu_custom_call.1} parent=1 // loop_footer
      %s23 = sadd.s32 1, %s19
    $region7: #{tpu_custom_call.1} parent=1 // loop_footer_branch
      %18 = sbr.rel target = $region3
    $region8: #{tpu_custom_call.1} parent=1 // loop_exit
      _
    %2029 = vsyncpa [#allocation3], 1
    %s2030 = scalar_lea.sflag [#allocation3], 1
    %2031 = vsyncpa %s2030, 1
    %2032 = vsyncpa [#allocation8], 1
    %s2033 = scalar_lea.sflag [#allocation8], 1
    %2034 = vsyncpa %s2033, 1
    %2035 = vsyncpa [#allocation4], 1
    %s2036 = scalar_lea.sflag [#allocation4], 1
    %2037 = vsyncpa %s2036, 1
    %2038 = vsyncpa [#allocation5], 1
    %s2039 = scalar_lea.sflag [#allocation5], 1
    %2040 = vsyncpa %s2039, 1

</llo_original>
